<compile_context>
chip_gen: v6e
topology: v6e:2x2x1
jax: 0.10.0
libtpu: 0.0.40
codegen_flags: <defaults>
</compile_context>

<pallas_src>
import functools

import jax
import jax.numpy as jnp
from jax.experimental import pallas as pl
from jax.experimental.pallas import tpu as pltpu


def _ncf_kernel(num_layers, eu_gmf_ref, ei_gmf_ref, mlp_in_ref, *refs):
    # refs = (w0, b0, w1, b1, ..., w_{L-1}, b_{L-1},
    #         wp_gmf_row, wp_mlp_row, bp_smem, out_ref)
    out_ref = refs[-1]
    bp_ref = refs[-2]
    wp_mlp_ref = refs[-3]
    wp_gmf_ref = refs[-4]
    layer_refs = refs[:2 * num_layers]

    # --- GMF branch: elementwise product (VPU, f32 math even if inputs bf16) ---
    gmf = eu_gmf_ref[...].astype(jnp.float32) * ei_gmf_ref[...].astype(jnp.float32)

    # --- MLP tower: Linear + ReLU, f32 accumulation on the MXU.
    # Layer-0 concat was fused into the gathered input, so this is a uniform
    # loop of L matmuls.  Dropout layers are identity (eval-mode forward).
    x = mlp_in_ref[...]
    for i in range(num_layers):
        w_ref = layer_refs[2 * i]
        b_ref = layer_refs[2 * i + 1]
        x = jnp.dot(x.astype(w_ref.dtype), w_ref[...],
                    preferred_element_type=jnp.float32)
        x = jnp.maximum(x + b_ref[...], 0.0)

    # --- predict head (N=1): concat-free, MXU-free — fused VPU multiply-add +
    # a single cross-lane reduction (both operands are (tile_b, F)).
    score = jnp.sum(gmf * wp_gmf_ref[...] + x * wp_mlp_ref[...], axis=-1)
    score = score + bp_ref[0, 0]

    # Lane-dense store: one (1, 1, tile_b) row per grid step.
    out_ref[...] = score.reshape(1, 1, -1).astype(out_ref.dtype)


def ncf_forward(user, item, params, num_layers, *, tile_b=2048,
                compute_dtype=jnp.bfloat16):
    """NCF (NeuMF) forward. params: embedding tables, MLP and predict weights."""
    factor_num = params["embed_user_GMF"].shape[1]
    mlp_dim = params["embed_user_MLP"].shape[1]
    cd = jnp.dtype(compute_dtype)

    B = user.shape[0]
    # Keep tile_b a multiple of 128 (lane-dense output, bf16 sublane packing)
    # and don't over-pad tiny batches.
    tile_b = max(128, min(int(tile_b), pl.cdiv(B, 128) * 128))
    tile_b = (tile_b // 128) * 128
    num_tiles = pl.cdiv(B, tile_b)
    b_pad = num_tiles * tile_b
    if b_pad != B:
        # Pad the index vectors (cheap) instead of the gathered activations.
        user = jnp.pad(user, (0, b_pad - B))
        item = jnp.pad(item, (0, b_pad - B))

    # --- glue: embedding gathers (data-dependent row lookup, left to XLA).
    # Tables are cast to the compute dtype *before* the gather so the
    # materialized activations are half the HBM bytes on the bf16 path, and
    # the two MLP gathers are fused into one [Bp, 2*mlp_dim] concat output so
    # layer 0 is a single K=2*mlp_dim matmul in the kernel.
    # TODO(synk): an in-kernel gather (scalar-prefetched indices + resident
    # VMEM tables) would remove this HBM round-trip entirely, but a general
    # row gather from VMEM does not lower reliably in Mosaic today.
    eu_gmf = params["embed_user_GMF"].astype(cd)[user]                  # [Bp, F]
    ei_gmf = params["embed_item_GMF"].astype(cd)[item]                  # [Bp, F]
    mlp_in = jnp.concatenate(
        [params["embed_user_MLP"].astype(cd)[user],
         params["embed_item_MLP"].astype(cd)[item]], axis=-1)           # [Bp, 2*mlp_dim]

    # --- weights: MLP layers in compute dtype, biases/predict head in f32 ---
    weight_inputs = []
    for i in range(num_layers):
        weight_inputs.append(params[f"mlp_w{i}"].astype(cd))
        weight_inputs.append(params[f"mlp_b{i}"].astype(jnp.float32)[None, :])
    wp = params["predict_w"].astype(jnp.float32)                        # [2F, 1]
    wp_gmf = wp[:factor_num, 0][None, :]                                # [1, F]
    wp_mlp = wp[factor_num:, 0][None, :]                                # [1, F]
    bp = params["predict_b"].astype(jnp.float32).reshape(1, 1)

    # --- block specs ---
    def batch_spec(d):
        return pl.BlockSpec((tile_b, d), lambda i: (i, 0))

    def resident_spec(arr):
        return pl.BlockSpec(tuple(arr.shape), lambda i: (0,) * arr.ndim)

    in_specs = [batch_spec(factor_num), batch_spec(factor_num),
                batch_spec(2 * mlp_dim)]
    in_specs += [resident_spec(w) for w in weight_inputs]
    in_specs += [resident_spec(wp_gmf), resident_spec(wp_mlp)]
    in_specs += [pl.BlockSpec(memory_space=pltpu.MemorySpace.SMEM)]      # predict bias

    # --- cost estimate + explicit scoped-VMEM budget ---
    itemsize = cd.itemsize
    weight_bytes = sum(int(w.size) * w.dtype.itemsize for w in weight_inputs)
    weight_bytes += (wp_gmf.size + wp_mlp.size) * 4
    flops_row = 0
    in_sz = 2 * mlp_dim
    for _ in range(num_layers):
        out_sz = in_sz // 2
        flops_row += 2 * in_sz * out_sz
        in_sz = out_sz
    flops_row += 6 * factor_num  # gmf mul + predict-head mul/add/reduce
    act_bytes_row = (2 * factor_num + 2 * mlp_dim) * itemsize
    cost = pl.CostEstimate(
        flops=int(flops_row * b_pad),
        transcendentals=0,
        bytes_accessed=int(b_pad * act_bytes_row + weight_bytes + b_pad * 4),
    )
    # Double-buffered activation tiles + resident weights + headroom; floor at
    # 32 MiB (v5e scoped default is only 16 MiB), cap well under v7x's 64 MiB.
    vmem_limit = 2 * (tile_b * act_bytes_row + tile_b * 4) + weight_bytes + (8 << 20)
    vmem_limit = int(min(max(vmem_limit, 32 << 20), 48 << 20))

    out = pl.pallas_call(
        functools.partial(_ncf_kernel, num_layers),
        out_shape=jax.ShapeDtypeStruct((num_tiles, 1, tile_b), jnp.float32),
        grid=(num_tiles,),
        in_specs=in_specs,
        out_specs=pl.BlockSpec((1, 1, tile_b), lambda i: (i, 0, 0)),
        compiler_params=pltpu.CompilerParams(
            dimension_semantics=("parallel",),
            vmem_limit_bytes=vmem_limit,
        ),
        cost_estimate=cost,
    )(eu_gmf, ei_gmf, mlp_in, *weight_inputs, wp_gmf, wp_mlp, bp)

    return out.reshape(-1)[:B]   # matches prediction.view(-1)


def _reference_forward(user, item, params, num_layers):
    eu_gmf = params["embed_user_GMF"][user]
    ei_gmf = params["embed_item_GMF"][item]
    gmf = eu_gmf * ei_gmf
    x = jnp.concatenate(
        [params["embed_user_MLP"][user], params["embed_item_MLP"][item]], axis=-1
    )
    for i in range(num_layers):
        x = jnp.maximum(x @ params[f"mlp_w{i}"] + params[f"mlp_b{i}"], 0.0)
    concat = jnp.concatenate([gmf, x], axis=-1)
    return (concat @ params["predict_w"] + params["predict_b"]).reshape(-1)


def init_params(key, user_num, item_num, factor_num, num_layers):
    ks = jax.random.split(key, 8 + 2 * num_layers)
    mlp_embed_dim = factor_num * 2 ** (num_layers - 1)
    params = {
        "embed_user_GMF": 0.01 * jax.random.normal(ks[0], (user_num, factor_num), jnp.float32),
        "embed_item_GMF": 0.01 * jax.random.normal(ks[1], (item_num, factor_num), jnp.float32),
        "embed_user_MLP": 0.01 * jax.random.normal(ks[2], (user_num, mlp_embed_dim), jnp.float32),
        "embed_item_MLP": 0.01 * jax.random.normal(ks[3], (item_num, mlp_embed_dim), jnp.float32),
    }
    # MLP layers: input_size = factor_num * 2^(num_layers - i), output halves.
    for i in range(num_layers):
        in_sz = factor_num * 2 ** (num_layers - i)
        out_sz = in_sz // 2
        bound = (6.0 / (in_sz + out_sz)) ** 0.5   # xavier_uniform (stored [in, out])
        params[f"mlp_w{i}"] = jax.random.uniform(
            ks[4 + i], (in_sz, out_sz), jnp.float32, minval=-bound, maxval=bound
        )
        params[f"mlp_b{i}"] = jnp.zeros((out_sz,), jnp.float32)
    # predict layer: kaiming_uniform(a=1) on [1, predict_size] -> stored [predict_size, 1]
    predict_size = factor_num * 2  # NeuMF
    kbound = (6.0 / ((1 + 1.0 ** 2) * predict_size)) ** 0.5
    params["predict_w"] = jax.random.uniform(
        ks[4 + num_layers], (predict_size, 1), jnp.float32, minval=-kbound, maxval=kbound
    )
    params["predict_b"] = jnp.zeros((1,), jnp.float32)
    return params


if __name__ == "__main__":
    user_num, item_num = 64, 96
    factor_num, num_layers = 32, 3
    batch = 300   # not a tile multiple -> exercises ragged-batch padding

    key = jax.random.PRNGKey(0)
    kp, ku, ki = jax.random.split(key, 3)
    params = init_params(kp, user_num, item_num, factor_num, num_layers)
    user = jax.random.randint(ku, (batch,), 0, user_num, dtype=jnp.int32)
    item = jax.random.randint(ki, (batch,), 0, item_num, dtype=jnp.int32)

    ref = jax.block_until_ready(_reference_forward(user, item, params, num_layers))

    # f32 compute path, 2 batch tiles — strict check against the pure-JAX reference.
    pred = jax.block_until_ready(
        ncf_forward(user, item, params, num_layers, tile_b=256,
                    compute_dtype=jnp.float32)
    )
    assert pred.shape == (batch,)
    assert jnp.allclose(pred, ref, atol=1e-5, rtol=1e-5), (pred, ref)

    # Default path: bf16 weights/activations (f32 accumulation), auto tile size.
    pred_bf16 = jax.block_until_ready(
        ncf_forward(user, item, params, num_layers)
    )
    assert pred_bf16.shape == (batch,)
    assert jnp.allclose(pred_bf16, ref, atol=1e-2, rtol=1e-1)

    print("KERNEL_OK")
</pallas_src>

<mosaic_0001>
module attributes {stable_mosaic.version = 11 : i64} {
  func.func @_ncf_kernel(%arg0: i32, %arg1: memref<256x32xf32, #tpu.memory_space<vmem>>, %arg2: memref<256x32xf32, #tpu.memory_space<vmem>>, %arg3: memref<256x256xf32, #tpu.memory_space<vmem>>, %arg4: memref<256x128xf32, #tpu.memory_space<vmem>>, %arg5: memref<1x128xf32, #tpu.memory_space<vmem>>, %arg6: memref<128x64xf32, #tpu.memory_space<vmem>>, %arg7: memref<1x64xf32, #tpu.memory_space<vmem>>, %arg8: memref<64x32xf32, #tpu.memory_space<vmem>>, %arg9: memref<1x32xf32, #tpu.memory_space<vmem>>, %arg10: memref<1x32xf32, #tpu.memory_space<vmem>>, %arg11: memref<1x32xf32, #tpu.memory_space<vmem>>, %arg12: memref<1x1xf32, #tpu.memory_space<smem>>, %arg13: memref<1x1x256xf32, #tpu.memory_space<vmem>>) attributes {dimension_semantics = [#tpu.dimension_semantics<parallel>], iteration_bounds = array<i64: 2>, scalar_prefetch = 0 : i64, scratch_operands = 0 : i64, tpu.core_type = #tpu.core_type<tc>, window_params = [{transform_indices = @transform_0, window_bounds = array<i64: 256, 32>}, {transform_indices = @transform_1, window_bounds = array<i64: 256, 32>}, {transform_indices = @transform_2, window_bounds = array<i64: 256, 256>}, {pipeline_mode = #tpu.pipeline_mode<synchronous>, transform_indices = @transform_3, window_bounds = array<i64: 256, 128>}, {pipeline_mode = #tpu.pipeline_mode<synchronous>, transform_indices = @transform_4, window_bounds = array<i64: 1, 128>}, {pipeline_mode = #tpu.pipeline_mode<synchronous>, transform_indices = @transform_5, window_bounds = array<i64: 128, 64>}, {pipeline_mode = #tpu.pipeline_mode<synchronous>, transform_indices = @transform_6, window_bounds = array<i64: 1, 64>}, {pipeline_mode = #tpu.pipeline_mode<synchronous>, transform_indices = @transform_7, window_bounds = array<i64: 64, 32>}, {pipeline_mode = #tpu.pipeline_mode<synchronous>, transform_indices = @transform_8, window_bounds = array<i64: 1, 32>}, {pipeline_mode = #tpu.pipeline_mode<synchronous>, transform_indices = @transform_9, window_bounds = array<i64: 1, 32>}, {pipeline_mode = #tpu.pipeline_mode<synchronous>, transform_indices = @transform_10, window_bounds = array<i64: 1, 32>}, {transform_indices = @transform_11, window_bounds = array<i64: 1, 1>}, {transform_indices = @transform_12, window_bounds = array<i64: 1, 1, 256>}]} {
    %c0 = arith.constant 0 : index
    %c0_0 = arith.constant 0 : index
    %0 = vector.load %arg1[%c0, %c0_0] : memref<256x32xf32, #tpu.memory_space<vmem>>, vector<256x32xf32>
    %c0_1 = arith.constant 0 : index
    %c0_2 = arith.constant 0 : index
    %1 = vector.load %arg2[%c0_1, %c0_2] : memref<256x32xf32, #tpu.memory_space<vmem>>, vector<256x32xf32>
    %2 = arith.mulf %0, %1 : vector<256x32xf32>
    %c0_3 = arith.constant 0 : index
    %c0_4 = arith.constant 0 : index
    %3 = vector.load %arg3[%c0_3, %c0_4] : memref<256x256xf32, #tpu.memory_space<vmem>>, vector<256x256xf32>
    %c0_5 = arith.constant 0 : index
    %c0_6 = arith.constant 0 : index
    %4 = vector.load %arg4[%c0_5, %c0_6] : memref<256x128xf32, #tpu.memory_space<vmem>>, vector<256x128xf32>
    %cst = arith.constant dense<0.000000e+00> : vector<256x128xf32>
    %5 = tpu.matmul %3, %4, %cst {dimension_numbers = #tpu.dot_dimension_numbers<[1], [0], [0], [1], [0, 0, 1, 1], [], []>} : vector<256x256xf32>, vector<256x128xf32>, vector<256x128xf32> -> vector<256x128xf32>
    %c0_7 = arith.constant 0 : index
    %c0_8 = arith.constant 0 : index
    %6 = vector.load %arg5[%c0_7, %c0_8] : memref<1x128xf32, #tpu.memory_space<vmem>>, vector<1x128xf32>
    %7 = vector.broadcast %6 : vector<1x128xf32> to vector<256x128xf32>
    %8 = arith.addf %5, %7 : vector<256x128xf32>
    %cst_9 = arith.constant 0.000000e+00 : f32
    %9 = vector.broadcast %cst_9 : f32 to vector<256x128xf32>
    %10 = arith.maximumf %8, %9 : vector<256x128xf32>
    %c0_10 = arith.constant 0 : index
    %c0_11 = arith.constant 0 : index
    %11 = vector.load %arg6[%c0_10, %c0_11] : memref<128x64xf32, #tpu.memory_space<vmem>>, vector<128x64xf32>
    %cst_12 = arith.constant dense<0.000000e+00> : vector<256x64xf32>
    %12 = tpu.matmul %10, %11, %cst_12 {dimension_numbers = #tpu.dot_dimension_numbers<[1], [0], [0], [1], [0, 0, 1, 1], [], []>} : vector<256x128xf32>, vector<128x64xf32>, vector<256x64xf32> -> vector<256x64xf32>
    %c0_13 = arith.constant 0 : index
    %c0_14 = arith.constant 0 : index
    %13 = vector.load %arg7[%c0_13, %c0_14] : memref<1x64xf32, #tpu.memory_space<vmem>>, vector<1x64xf32>
    %14 = vector.broadcast %13 : vector<1x64xf32> to vector<256x64xf32>
    %15 = arith.addf %12, %14 : vector<256x64xf32>
    %cst_15 = arith.constant 0.000000e+00 : f32
    %16 = vector.broadcast %cst_15 : f32 to vector<256x64xf32>
    %17 = arith.maximumf %15, %16 : vector<256x64xf32>
    %c0_16 = arith.constant 0 : index
    %c0_17 = arith.constant 0 : index
    %18 = vector.load %arg8[%c0_16, %c0_17] : memref<64x32xf32, #tpu.memory_space<vmem>>, vector<64x32xf32>
    %cst_18 = arith.constant dense<0.000000e+00> : vector<256x32xf32>
    %19 = tpu.matmul %17, %18, %cst_18 {dimension_numbers = #tpu.dot_dimension_numbers<[1], [0], [0], [1], [0, 0, 1, 1], [], []>} : vector<256x64xf32>, vector<64x32xf32>, vector<256x32xf32> -> vector<256x32xf32>
    %c0_19 = arith.constant 0 : index
    %c0_20 = arith.constant 0 : index
    %20 = vector.load %arg9[%c0_19, %c0_20] : memref<1x32xf32, #tpu.memory_space<vmem>>, vector<1x32xf32>
    %21 = vector.broadcast %20 : vector<1x32xf32> to vector<256x32xf32>
    %22 = arith.addf %19, %21 : vector<256x32xf32>
    %cst_21 = arith.constant 0.000000e+00 : f32
    %23 = vector.broadcast %cst_21 : f32 to vector<256x32xf32>
    %24 = arith.maximumf %22, %23 : vector<256x32xf32>
    %c0_22 = arith.constant 0 : index
    %c0_23 = arith.constant 0 : index
    %25 = vector.load %arg10[%c0_22, %c0_23] : memref<1x32xf32, #tpu.memory_space<vmem>>, vector<1x32xf32>
    %26 = vector.broadcast %25 : vector<1x32xf32> to vector<256x32xf32>
    %27 = arith.mulf %2, %26 : vector<256x32xf32>
    %c0_24 = arith.constant 0 : index
    %c0_25 = arith.constant 0 : index
    %28 = vector.load %arg11[%c0_24, %c0_25] : memref<1x32xf32, #tpu.memory_space<vmem>>, vector<1x32xf32>
    %29 = vector.broadcast %28 : vector<1x32xf32> to vector<256x32xf32>
    %30 = arith.mulf %24, %29 : vector<256x32xf32>
    %31 = arith.addf %27, %30 : vector<256x32xf32>
    %cst_26 = arith.constant dense<0.000000e+00> : vector<256xf32>
    %32 = vector.multi_reduction <add>, %31, %cst_26 [1] : vector<256x32xf32> to vector<256xf32>
    %c0_27 = arith.constant 0 : index
    %c0_28 = arith.constant 0 : index
    %33 = memref.load %arg12[%c0_27, %c0_28] : memref<1x1xf32, #tpu.memory_space<smem>>
    %34 = vector.broadcast %33 : f32 to vector<256xf32>
    %35 = arith.addf %32, %34 : vector<256xf32>
    %36 = vector.shape_cast %35 : vector<256xf32> to vector<1x1x256xf32>
    %c0_29 = arith.constant 0 : index
    %c0_30 = arith.constant 0 : index
    %c0_31 = arith.constant 0 : index
    %37 = vector.load %arg13[%c0_29, %c0_30, %c0_31] : memref<1x1x256xf32, #tpu.memory_space<vmem>>, vector<1x1x256xf32>
    tpu.vector_store %arg13[%c0_29, %c0_30, %c0_31], %36 {strides = array<i32>} : memref<1x1x256xf32, #tpu.memory_space<vmem>>, vector<1x1x256xf32>,
    return
  }
  func.func @transform_0(%arg0: i32) -> (i32, i32) {
    %c0_i32 = arith.constant 0 : i32
    %c0_i32_0 = arith.constant 0 : i32
    return %arg0, %c0_i32 : i32, i32
  }
  func.func @transform_1(%arg0: i32) -> (i32, i32) {
    %c0_i32 = arith.constant 0 : i32
    %c0_i32_0 = arith.constant 0 : i32
    return %arg0, %c0_i32 : i32, i32
  }
  func.func @transform_2(%arg0: i32) -> (i32, i32) {
    %c0_i32 = arith.constant 0 : i32
    %c0_i32_0 = arith.constant 0 : i32
    return %arg0, %c0_i32 : i32, i32
  }
  func.func @transform_3(%arg0: i32) -> (i32, i32) {
    %c0_i32 = arith.constant 0 : i32
    %c0_i32_0 = arith.constant 0 : i32
    %c0_i32_1 = arith.constant 0 : i32
    return %c0_i32, %c0_i32_0 : i32, i32
  }
  func.func @transform_4(%arg0: i32) -> (i32, i32) {
    %c0_i32 = arith.constant 0 : i32
    %c0_i32_0 = arith.constant 0 : i32
    %c0_i32_1 = arith.constant 0 : i32
    return %c0_i32, %c0_i32_0 : i32, i32
  }
  func.func @transform_5(%arg0: i32) -> (i32, i32) {
    %c0_i32 = arith.constant 0 : i32
    %c0_i32_0 = arith.constant 0 : i32
    %c0_i32_1 = arith.constant 0 : i32
    return %c0_i32, %c0_i32_0 : i32, i32
  }
  func.func @transform_6(%arg0: i32) -> (i32, i32) {
    %c0_i32 = arith.constant 0 : i32
    %c0_i32_0 = arith.constant 0 : i32
    %c0_i32_1 = arith.constant 0 : i32
    return %c0_i32, %c0_i32_0 : i32, i32
  }
  func.func @transform_7(%arg0: i32) -> (i32, i32) {
    %c0_i32 = arith.constant 0 : i32
    %c0_i32_0 = arith.constant 0 : i32
    %c0_i32_1 = arith.constant 0 : i32
    return %c0_i32, %c0_i32_0 : i32, i32
  }
  func.func @transform_8(%arg0: i32) -> (i32, i32) {
    %c0_i32 = arith.constant 0 : i32
    %c0_i32_0 = arith.constant 0 : i32
    %c0_i32_1 = arith.constant 0 : i32
    return %c0_i32, %c0_i32_0 : i32, i32
  }
  func.func @transform_9(%arg0: i32) -> (i32, i32) {
    %c0_i32 = arith.constant 0 : i32
    %c0_i32_0 = arith.constant 0 : i32
    %c0_i32_1 = arith.constant 0 : i32
    return %c0_i32, %c0_i32_0 : i32, i32
  }
  func.func @transform_10(%arg0: i32) -> (i32, i32) {
    %c0_i32 = arith.constant 0 : i32
    %c0_i32_0 = arith.constant 0 : i32
    %c0_i32_1 = arith.constant 0 : i32
    return %c0_i32, %c0_i32_0 : i32, i32
  }
  func.func @transform_11(%arg0: i32) -> (i32, i32) {
    %c0_i32 = arith.constant 0 : i32
    %c0_i32_0 = arith.constant 0 : i32
    %c0_i32_1 = arith.constant 0 : i32
    return %c0_i32, %c0_i32_0 : i32, i32
  }
  func.func @transform_12(%arg0: i32) -> (i32, i32, i32) {
    %c0_i32 = arith.constant 0 : i32
    %c0_i32_0 = arith.constant 0 : i32
    %c0_i32_1 = arith.constant 0 : i32
    return %arg0, %c0_i32, %c0_i32_0 : i32, i32, i32
  }
}

</mosaic_0001>

<llo_original>
// kernel: tpu_custom_call.1
$region0: #{tpu_custom_call.1}
  #allocation0 [shape = 'u32[]', space=smem, size = 0x4, offset = 0x4, fixed_abs, tag = 'smem constant byte address 0x4 - core index']
  #allocation1 [shape = 'u32[144,128]{1,0:T(1,128)}', space=vmem, size = 0x12000, scoped, tag = 'internal scratch']
  #allocation2 [shape = 'f32[1,1]{1,0:T(1,128)S(6)}', space=smem, size = 0x200, scoped, tag = 'scoped memory for tpu_custom_call.1']
  %s0 = inlined_call_operand.vmem [shape: f32[512,32], index: 0, kind: input, shape index: {}]
  %s1 = inlined_call_operand.vmem [shape: f32[512,32], index: 1, kind: input, shape index: {}]
  %s2 = inlined_call_operand.vmem [shape: f32[512,256], index: 2, kind: input, shape index: {}]
  %s3 = inlined_call_operand.vmem [shape: f32[256,128], index: 3, kind: input, shape index: {}]
  %s4 = inlined_call_operand.vmem [shape: f32[1,128], index: 4, kind: input, shape index: {}]
  %s5 = inlined_call_operand.vmem [shape: f32[128,64], index: 5, kind: input, shape index: {}]
  %s6 = inlined_call_operand.vmem [shape: f32[1,64], index: 6, kind: input, shape index: {}]
  %s7 = inlined_call_operand.vmem [shape: f32[64,32], index: 7, kind: input, shape index: {}]
  %s8 = inlined_call_operand.vmem [shape: f32[1,32], index: 8, kind: input, shape index: {}]
  %s9 = inlined_call_operand.vmem [shape: f32[1,32], index: 9, kind: input, shape index: {}]
  %s10 = inlined_call_operand.vmem [shape: f32[1,32], index: 10, kind: input, shape index: {}]
  %s11 = inlined_call_operand.<no memory space> [shape: f32[1,1], index: 11, kind: input, shape index: {}]
  %s12 = inlined_call_operand.hbm [shape: f32[2,1,256], index: 12, kind: output, shape index: {}]
  %s13 = sld [smem:[#allocation0]]
  $region81: #{tpu_custom_call.1} parent=0
    _
  %s15 = ssub.s32 1, %s13
  %s16 = scalar_select 0, %s15, %s13
  %17 = sst [smem:[#allocation2]] %s11
  $region1: #{tpu_custom_call.1} parent=0
    #allocation3 [shape = 'u8[2048]{0}', space=vmem, size = 0x800, scoped, tag = 'output window, operand 0']
    #allocation4 [shape = 's32[2]{0}', space=sflag, size = 0x8, scoped, tag = 'scoped memory for tpu_custom_call.1']
    %18 = vsyncpa [#allocation4], 0
    %s19 = scalar_lea.sflag [#allocation4], 1
    %20 = vsyncpa %s19, 0
    loop: start=0, step=1, limit=4
    $region2: #{tpu_custom_call.1} parent=1 // loop_pre_header
      _
    $region3: #{tpu_custom_call.1} parent=1 // loop_header
      %s22 = sphi 0, %s26
      %p23 = scmp.ge.s32.totalorder %s22, 4
      %s32 = sphi 0, %s34
      %s35 = sphi 0, %s32
      %s36 = sphi 0, %s35
      %s52 = sphi 0, %s36
      %s58 = sphi 0, %s60
      %s61 = sphi 0, %s58
      %s62 = sphi 0, %s61
      %s78 = sphi 0, %s62
      %s84 = sphi 0, %s86
      %s87 = sphi 0, %s84
      %s88 = sphi 0, %s87
      %s104 = sphi 0, %s88
      %s108 = sphi 0, %s108
      %s110 = sphi 0, %s108
      %s111 = sphi 0, %s110
      %s125 = sphi 0, %s111
      %s129 = sphi 0, %s129
      %s131 = sphi 0, %s129
      %s132 = sphi 0, %s131
      %s146 = sphi 0, %s132
      %s150 = sphi 0, %s150
      %s152 = sphi 0, %s150
      %s153 = sphi 0, %s152
      %s167 = sphi 0, %s153
      %s171 = sphi 0, %s171
      %s173 = sphi 0, %s171
      %s174 = sphi 0, %s173
      %s188 = sphi 0, %s174
      %s192 = sphi 0, %s192
      %s194 = sphi 0, %s192
      %s195 = sphi 0, %s194
      %s209 = sphi 0, %s195
      %s213 = sphi 0, %s213
      %s215 = sphi 0, %s213
      %s216 = sphi 0, %s215
      %s230 = sphi 0, %s216
      %s234 = sphi 0, %s234
      %s236 = sphi 0, %s234
      %s237 = sphi 0, %s236
      %s251 = sphi 0, %s237
      %s255 = sphi 0, %s255
      %s257 = sphi 0, %s255
      %s258 = sphi 0, %s257
      %s272 = sphi 0, %s258
      %s276 = sphi 0, %s276
      %s278 = sphi 0, %s276
      %s279 = sphi 0, %s278
      %s293 = sphi 0, %s279
      %s299 = sphi 0, %s301
      %s302 = sphi 0, %s299
      %s303 = sphi 0, %s302
      %s319 = sphi 0, %s303
    $region4: #{tpu_custom_call.1} parent=1 // loop_header_branch
      %25 = sbr.rel (%p23) target = $region8
    $region5: #{tpu_custom_call.1} parent=1 // loop_body
      %s27 = ssub.s32 %s22, 1
      %s28 = ssub.s32 %s22, 2
      %s29 = sadd.s32 %s22, 1
      %s30 = ssub.s32 %s22, %s29
      %p31 = scmp.eq.s32.totalorder %s30, 0
      %s33 = sadd.s32 %s32, 1
      %s34 = scalar_select %p31, %s32, %s33
      %p37 = pneg %p31
      %p38 = scmp.eq.s32.totalorder %s22, 1
      %p39 = por %p37, %p38
      %p40 = scmp.ne.s32.totalorder %s32, %s35
      %p41 = scmp.eq.s32.totalorder %s22, 0
      %p42 = por %p40, %p41
      %p43 = scmp.ne.s32.totalorder %s32, %s35
      %p44 = scmp.eq.s32.totalorder %s27, 1
      %p45 = por %p43, %p44
      %p46 = scmp.ne.s32.totalorder %s35, %s36
      %p47 = scmp.eq.s32.totalorder %s27, 0
      %p48 = por %p46, %p47
      %p49 = scmp.ne.s32.totalorder %s35, %s36
      %p50 = scmp.eq.s32.totalorder %s28, 1
      %p51 = por %p49, %p50
      %p53 = scmp.ne.s32.totalorder %s36, %s52
      %p54 = scmp.eq.s32.totalorder %s28, 0
      %p55 = por %p53, %p54
      %s56 = ssub.s32 %s22, %s29
      %p57 = scmp.eq.s32.totalorder %s56, 0
      %s59 = sadd.s32 %s58, 1
      %s60 = scalar_select %p57, %s58, %s59
      %p63 = pneg %p57
      %p64 = scmp.eq.s32.totalorder %s22, 1
      %p65 = por %p63, %p64
      %p66 = scmp.ne.s32.totalorder %s58, %s61
      %p67 = scmp.eq.s32.totalorder %s22, 0
      %p68 = por %p66, %p67
      %p69 = scmp.ne.s32.totalorder %s58, %s61
      %p70 = scmp.eq.s32.totalorder %s27, 1
      %p71 = por %p69, %p70
      %p72 = scmp.ne.s32.totalorder %s61, %s62
      %p73 = scmp.eq.s32.totalorder %s27, 0
      %p74 = por %p72, %p73
      %p75 = scmp.ne.s32.totalorder %s61, %s62
      %p76 = scmp.eq.s32.totalorder %s28, 1
      %p77 = por %p75, %p76
      %p79 = scmp.ne.s32.totalorder %s62, %s78
      %p80 = scmp.eq.s32.totalorder %s28, 0
      %p81 = por %p79, %p80
      %s82 = ssub.s32 %s22, %s29
      %p83 = scmp.eq.s32.totalorder %s82, 0
      %s85 = sadd.s32 %s84, 1
      %s86 = scalar_select %p83, %s84, %s85
      %p89 = pneg %p83
      %p90 = scmp.eq.s32.totalorder %s22, 1
      %p91 = por %p89, %p90
      %p92 = scmp.ne.s32.totalorder %s84, %s87
      %p93 = scmp.eq.s32.totalorder %s22, 0
      %p94 = por %p92, %p93
      %p95 = scmp.ne.s32.totalorder %s84, %s87
      %p96 = scmp.eq.s32.totalorder %s27, 1
      %p97 = por %p95, %p96
      %p98 = scmp.ne.s32.totalorder %s87, %s88
      %p99 = scmp.eq.s32.totalorder %s27, 0
      %p100 = por %p98, %p99
      %p101 = scmp.ne.s32.totalorder %s87, %s88
      %p102 = scmp.eq.s32.totalorder %s28, 1
      %p103 = por %p101, %p102
      %p105 = scmp.ne.s32.totalorder %s88, %s104
      %p106 = scmp.eq.s32.totalorder %s28, 0
      %p107 = por %p105, %p106
      %s109 = sadd.s32 %s108, 1
      %p112 = scmp.eq.s32.totalorder %s22, 1
      %p113 = scmp.ne.s32.totalorder %s108, %s110
      %p114 = scmp.eq.s32.totalorder %s22, 0
      %p115 = por %p113, %p114
      %p116 = scmp.ne.s32.totalorder %s108, %s110
      %p117 = scmp.eq.s32.totalorder %s27, 1
      %p118 = por %p116, %p117
      %p119 = scmp.ne.s32.totalorder %s110, %s111
      %p120 = scmp.eq.s32.totalorder %s27, 0
      %p121 = por %p119, %p120
      %p122 = scmp.ne.s32.totalorder %s110, %s111
      %p123 = scmp.eq.s32.totalorder %s28, 1
      %p124 = por %p122, %p123
      %p126 = scmp.ne.s32.totalorder %s111, %s125
      %p127 = scmp.eq.s32.totalorder %s28, 0
      %p128 = por %p126, %p127
      %s130 = sadd.s32 %s129, 1
      %p133 = scmp.eq.s32.totalorder %s22, 1
      %p134 = scmp.ne.s32.totalorder %s129, %s131
      %p135 = scmp.eq.s32.totalorder %s22, 0
      %p136 = por %p134, %p135
      %p137 = scmp.ne.s32.totalorder %s129, %s131
      %p138 = scmp.eq.s32.totalorder %s27, 1
      %p139 = por %p137, %p138
      %p140 = scmp.ne.s32.totalorder %s131, %s132
      %p141 = scmp.eq.s32.totalorder %s27, 0
      %p142 = por %p140, %p141
      %p143 = scmp.ne.s32.totalorder %s131, %s132
      %p144 = scmp.eq.s32.totalorder %s28, 1
      %p145 = por %p143, %p144
      %p147 = scmp.ne.s32.totalorder %s132, %s146
      %p148 = scmp.eq.s32.totalorder %s28, 0
      %p149 = por %p147, %p148
      %s151 = sadd.s32 %s150, 1
      %p154 = scmp.eq.s32.totalorder %s22, 1
      %p155 = scmp.ne.s32.totalorder %s150, %s152
      %p156 = scmp.eq.s32.totalorder %s22, 0
      %p157 = por %p155, %p156
      %p158 = scmp.ne.s32.totalorder %s150, %s152
      %p159 = scmp.eq.s32.totalorder %s27, 1
      %p160 = por %p158, %p159
      %p161 = scmp.ne.s32.totalorder %s152, %s153
      %p162 = scmp.eq.s32.totalorder %s27, 0
      %p163 = por %p161, %p162
      %p164 = scmp.ne.s32.totalorder %s152, %s153
      %p165 = scmp.eq.s32.totalorder %s28, 1
      %p166 = por %p164, %p165
      %p168 = scmp.ne.s32.totalorder %s153, %s167
      %p169 = scmp.eq.s32.totalorder %s28, 0
      %p170 = por %p168, %p169
      %s172 = sadd.s32 %s171, 1
      %p175 = scmp.eq.s32.totalorder %s22, 1
      %p176 = scmp.ne.s32.totalorder %s171, %s173
      %p177 = scmp.eq.s32.totalorder %s22, 0
      %p178 = por %p176, %p177
      %p179 = scmp.ne.s32.totalorder %s171, %s173
      %p180 = scmp.eq.s32.totalorder %s27, 1
      %p181 = por %p179, %p180
      %p182 = scmp.ne.s32.totalorder %s173, %s174
      %p183 = scmp.eq.s32.totalorder %s27, 0
      %p184 = por %p182, %p183
      %p185 = scmp.ne.s32.totalorder %s173, %s174
      %p186 = scmp.eq.s32.totalorder %s28, 1
      %p187 = por %p185, %p186
      %p189 = scmp.ne.s32.totalorder %s174, %s188
      %p190 = scmp.eq.s32.totalorder %s28, 0
      %p191 = por %p189, %p190
      %s193 = sadd.s32 %s192, 1
      %p196 = scmp.eq.s32.totalorder %s22, 1
      %p197 = scmp.ne.s32.totalorder %s192, %s194
      %p198 = scmp.eq.s32.totalorder %s22, 0
      %p199 = por %p197, %p198
      %p200 = scmp.ne.s32.totalorder %s192, %s194
      %p201 = scmp.eq.s32.totalorder %s27, 1
      %p202 = por %p200, %p201
      %p203 = scmp.ne.s32.totalorder %s194, %s195
      %p204 = scmp.eq.s32.totalorder %s27, 0
      %p205 = por %p203, %p204
      %p206 = scmp.ne.s32.totalorder %s194, %s195
      %p207 = scmp.eq.s32.totalorder %s28, 1
      %p208 = por %p206, %p207
      %p210 = scmp.ne.s32.totalorder %s195, %s209
      %p211 = scmp.eq.s32.totalorder %s28, 0
      %p212 = por %p210, %p211
      %s214 = sadd.s32 %s213, 1
      %p217 = scmp.eq.s32.totalorder %s22, 1
      %p218 = scmp.ne.s32.totalorder %s213, %s215
      %p219 = scmp.eq.s32.totalorder %s22, 0
      %p220 = por %p218, %p219
      %p221 = scmp.ne.s32.totalorder %s213, %s215
      %p222 = scmp.eq.s32.totalorder %s27, 1
      %p223 = por %p221, %p222
      %p224 = scmp.ne.s32.totalorder %s215, %s216
      %p225 = scmp.eq.s32.totalorder %s27, 0
      %p226 = por %p224, %p225
      %p227 = scmp.ne.s32.totalorder %s215, %s216
      %p228 = scmp.eq.s32.totalorder %s28, 1
      %p229 = por %p227, %p228
      %p231 = scmp.ne.s32.totalorder %s216, %s230
      %p232 = scmp.eq.s32.totalorder %s28, 0
      %p233 = por %p231, %p232
      %s235 = sadd.s32 %s234, 1
      %p238 = scmp.eq.s32.totalorder %s22, 1
      %p239 = scmp.ne.s32.totalorder %s234, %s236
      %p240 = scmp.eq.s32.totalorder %s22, 0
      %p241 = por %p239, %p240
      %p242 = scmp.ne.s32.totalorder %s234, %s236
      %p243 = scmp.eq.s32.totalorder %s27, 1
      %p244 = por %p242, %p243
      %p245 = scmp.ne.s32.totalorder %s236, %s237
      %p246 = scmp.eq.s32.totalorder %s27, 0
      %p247 = por %p245, %p246
      %p248 = scmp.ne.s32.totalorder %s236, %s237
      %p249 = scmp.eq.s32.totalorder %s28, 1
      %p250 = por %p248, %p249
      %p252 = scmp.ne.s32.totalorder %s237, %s251
      %p253 = scmp.eq.s32.totalorder %s28, 0
      %p254 = por %p252, %p253
      %s256 = sadd.s32 %s255, 1
      %p259 = scmp.eq.s32.totalorder %s22, 1
      %p260 = scmp.ne.s32.totalorder %s255, %s257
      %p261 = scmp.eq.s32.totalorder %s22, 0
      %p262 = por %p260, %p261
      %p263 = scmp.ne.s32.totalorder %s255, %s257
      %p264 = scmp.eq.s32.totalorder %s27, 1
      %p265 = por %p263, %p264
      %p266 = scmp.ne.s32.totalorder %s257, %s258
      %p267 = scmp.eq.s32.totalorder %s27, 0
      %p268 = por %p266, %p267
      %p269 = scmp.ne.s32.totalorder %s257, %s258
      %p270 = scmp.eq.s32.totalorder %s28, 1
      %p271 = por %p269, %p270
      %p273 = scmp.ne.s32.totalorder %s258, %s272
      %p274 = scmp.eq.s32.totalorder %s28, 0
      %p275 = por %p273, %p274
      %s277 = sadd.s32 %s276, 1
      %p280 = scmp.eq.s32.totalorder %s22, 1
      %p281 = scmp.ne.s32.totalorder %s276, %s278
      %p282 = scmp.eq.s32.totalorder %s22, 0
      %p283 = por %p281, %p282
      %p284 = scmp.ne.s32.totalorder %s276, %s278
      %p285 = scmp.eq.s32.totalorder %s27, 1
      %p286 = por %p284, %p285
      %p287 = scmp.ne.s32.totalorder %s278, %s279
      %p288 = scmp.eq.s32.totalorder %s27, 0
      %p289 = por %p287, %p288
      %p290 = scmp.ne.s32.totalorder %s278, %s279
      %p291 = scmp.eq.s32.totalorder %s28, 1
      %p292 = por %p290, %p291
      %p294 = scmp.ne.s32.totalorder %s279, %s293
      %p295 = scmp.eq.s32.totalorder %s28, 0
      %p296 = por %p294, %p295
      %s297 = ssub.s32 %s22, %s29
      %p298 = scmp.eq.s32.totalorder %s297, 0
      %s300 = sadd.s32 %s299, 1
      %s301 = scalar_select %p298, %s299, %s300
      %p304 = pneg %p298
      %p305 = scmp.eq.s32.totalorder %s22, 1
      %p306 = por %p304, %p305
      %p307 = scmp.ne.s32.totalorder %s299, %s302
      %p308 = scmp.eq.s32.totalorder %s22, 0
      %p309 = por %p307, %p308
      %p310 = scmp.ne.s32.totalorder %s299, %s302
      %p311 = scmp.eq.s32.totalorder %s27, 1
      %p312 = por %p310, %p311
      %p313 = scmp.ne.s32.totalorder %s302, %s303
      %p314 = scmp.eq.s32.totalorder %s27, 0
      %p315 = por %p313, %p314
      %p316 = scmp.ne.s32.totalorder %s302, %s303
      %p317 = scmp.eq.s32.totalorder %s28, 1
      %p318 = por %p316, %p317
      %p320 = scmp.ne.s32.totalorder %s303, %s319
      %p321 = scmp.eq.s32.totalorder %s28, 0
      %p322 = por %p320, %p321
      %p323 = scmp.le.s32.totalorder 1, %s22
      %p324 = scmp.lt.s32.totalorder %s22, 3
      %p325 = pnand %p323, %p324
      %p326 = pneg %p325
      // Predicated region
      $region9: #{tpu_custom_call.1} parent=5 // pred_check
        _
      $region10: #{tpu_custom_call.1} parent=5 // pred_check_branch
        %328 = sbr.rel (%p325) target = $region12
      $region11: #{tpu_custom_call.1} parent=5 // pred_region
        %s329 = ssub.s32 %s22, 1
        // Predicated region
        $region13: #{tpu_custom_call.1} parent=11 // pred_check
          %p330 = pneg %p121
        $region14: #{tpu_custom_call.1} parent=11 // pred_check_branch
          %332 = sbr.rel (%p330) target = $region16
        $region15: #{tpu_custom_call.1} parent=11 // pred_region
          _
        $region16: #{tpu_custom_call.1} parent=11 // pred_fallthru
          _
        // Predicated region
        $region17: #{tpu_custom_call.1} parent=11 // pred_check
          %p333 = pneg %p142
        $region18: #{tpu_custom_call.1} parent=11 // pred_check_branch
          %335 = sbr.rel (%p333) target = $region20
        $region19: #{tpu_custom_call.1} parent=11 // pred_region
          _
        $region20: #{tpu_custom_call.1} parent=11 // pred_fallthru
          _
        // Predicated region
        $region21: #{tpu_custom_call.1} parent=11 // pred_check
          %p336 = pneg %p163
        $region22: #{tpu_custom_call.1} parent=11 // pred_check_branch
          %338 = sbr.rel (%p336) target = $region24
        $region23: #{tpu_custom_call.1} parent=11 // pred_region
          _
        $region24: #{tpu_custom_call.1} parent=11 // pred_fallthru
          _
        // Predicated region
        $region25: #{tpu_custom_call.1} parent=11 // pred_check
          %p339 = pneg %p184
        $region26: #{tpu_custom_call.1} parent=11 // pred_check_branch
          %341 = sbr.rel (%p339) target = $region28
        $region27: #{tpu_custom_call.1} parent=11 // pred_region
          _
        $region28: #{tpu_custom_call.1} parent=11 // pred_fallthru
          _
        // Predicated region
        $region29: #{tpu_custom_call.1} parent=11 // pred_check
          %p342 = pneg %p205
        $region30: #{tpu_custom_call.1} parent=11 // pred_check_branch
          %344 = sbr.rel (%p342) target = $region32
        $region31: #{tpu_custom_call.1} parent=11 // pred_region
          _
        $region32: #{tpu_custom_call.1} parent=11 // pred_fallthru
          _
        // Predicated region
        $region33: #{tpu_custom_call.1} parent=11 // pred_check
          %p345 = pneg %p226
        $region34: #{tpu_custom_call.1} parent=11 // pred_check_branch
          %347 = sbr.rel (%p345) target = $region36
        $region35: #{tpu_custom_call.1} parent=11 // pred_region
          _
        $region36: #{tpu_custom_call.1} parent=11 // pred_fallthru
          _
        // Predicated region
        $region37: #{tpu_custom_call.1} parent=11 // pred_check
          %p348 = pneg %p247
        $region38: #{tpu_custom_call.1} parent=11 // pred_check_branch
          %350 = sbr.rel (%p348) target = $region40
        $region39: #{tpu_custom_call.1} parent=11 // pred_region
          _
        $region40: #{tpu_custom_call.1} parent=11 // pred_fallthru
          _
        // Predicated region
        $region41: #{tpu_custom_call.1} parent=11 // pred_check
          %p351 = pneg %p268
        $region42: #{tpu_custom_call.1} parent=11 // pred_check_branch
          %353 = sbr.rel (%p351) target = $region44
        $region43: #{tpu_custom_call.1} parent=11 // pred_region
          _
        $region44: #{tpu_custom_call.1} parent=11 // pred_fallthru
          _
        // Predicated region
        $region45: #{tpu_custom_call.1} parent=11 // pred_check
          %p354 = pneg %p289
        $region46: #{tpu_custom_call.1} parent=11 // pred_check_branch
          %356 = sbr.rel (%p354) target = $region48
        $region47: #{tpu_custom_call.1} parent=11 // pred_region
          _
        $region48: #{tpu_custom_call.1} parent=11 // pred_fallthru
          _
      $region12: #{tpu_custom_call.1} parent=5 // pred_fallthru
        _
      %p357 = scmp.lt.s32.totalorder %s22, 2
      // Predicated region
      $region49: #{tpu_custom_call.1} parent=5 // pred_check
        %p358 = pneg %p357
      $region50: #{tpu_custom_call.1} parent=5 // pred_check_branch
        %360 = sbr.rel (%p358) target = $region52
      $region51: #{tpu_custom_call.1} parent=5 // pred_region
        // Predicated region
        $region53: #{tpu_custom_call.1} parent=51 // pred_check
          %p361 = pneg %p42
        $region54: #{tpu_custom_call.1} parent=51 // pred_check_branch
          %363 = sbr.rel (%p361) target = $region56
        $region55: #{tpu_custom_call.1} parent=51 // pred_region
          %s364 = smul.u32 32, %s22
          %p365 = scmp.lt.s32.totalorder %s364, 63
          %s366 = scalar_select %p365, %s364, 63
          %s367 = smul.addr %s366, 8
          %s368 = scalar_lea.vmem %s0, %s367
          %s369 = smul.u32 32, %s22
        $region56: #{tpu_custom_call.1} parent=51 // pred_fallthru
          _
        // Predicated region
        $region57: #{tpu_custom_call.1} parent=51 // pred_check
          %p370 = pneg %p68
        $region58: #{tpu_custom_call.1} parent=51 // pred_check_branch
          %372 = sbr.rel (%p370) target = $region60
        $region59: #{tpu_custom_call.1} parent=51 // pred_region
          %s373 = smul.u32 32, %s22
          %p374 = scmp.lt.s32.totalorder %s373, 63
          %s375 = scalar_select %p374, %s373, 63
          %s376 = smul.addr %s375, 8
          %s377 = scalar_lea.vmem %s1, %s376
          %s378 = smul.u32 32, %s22
        $region60: #{tpu_custom_call.1} parent=51 // pred_fallthru
          _
        // Predicated region
        $region61: #{tpu_custom_call.1} parent=51 // pred_check
          %p379 = pneg %p94
        $region62: #{tpu_custom_call.1} parent=51 // pred_check_branch
          %381 = sbr.rel (%p379) target = $region64
        $region63: #{tpu_custom_call.1} parent=51 // pred_region
          %s382 = smul.u32 32, %s22
          %p383 = scmp.lt.s32.totalorder %s382, 63
          %s384 = scalar_select %p383, %s382, 63
          %s385 = smul.addr %s384, 2
          %s386 = smul.addr %s385, 8
          %s387 = scalar_lea.vmem %s2, %s386
          %s388 = smul.u32 32, %s22
        $region64: #{tpu_custom_call.1} parent=51 // pred_fallthru
          _
      $region52: #{tpu_custom_call.1} parent=5 // pred_fallthru
        _
      %p389 = scmp.le.s32.totalorder 1, %s22
      %p390 = scmp.lt.s32.totalorder %s22, 3
      %p391 = pnand %p389, %p390
      %p392 = pneg %p391
      // Predicated region
      $region65: #{tpu_custom_call.1} parent=5 // pred_check
        _
      $region66: #{tpu_custom_call.1} parent=5 // pred_check_branch
        %394 = sbr.rel (%p391) target = $region68
      $region67: #{tpu_custom_call.1} parent=5 // pred_region
        %s395 = ssub.s32 %s22, 1
        %s396 = smul.u32 32, %s27
        %p397 = scmp.lt.s32.totalorder %s396, 63
        %s398 = scalar_select %p397, %s396, 63
        %s399 = smul.addr %s398, 8
        %s400 = scalar_lea.vmem %s0, %s399
        %p401 = pneg %p48
        %p402 = pneg %p45
        %s403 = smul.u32 32, %s27
        %p404 = scmp.lt.s32.totalorder %s403, 63
        %s405 = scalar_select %p404, %s403, 63
        %s406 = smul.addr %s405, 8
        %s407 = scalar_lea.vmem %s1, %s406
        %p408 = pneg %p74
        %p409 = pneg %p71
        %s410 = smul.u32 32, %s27
        %p411 = scmp.lt.s32.totalorder %s410, 63
        %s412 = scalar_select %p411, %s410, 63
        %s413 = smul.addr %s412, 2
        %s414 = smul.addr %s413, 8
        %s415 = scalar_lea.vmem %s2, %s414
        %p416 = pneg %p100
        %p417 = pneg %p97
        %p418 = pneg %p121
        %p419 = pneg %p118
        %p420 = pneg %p142
        %p421 = pneg %p139
        %p422 = pneg %p163
        %p423 = pneg %p160
        %p424 = pneg %p184
        %p425 = pneg %p181
        %p426 = pneg %p205
        %p427 = pneg %p202
        %p428 = pneg %p226
        %p429 = pneg %p223
        %p430 = pneg %p247
        %p431 = pneg %p244
        %p432 = pneg %p268
        %p433 = pneg %p265
        %p434 = pneg %p289
        %p435 = pneg %p286
        %p436 = pneg %p315
        %p437 = pneg %p312
        %s438 = sand.u32 %s302, 1
        %s439 = scalar_lea.sflag [#allocation4], %s438
        %s440 = sand.u32 %s302, 1
        %s441 = smul.addr %s440, 2
        %s442 = scalar_lea.vmem [#allocation3], %s441
        %s443 = smul.u32 32, %s27
        %p444 = scmp.lt.s32.totalorder %s443, 63
        %s445 = scalar_select %p444, %s443, 63
        %s446 = smul.addr %s445, 8
        %s447 = scalar_lea.vmem %s0, %s446
        %s448 = smul.u32 32, %s27
        %s449 = smul.u32 32, %s27
        %p450 = scmp.lt.s32.totalorder %s449, 63
        %s451 = scalar_select %p450, %s449, 63
        %s452 = smul.addr %s451, 8
        %s453 = scalar_lea.vmem %s1, %s452
        %s454 = smul.u32 32, %s27
        %s455 = smul.u32 32, %s27
        %p456 = scmp.lt.s32.totalorder %s455, 63
        %s457 = scalar_select %p456, %s455, 63
        %s458 = smul.addr %s457, 2
        %s459 = smul.addr %s458, 8
        %s460 = scalar_lea.vmem %s2, %s459
        %s461 = smul.u32 32, %s27
        %v462 = vld [vmem:[%s447] sm:$0xff]
        %v463 = vld [vmem:[%s447 + $0x8] sm:$0xff]
        %v464 = vld [vmem:[%s447 + $0x10] sm:$0xff]
        %v465 = vld [vmem:[%s447 + $0x18] sm:$0xff]
        %v466 = vld [vmem:[%s447 + $0x20] sm:$0xff]
        %v467 = vld [vmem:[%s447 + $0x28] sm:$0xff]
        %v468 = vld [vmem:[%s447 + $0x30] sm:$0xff]
        %v469 = vld [vmem:[%s447 + $0x38] sm:$0xff]
        %v470 = vld [vmem:[%s447 + $0x40] sm:$0xff]
        %v471 = vld [vmem:[%s447 + $0x48] sm:$0xff]
        %v472 = vld [vmem:[%s447 + $0x50] sm:$0xff]
        %v473 = vld [vmem:[%s447 + $0x58] sm:$0xff]
        %v474 = vld [vmem:[%s447 + $0x60] sm:$0xff]
        %v475 = vld [vmem:[%s447 + $0x68] sm:$0xff]
        %v476 = vld [vmem:[%s447 + $0x70] sm:$0xff]
        %v477 = vld [vmem:[%s447 + $0x78] sm:$0xff]
        %v478 = vld [vmem:[%s447 + $0x80] sm:$0xff]
        %v479 = vld [vmem:[%s447 + $0x88] sm:$0xff]
        %v480 = vld [vmem:[%s447 + $0x90] sm:$0xff]
        %v481 = vld [vmem:[%s447 + $0x98] sm:$0xff]
        %v482 = vld [vmem:[%s447 + $0xa0] sm:$0xff]
        %v483 = vld [vmem:[%s447 + $0xa8] sm:$0xff]
        %v484 = vld [vmem:[%s447 + $0xb0] sm:$0xff]
        %v485 = vld [vmem:[%s447 + $0xb8] sm:$0xff]
        %v486 = vld [vmem:[%s447 + $0xc0] sm:$0xff]
        %v487 = vld [vmem:[%s447 + $0xc8] sm:$0xff]
        %v488 = vld [vmem:[%s447 + $0xd0] sm:$0xff]
        %v489 = vld [vmem:[%s447 + $0xd8] sm:$0xff]
        %v490 = vld [vmem:[%s447 + $0xe0] sm:$0xff]
        %v491 = vld [vmem:[%s447 + $0xe8] sm:$0xff]
        %v492 = vld [vmem:[%s447 + $0xf0] sm:$0xff]
        %v493 = vld [vmem:[%s447 + $0xf8] sm:$0xff]
        %v494 = vld [vmem:[%s453] sm:$0xff]
        %v495 = vld [vmem:[%s453 + $0x8] sm:$0xff]
        %v496 = vld [vmem:[%s453 + $0x10] sm:$0xff]
        %v497 = vld [vmem:[%s453 + $0x18] sm:$0xff]
        %v498 = vld [vmem:[%s453 + $0x20] sm:$0xff]
        %v499 = vld [vmem:[%s453 + $0x28] sm:$0xff]
        %v500 = vld [vmem:[%s453 + $0x30] sm:$0xff]
        %v501 = vld [vmem:[%s453 + $0x38] sm:$0xff]
        %v502 = vld [vmem:[%s453 + $0x40] sm:$0xff]
        %v503 = vld [vmem:[%s453 + $0x48] sm:$0xff]
        %v504 = vld [vmem:[%s453 + $0x50] sm:$0xff]
        %v505 = vld [vmem:[%s453 + $0x58] sm:$0xff]
        %v506 = vld [vmem:[%s453 + $0x60] sm:$0xff]
        %v507 = vld [vmem:[%s453 + $0x68] sm:$0xff]
        %v508 = vld [vmem:[%s453 + $0x70] sm:$0xff]
        %v509 = vld [vmem:[%s453 + $0x78] sm:$0xff]
        %v510 = vld [vmem:[%s453 + $0x80] sm:$0xff]
        %v511 = vld [vmem:[%s453 + $0x88] sm:$0xff]
        %v512 = vld [vmem:[%s453 + $0x90] sm:$0xff]
        %v513 = vld [vmem:[%s453 + $0x98] sm:$0xff]
        %v514 = vld [vmem:[%s453 + $0xa0] sm:$0xff]
        %v515 = vld [vmem:[%s453 + $0xa8] sm:$0xff]
        %v516 = vld [vmem:[%s453 + $0xb0] sm:$0xff]
        %v517 = vld [vmem:[%s453 + $0xb8] sm:$0xff]
        %v518 = vld [vmem:[%s453 + $0xc0] sm:$0xff]
        %v519 = vld [vmem:[%s453 + $0xc8] sm:$0xff]
        %v520 = vld [vmem:[%s453 + $0xd0] sm:$0xff]
        %v521 = vld [vmem:[%s453 + $0xd8] sm:$0xff]
        %v522 = vld [vmem:[%s453 + $0xe0] sm:$0xff]
        %v523 = vld [vmem:[%s453 + $0xe8] sm:$0xff]
        %v524 = vld [vmem:[%s453 + $0xf0] sm:$0xff]
        %v525 = vld [vmem:[%s453 + $0xf8] sm:$0xff]
        %v526 = vmul.f32 %v462, %v494
        %v527 = vmul.f32 %v463, %v495
        %v528 = vmul.f32 %v464, %v496
        %v529 = vmul.f32 %v465, %v497
        %v530 = vmul.f32 %v466, %v498
        %v531 = vmul.f32 %v467, %v499
        %v532 = vmul.f32 %v468, %v500
        %v533 = vmul.f32 %v469, %v501
        %v534 = vmul.f32 %v470, %v502
        %v535 = vmul.f32 %v471, %v503
        %v536 = vmul.f32 %v472, %v504
        %v537 = vmul.f32 %v473, %v505
        %v538 = vmul.f32 %v474, %v506
        %v539 = vmul.f32 %v475, %v507
        %v540 = vmul.f32 %v476, %v508
        %v541 = vmul.f32 %v477, %v509
        %v542 = vmul.f32 %v478, %v510
        %v543 = vmul.f32 %v479, %v511
        %v544 = vmul.f32 %v480, %v512
        %v545 = vmul.f32 %v481, %v513
        %v546 = vmul.f32 %v482, %v514
        %v547 = vmul.f32 %v483, %v515
        %v548 = vmul.f32 %v484, %v516
        %v549 = vmul.f32 %v485, %v517
        %v550 = vmul.f32 %v486, %v518
        %v551 = vmul.f32 %v487, %v519
        %v552 = vmul.f32 %v488, %v520
        %v553 = vmul.f32 %v489, %v521
        %v554 = vmul.f32 %v490, %v522
        %v555 = vmul.f32 %v491, %v523
        %v556 = vmul.f32 %v492, %v524
        %v557 = vmul.f32 %v493, %v525
        %v558 = vld [vmem:[%s460] sm:$0xff]
        %v559 = vld [vmem:[%s460 + $0x8] sm:$0xff]
        %v560 = vld [vmem:[%s460 + $0x10] sm:$0xff]
        %v561 = vld [vmem:[%s460 + $0x18] sm:$0xff]
        %v562 = vld [vmem:[%s460 + $0x20] sm:$0xff]
        %v563 = vld [vmem:[%s460 + $0x28] sm:$0xff]
        %v564 = vld [vmem:[%s460 + $0x30] sm:$0xff]
        %v565 = vld [vmem:[%s460 + $0x38] sm:$0xff]
        %v566 = vld [vmem:[%s460 + $0x40] sm:$0xff]
        %v567 = vld [vmem:[%s460 + $0x48] sm:$0xff]
        %v568 = vld [vmem:[%s460 + $0x50] sm:$0xff]
        %v569 = vld [vmem:[%s460 + $0x58] sm:$0xff]
        %v570 = vld [vmem:[%s460 + $0x60] sm:$0xff]
        %v571 = vld [vmem:[%s460 + $0x68] sm:$0xff]
        %v572 = vld [vmem:[%s460 + $0x70] sm:$0xff]
        %v573 = vld [vmem:[%s460 + $0x78] sm:$0xff]
        %v574 = vld [vmem:[%s460 + $0x80] sm:$0xff]
        %v575 = vld [vmem:[%s460 + $0x88] sm:$0xff]
        %v576 = vld [vmem:[%s460 + $0x90] sm:$0xff]
        %v577 = vld [vmem:[%s460 + $0x98] sm:$0xff]
        %v578 = vld [vmem:[%s460 + $0xa0] sm:$0xff]
        %v579 = vld [vmem:[%s460 + $0xa8] sm:$0xff]
        %v580 = vld [vmem:[%s460 + $0xb0] sm:$0xff]
        %v581 = vld [vmem:[%s460 + $0xb8] sm:$0xff]
        %v582 = vld [vmem:[%s460 + $0xc0] sm:$0xff]
        %v583 = vld [vmem:[%s460 + $0xc8] sm:$0xff]
        %v584 = vld [vmem:[%s460 + $0xd0] sm:$0xff]
        %v585 = vld [vmem:[%s460 + $0xd8] sm:$0xff]
        %v586 = vld [vmem:[%s460 + $0xe0] sm:$0xff]
        %v587 = vld [vmem:[%s460 + $0xe8] sm:$0xff]
        %v588 = vld [vmem:[%s460 + $0xf0] sm:$0xff]
        %v589 = vld [vmem:[%s460 + $0xf8] sm:$0xff]
        %v590 = vld [vmem:[%s460 + $0x100] sm:$0xff]
        %v591 = vld [vmem:[%s460 + $0x108] sm:$0xff]
        %v592 = vld [vmem:[%s460 + $0x110] sm:$0xff]
        %v593 = vld [vmem:[%s460 + $0x118] sm:$0xff]
        %v594 = vld [vmem:[%s460 + $0x120] sm:$0xff]
        %v595 = vld [vmem:[%s460 + $0x128] sm:$0xff]
        %v596 = vld [vmem:[%s460 + $0x130] sm:$0xff]
        %v597 = vld [vmem:[%s460 + $0x138] sm:$0xff]
        %v598 = vld [vmem:[%s460 + $0x140] sm:$0xff]
        %v599 = vld [vmem:[%s460 + $0x148] sm:$0xff]
        %v600 = vld [vmem:[%s460 + $0x150] sm:$0xff]
        %v601 = vld [vmem:[%s460 + $0x158] sm:$0xff]
        %v602 = vld [vmem:[%s460 + $0x160] sm:$0xff]
        %v603 = vld [vmem:[%s460 + $0x168] sm:$0xff]
        %v604 = vld [vmem:[%s460 + $0x170] sm:$0xff]
        %v605 = vld [vmem:[%s460 + $0x178] sm:$0xff]
        %v606 = vld [vmem:[%s460 + $0x180] sm:$0xff]
        %v607 = vld [vmem:[%s460 + $0x188] sm:$0xff]
        %v608 = vld [vmem:[%s460 + $0x190] sm:$0xff]
        %v609 = vld [vmem:[%s460 + $0x198] sm:$0xff]
        %v610 = vld [vmem:[%s460 + $0x1a0] sm:$0xff]
        %v611 = vld [vmem:[%s460 + $0x1a8] sm:$0xff]
        %v612 = vld [vmem:[%s460 + $0x1b0] sm:$0xff]
        %v613 = vld [vmem:[%s460 + $0x1b8] sm:$0xff]
        %v614 = vld [vmem:[%s460 + $0x1c0] sm:$0xff]
        %v615 = vld [vmem:[%s460 + $0x1c8] sm:$0xff]
        %v616 = vld [vmem:[%s460 + $0x1d0] sm:$0xff]
        %v617 = vld [vmem:[%s460 + $0x1d8] sm:$0xff]
        %v618 = vld [vmem:[%s460 + $0x1e0] sm:$0xff]
        %v619 = vld [vmem:[%s460 + $0x1e8] sm:$0xff]
        %v620 = vld [vmem:[%s460 + $0x1f0] sm:$0xff]
        %v621 = vld [vmem:[%s460 + $0x1f8] sm:$0xff]
        %v622 = vld [vmem:[%s3] sm:$0xff]
        %v623 = vld [vmem:[%s3 + $0x8] sm:$0xff]
        %v624 = vld [vmem:[%s3 + $0x10] sm:$0xff]
        %v625 = vld [vmem:[%s3 + $0x18] sm:$0xff]
        %v626 = vld [vmem:[%s3 + $0x20] sm:$0xff]
        %v627 = vld [vmem:[%s3 + $0x28] sm:$0xff]
        %v628 = vld [vmem:[%s3 + $0x30] sm:$0xff]
        %v629 = vld [vmem:[%s3 + $0x38] sm:$0xff]
        %v630 = vld [vmem:[%s3 + $0x40] sm:$0xff]
        %v631 = vld [vmem:[%s3 + $0x48] sm:$0xff]
        %v632 = vld [vmem:[%s3 + $0x50] sm:$0xff]
        %v633 = vld [vmem:[%s3 + $0x58] sm:$0xff]
        %v634 = vld [vmem:[%s3 + $0x60] sm:$0xff]
        %v635 = vld [vmem:[%s3 + $0x68] sm:$0xff]
        %v636 = vld [vmem:[%s3 + $0x70] sm:$0xff]
        %v637 = vld [vmem:[%s3 + $0x78] sm:$0xff]
        %v638 = vld [vmem:[%s3 + $0x80] sm:$0xff]
        %v639 = vld [vmem:[%s3 + $0x88] sm:$0xff]
        %v640 = vld [vmem:[%s3 + $0x90] sm:$0xff]
        %v641 = vld [vmem:[%s3 + $0x98] sm:$0xff]
        %v642 = vld [vmem:[%s3 + $0xa0] sm:$0xff]
        %v643 = vld [vmem:[%s3 + $0xa8] sm:$0xff]
        %v644 = vld [vmem:[%s3 + $0xb0] sm:$0xff]
        %v645 = vld [vmem:[%s3 + $0xb8] sm:$0xff]
        %v646 = vld [vmem:[%s3 + $0xc0] sm:$0xff]
        %v647 = vld [vmem:[%s3 + $0xc8] sm:$0xff]
        %v648 = vld [vmem:[%s3 + $0xd0] sm:$0xff]
        %v649 = vld [vmem:[%s3 + $0xd8] sm:$0xff]
        %v650 = vld [vmem:[%s3 + $0xe0] sm:$0xff]
        %v651 = vld [vmem:[%s3 + $0xe8] sm:$0xff]
        %v652 = vld [vmem:[%s3 + $0xf0] sm:$0xff]
        %v653 = vld [vmem:[%s3 + $0xf8] sm:$0xff]
        %v654 = vld [vmem:[%s4] sm:$0x1]
        %v656 = vlaneseq
        %v657 = vshrl.u32 %v656, 7
        %v658 = vsub.s32 0, %v657
        %v659 = vrot.slane %v654, %v658
        %661 = vmatprep.subr.mxu0 0.0
        %662 = vmatpush1.msra.mxu0 %v637
        %663 = vmatprep.subr.mxu0 0.0
        %664 = vmatpush1.msra.mxu0 %v636
        %665 = vmatprep.subr.mxu0 0.0
        %666 = vmatpush1.msra.mxu0 %v635
        %667 = vmatprep.subr.mxu0 0.0
        %668 = vmatpush1.msra.mxu0 %v634
        %669 = vmatprep.subr.mxu0 0.0
        %670 = vmatpush1.msra.mxu0 %v633
        %671 = vmatprep.subr.mxu0 0.0
        %672 = vmatpush1.msra.mxu0 %v632
        %673 = vmatprep.subr.mxu0 0.0
        %674 = vmatpush1.msra.mxu0 %v631
        %675 = vmatprep.subr.mxu0 0.0
        %676 = vmatpush1.msra.mxu0 %v630
        %677 = vmatprep.subr.mxu0 0.0
        %678 = vmatpush1.msra.mxu0 %v629
        %679 = vmatprep.subr.mxu0 0.0
        %680 = vmatpush1.msra.mxu0 %v628
        %681 = vmatprep.subr.mxu0 0.0
        %682 = vmatpush1.msra.mxu0 %v627
        %683 = vmatprep.subr.mxu0 0.0
        %684 = vmatpush1.msra.mxu0 %v626
        %685 = vmatprep.subr.mxu0 0.0
        %686 = vmatpush1.msra.mxu0 %v625
        %687 = vmatprep.subr.mxu0 0.0
        %688 = vmatpush1.msra.mxu0 %v624
        %689 = vmatprep.subr.mxu0 0.0
        %690 = vmatpush1.msra.mxu0 %v623
        %691 = vmatprep.subr.mxu0 0.0
        %692 = vmatpush1.msra.mxu0 %v622
        %693 = vmatprep.subr.mxu0 0.0
        %694 = vmatpush2.msra.mxu0 %v653
        %695 = vmatprep.subr.mxu0 0.0
        %696 = vmatpush2.msra.mxu0 %v652
        %697 = vmatprep.subr.mxu0 0.0
        %698 = vmatpush2.msra.mxu0 %v651
        %699 = vmatprep.subr.mxu0 0.0
        %700 = vmatpush2.msra.mxu0 %v650
        %701 = vmatprep.subr.mxu0 0.0
        %702 = vmatpush2.msra.mxu0 %v649
        %703 = vmatprep.subr.mxu0 0.0
        %704 = vmatpush2.msra.mxu0 %v648
        %705 = vmatprep.subr.mxu0 0.0
        %706 = vmatpush2.msra.mxu0 %v647
        %707 = vmatprep.subr.mxu0 0.0
        %708 = vmatpush2.msra.mxu0 %v646
        %709 = vmatprep.subr.mxu0 0.0
        %710 = vmatpush2.msra.mxu0 %v645
        %711 = vmatprep.subr.mxu0 0.0
        %712 = vmatpush2.msra.mxu0 %v644
        %713 = vmatprep.subr.mxu0 0.0
        %714 = vmatpush2.msra.mxu0 %v643
        %715 = vmatprep.subr.mxu0 0.0
        %716 = vmatpush2.msra.mxu0 %v642
        %717 = vmatprep.subr.mxu0 0.0
        %718 = vmatpush2.msra.mxu0 %v641
        %719 = vmatprep.subr.mxu0 0.0
        %720 = vmatpush2.msra.mxu0 %v640
        %721 = vmatprep.subr.mxu0 0.0
        %722 = vmatpush2.msra.mxu0 %v639
        %723 = vmatprep.subr.mxu0 0.0
        %724 = vmatpush2.msra.mxu0 %v638
        %725 = vmatprep.mubr.f32.mxu0 %v559
        %726 = vmatmul.mubr.f32.gmra.mxu0 %v558
        %v727 = vpop.f32.mrf.mxu0
        %v728 = vadd.f32 %v659, %v727
        %v729 = vpop.f32.mrf.mxu0
        %730 = vmatprep.mubr.f32.mxu0 %v561
        %731 = vmatmul.mubr.f32.gmra.mxu0 %v560
        %v732 = vpop.f32.mrf.mxu0
        %v733 = vadd.f32 %v659, %v732
        %v734 = vpop.f32.mrf.mxu0
        %735 = vmatprep.mubr.f32.mxu0 %v563
        %736 = vmatmul.mubr.f32.gmra.mxu0 %v562
        %v737 = vpop.f32.mrf.mxu0
        %v738 = vadd.f32 %v659, %v737
        %v739 = vpop.f32.mrf.mxu0
        %740 = vmatprep.mubr.f32.mxu0 %v565
        %741 = vmatmul.mubr.f32.gmra.mxu0 %v564
        %v742 = vpop.f32.mrf.mxu0
        %v743 = vadd.f32 %v659, %v742
        %v744 = vpop.f32.mrf.mxu0
        %745 = vmatprep.mubr.f32.mxu0 %v567
        %746 = vmatmul.mubr.f32.gmra.mxu0 %v566
        %v747 = vpop.f32.mrf.mxu0
        %v748 = vadd.f32 %v659, %v747
        %v749 = vpop.f32.mrf.mxu0
        %750 = vmatprep.mubr.f32.mxu0 %v569
        %751 = vmatmul.mubr.f32.gmra.mxu0 %v568
        %v752 = vpop.f32.mrf.mxu0
        %v753 = vadd.f32 %v659, %v752
        %v754 = vpop.f32.mrf.mxu0
        %755 = vmatprep.mubr.f32.mxu0 %v571
        %756 = vmatmul.mubr.f32.gmra.mxu0 %v570
        %v757 = vpop.f32.mrf.mxu0
        %v758 = vadd.f32 %v659, %v757
        %v759 = vpop.f32.mrf.mxu0
        %760 = vmatprep.mubr.f32.mxu0 %v573
        %761 = vmatmul.mubr.f32.gmra.mxu0 %v572
        %v762 = vpop.f32.mrf.mxu0
        %v763 = vadd.f32 %v659, %v762
        %v764 = vpop.f32.mrf.mxu0
        %765 = vmatprep.mubr.f32.mxu0 %v575
        %766 = vmatmul.mubr.f32.gmra.mxu0 %v574
        %v767 = vpop.f32.mrf.mxu0
        %v768 = vadd.f32 %v659, %v767
        %v769 = vpop.f32.mrf.mxu0
        %770 = vmatprep.mubr.f32.mxu0 %v577
        %771 = vmatmul.mubr.f32.gmra.mxu0 %v576
        %v772 = vpop.f32.mrf.mxu0
        %v773 = vadd.f32 %v659, %v772
        %v774 = vpop.f32.mrf.mxu0
        %775 = vmatprep.mubr.f32.mxu0 %v579
        %776 = vmatmul.mubr.f32.gmra.mxu0 %v578
        %v777 = vpop.f32.mrf.mxu0
        %v778 = vadd.f32 %v659, %v777
        %v779 = vpop.f32.mrf.mxu0
        %780 = vmatprep.mubr.f32.mxu0 %v581
        %781 = vmatmul.mubr.f32.gmra.mxu0 %v580
        %v782 = vpop.f32.mrf.mxu0
        %v783 = vadd.f32 %v659, %v782
        %v784 = vpop.f32.mrf.mxu0
        %785 = vmatprep.mubr.f32.mxu0 %v583
        %786 = vmatmul.mubr.f32.gmra.mxu0 %v582
        %v787 = vpop.f32.mrf.mxu0
        %v788 = vadd.f32 %v659, %v787
        %v789 = vpop.f32.mrf.mxu0
        %790 = vmatprep.mubr.f32.mxu0 %v585
        %791 = vmatmul.mubr.f32.gmra.mxu0 %v584
        %v792 = vpop.f32.mrf.mxu0
        %v793 = vadd.f32 %v659, %v792
        %v794 = vpop.f32.mrf.mxu0
        %795 = vmatprep.mubr.f32.mxu0 %v587
        %796 = vmatmul.mubr.f32.gmra.mxu0 %v586
        %v797 = vpop.f32.mrf.mxu0
        %v798 = vadd.f32 %v659, %v797
        %v799 = vpop.f32.mrf.mxu0
        %800 = vmatprep.mubr.f32.mxu0 %v589
        %801 = vmatmul.mubr.f32.gmra.mxu0 %v588
        %v802 = vpop.f32.mrf.mxu0
        %v803 = vadd.f32 %v659, %v802
        %v804 = vpop.f32.mrf.mxu0
        %805 = vmatprep.mubr.f32.mxu0 %v591
        %806 = vmatmul.mubr.f32.gmra.mxu0 %v590
        %v807 = vpop.f32.mrf.mxu0
        %v808 = vadd.f32 %v659, %v807
        %v809 = vpop.f32.mrf.mxu0
        %810 = vmatprep.mubr.f32.mxu0 %v593
        %811 = vmatmul.mubr.f32.gmra.mxu0 %v592
        %v812 = vpop.f32.mrf.mxu0
        %v813 = vadd.f32 %v659, %v812
        %v814 = vpop.f32.mrf.mxu0
        %815 = vmatprep.mubr.f32.mxu0 %v595
        %816 = vmatmul.mubr.f32.gmra.mxu0 %v594
        %v817 = vpop.f32.mrf.mxu0
        %v818 = vadd.f32 %v659, %v817
        %v819 = vpop.f32.mrf.mxu0
        %820 = vmatprep.mubr.f32.mxu0 %v597
        %821 = vmatmul.mubr.f32.gmra.mxu0 %v596
        %v822 = vpop.f32.mrf.mxu0
        %v823 = vadd.f32 %v659, %v822
        %v824 = vpop.f32.mrf.mxu0
        %825 = vmatprep.mubr.f32.mxu0 %v599
        %826 = vmatmul.mubr.f32.gmra.mxu0 %v598
        %v827 = vpop.f32.mrf.mxu0
        %v828 = vadd.f32 %v659, %v827
        %v829 = vpop.f32.mrf.mxu0
        %830 = vmatprep.mubr.f32.mxu0 %v601
        %831 = vmatmul.mubr.f32.gmra.mxu0 %v600
        %v832 = vpop.f32.mrf.mxu0
        %v833 = vadd.f32 %v659, %v832
        %v834 = vpop.f32.mrf.mxu0
        %835 = vmatprep.mubr.f32.mxu0 %v603
        %836 = vmatmul.mubr.f32.gmra.mxu0 %v602
        %v837 = vpop.f32.mrf.mxu0
        %v838 = vadd.f32 %v659, %v837
        %v839 = vpop.f32.mrf.mxu0
        %840 = vmatprep.mubr.f32.mxu0 %v605
        %841 = vmatmul.mubr.f32.gmra.mxu0 %v604
        %v842 = vpop.f32.mrf.mxu0
        %v843 = vadd.f32 %v659, %v842
        %v844 = vpop.f32.mrf.mxu0
        %845 = vmatprep.mubr.f32.mxu0 %v607
        %846 = vmatmul.mubr.f32.gmra.mxu0 %v606
        %v847 = vpop.f32.mrf.mxu0
        %v848 = vadd.f32 %v659, %v847
        %v849 = vpop.f32.mrf.mxu0
        %850 = vmatprep.mubr.f32.mxu0 %v609
        %851 = vmatmul.mubr.f32.gmra.mxu0 %v608
        %v852 = vpop.f32.mrf.mxu0
        %v853 = vadd.f32 %v659, %v852
        %v854 = vpop.f32.mrf.mxu0
        %855 = vmatprep.mubr.f32.mxu0 %v611
        %856 = vmatmul.mubr.f32.gmra.mxu0 %v610
        %v857 = vpop.f32.mrf.mxu0
        %v858 = vadd.f32 %v659, %v857
        %v859 = vpop.f32.mrf.mxu0
        %860 = vmatprep.mubr.f32.mxu0 %v613
        %861 = vmatmul.mubr.f32.gmra.mxu0 %v612
        %v862 = vpop.f32.mrf.mxu0
        %v863 = vadd.f32 %v659, %v862
        %v864 = vpop.f32.mrf.mxu0
        %865 = vmatprep.mubr.f32.mxu0 %v615
        %866 = vmatmul.mubr.f32.gmra.mxu0 %v614
        %v867 = vpop.f32.mrf.mxu0
        %v868 = vadd.f32 %v659, %v867
        %v869 = vpop.f32.mrf.mxu0
        %870 = vmatprep.mubr.f32.mxu0 %v617
        %871 = vmatmul.mubr.f32.gmra.mxu0 %v616
        %v872 = vpop.f32.mrf.mxu0
        %v873 = vadd.f32 %v659, %v872
        %v874 = vpop.f32.mrf.mxu0
        %875 = vmatprep.mubr.f32.mxu0 %v619
        %876 = vmatmul.mubr.f32.gmra.mxu0 %v618
        %v877 = vpop.f32.mrf.mxu0
        %v878 = vadd.f32 %v659, %v877
        %v879 = vpop.f32.mrf.mxu0
        %880 = vmatprep.mubr.f32.mxu0 %v621
        %881 = vmatmul.mubr.f32.gmra.mxu0 %v620
        %v882 = vpop.f32.mrf.mxu0
        %v883 = vadd.f32 %v659, %v882
        %v884 = vpop.f32.mrf.mxu0
        %885 = vdwg.mxu0
        %v886 = vmax.f32 %v728, 0.0
        %v887 = vmax.f32 %v733, 0.0
        %v888 = vmax.f32 %v738, 0.0
        %v889 = vmax.f32 %v743, 0.0
        %v890 = vmax.f32 %v748, 0.0
        %v891 = vmax.f32 %v753, 0.0
        %v892 = vmax.f32 %v758, 0.0
        %v893 = vmax.f32 %v763, 0.0
        %v894 = vmax.f32 %v768, 0.0
        %v895 = vmax.f32 %v773, 0.0
        %v896 = vmax.f32 %v778, 0.0
        %v897 = vmax.f32 %v783, 0.0
        %v898 = vmax.f32 %v788, 0.0
        %v899 = vmax.f32 %v793, 0.0
        %v900 = vmax.f32 %v798, 0.0
        %v901 = vmax.f32 %v803, 0.0
        %v902 = vmax.f32 %v808, 0.0
        %v903 = vmax.f32 %v813, 0.0
        %v904 = vmax.f32 %v818, 0.0
        %v905 = vmax.f32 %v823, 0.0
        %v906 = vmax.f32 %v828, 0.0
        %v907 = vmax.f32 %v833, 0.0
        %v908 = vmax.f32 %v838, 0.0
        %v909 = vmax.f32 %v843, 0.0
        %v910 = vmax.f32 %v848, 0.0
        %v911 = vmax.f32 %v853, 0.0
        %v912 = vmax.f32 %v858, 0.0
        %v913 = vmax.f32 %v863, 0.0
        %v914 = vmax.f32 %v868, 0.0
        %v915 = vmax.f32 %v873, 0.0
        %v916 = vmax.f32 %v878, 0.0
        %v917 = vmax.f32 %v883, 0.0
        %v918 = vld [vmem:[%s5] sm:$0xff]
        %v919 = vld [vmem:[%s5 + $0x8] sm:$0xff]
        %v920 = vld [vmem:[%s5 + $0x10] sm:$0xff]
        %v921 = vld [vmem:[%s5 + $0x18] sm:$0xff]
        %v922 = vld [vmem:[%s5 + $0x20] sm:$0xff]
        %v923 = vld [vmem:[%s5 + $0x28] sm:$0xff]
        %v924 = vld [vmem:[%s5 + $0x30] sm:$0xff]
        %v925 = vld [vmem:[%s5 + $0x38] sm:$0xff]
        %v926 = vld [vmem:[%s5 + $0x40] sm:$0xff]
        %v927 = vld [vmem:[%s5 + $0x48] sm:$0xff]
        %v928 = vld [vmem:[%s5 + $0x50] sm:$0xff]
        %v929 = vld [vmem:[%s5 + $0x58] sm:$0xff]
        %v930 = vld [vmem:[%s5 + $0x60] sm:$0xff]
        %v931 = vld [vmem:[%s5 + $0x68] sm:$0xff]
        %v932 = vld [vmem:[%s5 + $0x70] sm:$0xff]
        %v933 = vld [vmem:[%s5 + $0x78] sm:$0xff]
        %v934 = vld [vmem:[%s6] sm:$0x1]
        %v936 = vlaneseq
        %v937 = vshrl.u32 %v936, 7
        %v938 = vsub.s32 0, %v937
        %v939 = vrot.slane %v934, %v938
        %941 = vmatprep.subr.mxu0 0.0
        %942 = vmatpush1.msra.mxu0 %v933
        %943 = vmatprep.subr.mxu0 0.0
        %944 = vmatpush1.msra.mxu0 %v932
        %945 = vmatprep.subr.mxu0 0.0
        %946 = vmatpush1.msra.mxu0 %v931
        %947 = vmatprep.subr.mxu0 0.0
        %948 = vmatpush1.msra.mxu0 %v930
        %949 = vmatprep.subr.mxu0 0.0
        %950 = vmatpush1.msra.mxu0 %v929
        %951 = vmatprep.subr.mxu0 0.0
        %952 = vmatpush1.msra.mxu0 %v928
        %953 = vmatprep.subr.mxu0 0.0
        %954 = vmatpush1.msra.mxu0 %v927
        %955 = vmatprep.subr.mxu0 0.0
        %956 = vmatpush1.msra.mxu0 %v926
        %957 = vmatprep.subr.mxu0 0.0
        %958 = vmatpush1.msra.mxu0 %v925
        %959 = vmatprep.subr.mxu0 0.0
        %960 = vmatpush1.msra.mxu0 %v924
        %961 = vmatprep.subr.mxu0 0.0
        %962 = vmatpush1.msra.mxu0 %v923
        %963 = vmatprep.subr.mxu0 0.0
        %964 = vmatpush1.msra.mxu0 %v922
        %965 = vmatprep.subr.mxu0 0.0
        %966 = vmatpush1.msra.mxu0 %v921
        %967 = vmatprep.subr.mxu0 0.0
        %968 = vmatpush1.msra.mxu0 %v920
        %969 = vmatprep.subr.mxu0 0.0
        %970 = vmatpush1.msra.mxu0 %v919
        %971 = vmatprep.subr.mxu0 0.0
        %972 = vmatpush1.msra.mxu0 %v918
        %973 = vmatprep.subr.mxu0 0.0
        %974 = vmatpush2.msra.mxu0 0.0
        %975 = vmatprep.subr.mxu0 0.0
        %976 = vmatpush2.msra.mxu0 0.0
        %977 = vmatprep.subr.mxu0 0.0
        %978 = vmatpush2.msra.mxu0 0.0
        %979 = vmatprep.subr.mxu0 0.0
        %980 = vmatpush2.msra.mxu0 0.0
        %981 = vmatprep.subr.mxu0 0.0
        %982 = vmatpush2.msra.mxu0 0.0
        %983 = vmatprep.subr.mxu0 0.0
        %984 = vmatpush2.msra.mxu0 0.0
        %985 = vmatprep.subr.mxu0 0.0
        %986 = vmatpush2.msra.mxu0 0.0
        %987 = vmatprep.subr.mxu0 0.0
        %988 = vmatpush2.msra.mxu0 0.0
        %989 = vmatprep.subr.mxu0 0.0
        %990 = vmatpush2.msra.mxu0 0.0
        %991 = vmatprep.subr.mxu0 0.0
        %992 = vmatpush2.msra.mxu0 0.0
        %993 = vmatprep.subr.mxu0 0.0
        %994 = vmatpush2.msra.mxu0 0.0
        %995 = vmatprep.subr.mxu0 0.0
        %996 = vmatpush2.msra.mxu0 0.0
        %997 = vmatprep.subr.mxu0 0.0
        %998 = vmatpush2.msra.mxu0 0.0
        %999 = vmatprep.subr.mxu0 0.0
        %1000 = vmatpush2.msra.mxu0 0.0
        %1001 = vmatprep.subr.mxu0 0.0
        %1002 = vmatpush2.msra.mxu0 0.0
        %1003 = vmatprep.subr.mxu0 0.0
        %1004 = vmatpush2.msra.mxu0 0.0
        %1005 = vmatprep.mubr.f32.mxu0 0.0
        %1006 = vmatmul.mubr.f32.gmra.mxu0 %v886
        %v1007 = vpop.f32.mrf.mxu0
        %v1008 = vadd.f32 %v939, %v1007
        %v1009 = vpop.f32.mrf.mxu0
        %1010 = vmatprep.mubr.f32.mxu0 0.0
        %1011 = vmatmul.mubr.f32.gmra.mxu0 %v887
        %v1012 = vpop.f32.mrf.mxu0
        %v1013 = vadd.f32 %v939, %v1012
        %v1014 = vpop.f32.mrf.mxu0
        %1015 = vmatprep.mubr.f32.mxu0 0.0
        %1016 = vmatmul.mubr.f32.gmra.mxu0 %v888
        %v1017 = vpop.f32.mrf.mxu0
        %v1018 = vadd.f32 %v939, %v1017
        %v1019 = vpop.f32.mrf.mxu0
        %1020 = vmatprep.mubr.f32.mxu0 0.0
        %1021 = vmatmul.mubr.f32.gmra.mxu0 %v889
        %v1022 = vpop.f32.mrf.mxu0
        %v1023 = vadd.f32 %v939, %v1022
        %v1024 = vpop.f32.mrf.mxu0
        %1025 = vmatprep.mubr.f32.mxu0 0.0
        %1026 = vmatmul.mubr.f32.gmra.mxu0 %v890
        %v1027 = vpop.f32.mrf.mxu0
        %v1028 = vadd.f32 %v939, %v1027
        %v1029 = vpop.f32.mrf.mxu0
        %1030 = vmatprep.mubr.f32.mxu0 0.0
        %1031 = vmatmul.mubr.f32.gmra.mxu0 %v891
        %v1032 = vpop.f32.mrf.mxu0
        %v1033 = vadd.f32 %v939, %v1032
        %v1034 = vpop.f32.mrf.mxu0
        %1035 = vmatprep.mubr.f32.mxu0 0.0
        %1036 = vmatmul.mubr.f32.gmra.mxu0 %v892
        %v1037 = vpop.f32.mrf.mxu0
        %v1038 = vadd.f32 %v939, %v1037
        %v1039 = vpop.f32.mrf.mxu0
        %1040 = vmatprep.mubr.f32.mxu0 0.0
        %1041 = vmatmul.mubr.f32.gmra.mxu0 %v893
        %v1042 = vpop.f32.mrf.mxu0
        %v1043 = vadd.f32 %v939, %v1042
        %v1044 = vpop.f32.mrf.mxu0
        %1045 = vmatprep.mubr.f32.mxu0 0.0
        %1046 = vmatmul.mubr.f32.gmra.mxu0 %v894
        %v1047 = vpop.f32.mrf.mxu0
        %v1048 = vadd.f32 %v939, %v1047
        %v1049 = vpop.f32.mrf.mxu0
        %1050 = vmatprep.mubr.f32.mxu0 0.0
        %1051 = vmatmul.mubr.f32.gmra.mxu0 %v895
        %v1052 = vpop.f32.mrf.mxu0
        %v1053 = vadd.f32 %v939, %v1052
        %v1054 = vpop.f32.mrf.mxu0
        %1055 = vmatprep.mubr.f32.mxu0 0.0
        %1056 = vmatmul.mubr.f32.gmra.mxu0 %v896
        %v1057 = vpop.f32.mrf.mxu0
        %v1058 = vadd.f32 %v939, %v1057
        %v1059 = vpop.f32.mrf.mxu0
        %1060 = vmatprep.mubr.f32.mxu0 0.0
        %1061 = vmatmul.mubr.f32.gmra.mxu0 %v897
        %v1062 = vpop.f32.mrf.mxu0
        %v1063 = vadd.f32 %v939, %v1062
        %v1064 = vpop.f32.mrf.mxu0
        %1065 = vmatprep.mubr.f32.mxu0 0.0
        %1066 = vmatmul.mubr.f32.gmra.mxu0 %v898
        %v1067 = vpop.f32.mrf.mxu0
        %v1068 = vadd.f32 %v939, %v1067
        %v1069 = vpop.f32.mrf.mxu0
        %1070 = vmatprep.mubr.f32.mxu0 0.0
        %1071 = vmatmul.mubr.f32.gmra.mxu0 %v899
        %v1072 = vpop.f32.mrf.mxu0
        %v1073 = vadd.f32 %v939, %v1072
        %v1074 = vpop.f32.mrf.mxu0
        %1075 = vmatprep.mubr.f32.mxu0 0.0
        %1076 = vmatmul.mubr.f32.gmra.mxu0 %v900
        %v1077 = vpop.f32.mrf.mxu0
        %v1078 = vadd.f32 %v939, %v1077
        %v1079 = vpop.f32.mrf.mxu0
        %1080 = vmatprep.mubr.f32.mxu0 0.0
        %1081 = vmatmul.mubr.f32.gmra.mxu0 %v901
        %v1082 = vpop.f32.mrf.mxu0
        %v1083 = vadd.f32 %v939, %v1082
        %v1084 = vpop.f32.mrf.mxu0
        %1085 = vmatprep.mubr.f32.mxu0 0.0
        %1086 = vmatmul.mubr.f32.gmra.mxu0 %v902
        %v1087 = vpop.f32.mrf.mxu0
        %v1088 = vadd.f32 %v939, %v1087
        %v1089 = vpop.f32.mrf.mxu0
        %1090 = vmatprep.mubr.f32.mxu0 0.0
        %1091 = vmatmul.mubr.f32.gmra.mxu0 %v903
        %v1092 = vpop.f32.mrf.mxu0
        %v1093 = vadd.f32 %v939, %v1092
        %v1094 = vpop.f32.mrf.mxu0
        %1095 = vmatprep.mubr.f32.mxu0 0.0
        %1096 = vmatmul.mubr.f32.gmra.mxu0 %v904
        %v1097 = vpop.f32.mrf.mxu0
        %v1098 = vadd.f32 %v939, %v1097
        %v1099 = vpop.f32.mrf.mxu0
        %1100 = vmatprep.mubr.f32.mxu0 0.0
        %1101 = vmatmul.mubr.f32.gmra.mxu0 %v905
        %v1102 = vpop.f32.mrf.mxu0
        %v1103 = vadd.f32 %v939, %v1102
        %v1104 = vpop.f32.mrf.mxu0
        %1105 = vmatprep.mubr.f32.mxu0 0.0
        %1106 = vmatmul.mubr.f32.gmra.mxu0 %v906
        %v1107 = vpop.f32.mrf.mxu0
        %v1108 = vadd.f32 %v939, %v1107
        %v1109 = vpop.f32.mrf.mxu0
        %1110 = vmatprep.mubr.f32.mxu0 0.0
        %1111 = vmatmul.mubr.f32.gmra.mxu0 %v907
        %v1112 = vpop.f32.mrf.mxu0
        %v1113 = vadd.f32 %v939, %v1112
        %v1114 = vpop.f32.mrf.mxu0
        %1115 = vmatprep.mubr.f32.mxu0 0.0
        %1116 = vmatmul.mubr.f32.gmra.mxu0 %v908
        %v1117 = vpop.f32.mrf.mxu0
        %v1118 = vadd.f32 %v939, %v1117
        %v1119 = vpop.f32.mrf.mxu0
        %1120 = vmatprep.mubr.f32.mxu0 0.0
        %1121 = vmatmul.mubr.f32.gmra.mxu0 %v909
        %v1122 = vpop.f32.mrf.mxu0
        %v1123 = vadd.f32 %v939, %v1122
        %v1124 = vpop.f32.mrf.mxu0
        %1125 = vmatprep.mubr.f32.mxu0 0.0
        %1126 = vmatmul.mubr.f32.gmra.mxu0 %v910
        %v1127 = vpop.f32.mrf.mxu0
        %v1128 = vadd.f32 %v939, %v1127
        %v1129 = vpop.f32.mrf.mxu0
        %1130 = vmatprep.mubr.f32.mxu0 0.0
        %1131 = vmatmul.mubr.f32.gmra.mxu0 %v911
        %v1132 = vpop.f32.mrf.mxu0
        %v1133 = vadd.f32 %v939, %v1132
        %v1134 = vpop.f32.mrf.mxu0
        %1135 = vmatprep.mubr.f32.mxu0 0.0
        %1136 = vmatmul.mubr.f32.gmra.mxu0 %v912
        %v1137 = vpop.f32.mrf.mxu0
        %v1138 = vadd.f32 %v939, %v1137
        %v1139 = vpop.f32.mrf.mxu0
        %1140 = vmatprep.mubr.f32.mxu0 0.0
        %1141 = vmatmul.mubr.f32.gmra.mxu0 %v913
        %v1142 = vpop.f32.mrf.mxu0
        %v1143 = vadd.f32 %v939, %v1142
        %v1144 = vpop.f32.mrf.mxu0
        %1145 = vmatprep.mubr.f32.mxu0 0.0
        %1146 = vmatmul.mubr.f32.gmra.mxu0 %v914
        %v1147 = vpop.f32.mrf.mxu0
        %v1148 = vadd.f32 %v939, %v1147
        %v1149 = vpop.f32.mrf.mxu0
        %1150 = vmatprep.mubr.f32.mxu0 0.0
        %1151 = vmatmul.mubr.f32.gmra.mxu0 %v915
        %v1152 = vpop.f32.mrf.mxu0
        %v1153 = vadd.f32 %v939, %v1152
        %v1154 = vpop.f32.mrf.mxu0
        %1155 = vmatprep.mubr.f32.mxu0 0.0
        %1156 = vmatmul.mubr.f32.gmra.mxu0 %v916
        %v1157 = vpop.f32.mrf.mxu0
        %v1158 = vadd.f32 %v939, %v1157
        %v1159 = vpop.f32.mrf.mxu0
        %1160 = vmatprep.mubr.f32.mxu0 0.0
        %1161 = vmatmul.mubr.f32.gmra.mxu0 %v917
        %v1162 = vpop.f32.mrf.mxu0
        %v1163 = vadd.f32 %v939, %v1162
        %v1164 = vpop.f32.mrf.mxu0
        %1165 = vdwg.mxu0
        %v1166 = vmax.f32 %v1008, 0.0
        %v1167 = vmax.f32 %v1013, 0.0
        %v1168 = vmax.f32 %v1018, 0.0
        %v1169 = vmax.f32 %v1023, 0.0
        %v1170 = vmax.f32 %v1028, 0.0
        %v1171 = vmax.f32 %v1033, 0.0
        %v1172 = vmax.f32 %v1038, 0.0
        %v1173 = vmax.f32 %v1043, 0.0
        %v1174 = vmax.f32 %v1048, 0.0
        %v1175 = vmax.f32 %v1053, 0.0
        %v1176 = vmax.f32 %v1058, 0.0
        %v1177 = vmax.f32 %v1063, 0.0
        %v1178 = vmax.f32 %v1068, 0.0
        %v1179 = vmax.f32 %v1073, 0.0
        %v1180 = vmax.f32 %v1078, 0.0
        %v1181 = vmax.f32 %v1083, 0.0
        %v1182 = vmax.f32 %v1088, 0.0
        %v1183 = vmax.f32 %v1093, 0.0
        %v1184 = vmax.f32 %v1098, 0.0
        %v1185 = vmax.f32 %v1103, 0.0
        %v1186 = vmax.f32 %v1108, 0.0
        %v1187 = vmax.f32 %v1113, 0.0
        %v1188 = vmax.f32 %v1118, 0.0
        %v1189 = vmax.f32 %v1123, 0.0
        %v1190 = vmax.f32 %v1128, 0.0
        %v1191 = vmax.f32 %v1133, 0.0
        %v1192 = vmax.f32 %v1138, 0.0
        %v1193 = vmax.f32 %v1143, 0.0
        %v1194 = vmax.f32 %v1148, 0.0
        %v1195 = vmax.f32 %v1153, 0.0
        %v1196 = vmax.f32 %v1158, 0.0
        %v1197 = vmax.f32 %v1163, 0.0
        %v1198 = vld [vmem:[%s7] sm:$0xff]
        %v1199 = vld [vmem:[%s7 + $0x8] sm:$0xff]
        %v1200 = vld [vmem:[%s7 + $0x10] sm:$0xff]
        %v1201 = vld [vmem:[%s7 + $0x18] sm:$0xff]
        %v1202 = vld [vmem:[%s7 + $0x20] sm:$0xff]
        %v1203 = vld [vmem:[%s7 + $0x28] sm:$0xff]
        %v1204 = vld [vmem:[%s7 + $0x30] sm:$0xff]
        %v1205 = vld [vmem:[%s7 + $0x38] sm:$0xff]
        %v1206 = vld [vmem:[%s8] sm:$0x1]
        %v1208 = vlaneseq
        %v1209 = vshrl.u32 %v1208, 7
        %v1210 = vsub.s32 0, %v1209
        %v1211 = vrot.slane %v1206, %v1210
        %vm1213 = vcmask 523264
        %v1215 = vsel %vm1213, %v1166, 0
        %v1218 = vsel %vm1213, %v1167, 0
        %v1221 = vsel %vm1213, %v1168, 0
        %v1224 = vsel %vm1213, %v1169, 0
        %v1227 = vsel %vm1213, %v1170, 0
        %v1230 = vsel %vm1213, %v1171, 0
        %v1233 = vsel %vm1213, %v1172, 0
        %v1236 = vsel %vm1213, %v1173, 0
        %v1239 = vsel %vm1213, %v1174, 0
        %v1242 = vsel %vm1213, %v1175, 0
        %v1245 = vsel %vm1213, %v1176, 0
        %v1248 = vsel %vm1213, %v1177, 0
        %v1251 = vsel %vm1213, %v1178, 0
        %v1254 = vsel %vm1213, %v1179, 0
        %v1257 = vsel %vm1213, %v1180, 0
        %v1260 = vsel %vm1213, %v1181, 0
        %v1263 = vsel %vm1213, %v1182, 0
        %v1266 = vsel %vm1213, %v1183, 0
        %v1269 = vsel %vm1213, %v1184, 0
        %v1272 = vsel %vm1213, %v1185, 0
        %v1275 = vsel %vm1213, %v1186, 0
        %v1278 = vsel %vm1213, %v1187, 0
        %v1281 = vsel %vm1213, %v1188, 0
        %v1284 = vsel %vm1213, %v1189, 0
        %v1287 = vsel %vm1213, %v1190, 0
        %v1290 = vsel %vm1213, %v1191, 0
        %v1293 = vsel %vm1213, %v1192, 0
        %v1296 = vsel %vm1213, %v1193, 0
        %v1299 = vsel %vm1213, %v1194, 0
        %v1302 = vsel %vm1213, %v1195, 0
        %v1305 = vsel %vm1213, %v1196, 0
        %v1308 = vsel %vm1213, %v1197, 0
        %1310 = vmatprep.subr.mxu0 0.0
        %1311 = vmatpush1.msra.mxu0 0.0
        %1312 = vmatprep.subr.mxu0 0.0
        %1313 = vmatpush1.msra.mxu0 0.0
        %1314 = vmatprep.subr.mxu0 0.0
        %1315 = vmatpush1.msra.mxu0 0.0
        %1316 = vmatprep.subr.mxu0 0.0
        %1317 = vmatpush1.msra.mxu0 0.0
        %1318 = vmatprep.subr.mxu0 0.0
        %1319 = vmatpush1.msra.mxu0 0.0
        %1320 = vmatprep.subr.mxu0 0.0
        %1321 = vmatpush1.msra.mxu0 0.0
        %1322 = vmatprep.subr.mxu0 0.0
        %1323 = vmatpush1.msra.mxu0 0.0
        %1324 = vmatprep.subr.mxu0 0.0
        %1325 = vmatpush1.msra.mxu0 0.0
        %1326 = vmatprep.subr.mxu0 0.0
        %1327 = vmatpush1.msra.mxu0 %v1205
        %1328 = vmatprep.subr.mxu0 0.0
        %1329 = vmatpush1.msra.mxu0 %v1204
        %1330 = vmatprep.subr.mxu0 0.0
        %1331 = vmatpush1.msra.mxu0 %v1203
        %1332 = vmatprep.subr.mxu0 0.0
        %1333 = vmatpush1.msra.mxu0 %v1202
        %1334 = vmatprep.subr.mxu0 0.0
        %1335 = vmatpush1.msra.mxu0 %v1201
        %1336 = vmatprep.subr.mxu0 0.0
        %1337 = vmatpush1.msra.mxu0 %v1200
        %1338 = vmatprep.subr.mxu0 0.0
        %1339 = vmatpush1.msra.mxu0 %v1199
        %1340 = vmatprep.subr.mxu0 0.0
        %1341 = vmatpush1.msra.mxu0 %v1198
        %1342 = vmatprep.subr.mxu0 0.0
        %1343 = vmatpush2.msra.mxu0 0.0
        %1344 = vmatprep.subr.mxu0 0.0
        %1345 = vmatpush2.msra.mxu0 0.0
        %1346 = vmatprep.subr.mxu0 0.0
        %1347 = vmatpush2.msra.mxu0 0.0
        %1348 = vmatprep.subr.mxu0 0.0
        %1349 = vmatpush2.msra.mxu0 0.0
        %1350 = vmatprep.subr.mxu0 0.0
        %1351 = vmatpush2.msra.mxu0 0.0
        %1352 = vmatprep.subr.mxu0 0.0
        %1353 = vmatpush2.msra.mxu0 0.0
        %1354 = vmatprep.subr.mxu0 0.0
        %1355 = vmatpush2.msra.mxu0 0.0
        %1356 = vmatprep.subr.mxu0 0.0
        %1357 = vmatpush2.msra.mxu0 0.0
        %1358 = vmatprep.subr.mxu0 0.0
        %1359 = vmatpush2.msra.mxu0 0.0
        %1360 = vmatprep.subr.mxu0 0.0
        %1361 = vmatpush2.msra.mxu0 0.0
        %1362 = vmatprep.subr.mxu0 0.0
        %1363 = vmatpush2.msra.mxu0 0.0
        %1364 = vmatprep.subr.mxu0 0.0
        %1365 = vmatpush2.msra.mxu0 0.0
        %1366 = vmatprep.subr.mxu0 0.0
        %1367 = vmatpush2.msra.mxu0 0.0
        %1368 = vmatprep.subr.mxu0 0.0
        %1369 = vmatpush2.msra.mxu0 0.0
        %1370 = vmatprep.subr.mxu0 0.0
        %1371 = vmatpush2.msra.mxu0 0.0
        %1372 = vmatprep.subr.mxu0 0.0
        %1373 = vmatpush2.msra.mxu0 0.0
        %1374 = vmatprep.mubr.f32.mxu0 0.0
        %1375 = vmatmul.mubr.f32.gmra.mxu0 %v1215
        %v1376 = vpop.f32.mrf.mxu0
        %v1377 = vadd.f32 %v1211, %v1376
        %v1378 = vpop.f32.mrf.mxu0
        %1379 = vmatprep.mubr.f32.mxu0 0.0
        %1380 = vmatmul.mubr.f32.gmra.mxu0 %v1218
        %v1381 = vpop.f32.mrf.mxu0
        %v1382 = vadd.f32 %v1211, %v1381
        %v1383 = vpop.f32.mrf.mxu0
        %1384 = vmatprep.mubr.f32.mxu0 0.0
        %1385 = vmatmul.mubr.f32.gmra.mxu0 %v1221
        %v1386 = vpop.f32.mrf.mxu0
        %v1387 = vadd.f32 %v1211, %v1386
        %v1388 = vpop.f32.mrf.mxu0
        %1389 = vmatprep.mubr.f32.mxu0 0.0
        %1390 = vmatmul.mubr.f32.gmra.mxu0 %v1224
        %v1391 = vpop.f32.mrf.mxu0
        %v1392 = vadd.f32 %v1211, %v1391
        %v1393 = vpop.f32.mrf.mxu0
        %1394 = vmatprep.mubr.f32.mxu0 0.0
        %1395 = vmatmul.mubr.f32.gmra.mxu0 %v1227
        %v1396 = vpop.f32.mrf.mxu0
        %v1397 = vadd.f32 %v1211, %v1396
        %v1398 = vpop.f32.mrf.mxu0
        %1399 = vmatprep.mubr.f32.mxu0 0.0
        %1400 = vmatmul.mubr.f32.gmra.mxu0 %v1230
        %v1401 = vpop.f32.mrf.mxu0
        %v1402 = vadd.f32 %v1211, %v1401
        %v1403 = vpop.f32.mrf.mxu0
        %1404 = vmatprep.mubr.f32.mxu0 0.0
        %1405 = vmatmul.mubr.f32.gmra.mxu0 %v1233
        %v1406 = vpop.f32.mrf.mxu0
        %v1407 = vadd.f32 %v1211, %v1406
        %v1408 = vpop.f32.mrf.mxu0
        %1409 = vmatprep.mubr.f32.mxu0 0.0
        %1410 = vmatmul.mubr.f32.gmra.mxu0 %v1236
        %v1411 = vpop.f32.mrf.mxu0
        %v1412 = vadd.f32 %v1211, %v1411
        %v1413 = vpop.f32.mrf.mxu0
        %1414 = vmatprep.mubr.f32.mxu0 0.0
        %1415 = vmatmul.mubr.f32.gmra.mxu0 %v1239
        %v1416 = vpop.f32.mrf.mxu0
        %v1417 = vadd.f32 %v1211, %v1416
        %v1418 = vpop.f32.mrf.mxu0
        %1419 = vmatprep.mubr.f32.mxu0 0.0
        %1420 = vmatmul.mubr.f32.gmra.mxu0 %v1242
        %v1421 = vpop.f32.mrf.mxu0
        %v1422 = vadd.f32 %v1211, %v1421
        %v1423 = vpop.f32.mrf.mxu0
        %1424 = vmatprep.mubr.f32.mxu0 0.0
        %1425 = vmatmul.mubr.f32.gmra.mxu0 %v1245
        %v1426 = vpop.f32.mrf.mxu0
        %v1427 = vadd.f32 %v1211, %v1426
        %v1428 = vpop.f32.mrf.mxu0
        %1429 = vmatprep.mubr.f32.mxu0 0.0
        %1430 = vmatmul.mubr.f32.gmra.mxu0 %v1248
        %v1431 = vpop.f32.mrf.mxu0
        %v1432 = vadd.f32 %v1211, %v1431
        %v1433 = vpop.f32.mrf.mxu0
        %1434 = vmatprep.mubr.f32.mxu0 0.0
        %1435 = vmatmul.mubr.f32.gmra.mxu0 %v1251
        %v1436 = vpop.f32.mrf.mxu0
        %v1437 = vadd.f32 %v1211, %v1436
        %v1438 = vpop.f32.mrf.mxu0
        %1439 = vmatprep.mubr.f32.mxu0 0.0
        %1440 = vmatmul.mubr.f32.gmra.mxu0 %v1254
        %v1441 = vpop.f32.mrf.mxu0
        %v1442 = vadd.f32 %v1211, %v1441
        %v1443 = vpop.f32.mrf.mxu0
        %1444 = vmatprep.mubr.f32.mxu0 0.0
        %1445 = vmatmul.mubr.f32.gmra.mxu0 %v1257
        %v1446 = vpop.f32.mrf.mxu0
        %v1447 = vadd.f32 %v1211, %v1446
        %v1448 = vpop.f32.mrf.mxu0
        %1449 = vmatprep.mubr.f32.mxu0 0.0
        %1450 = vmatmul.mubr.f32.gmra.mxu0 %v1260
        %v1451 = vpop.f32.mrf.mxu0
        %v1452 = vadd.f32 %v1211, %v1451
        %v1453 = vpop.f32.mrf.mxu0
        %1454 = vmatprep.mubr.f32.mxu0 0.0
        %1455 = vmatmul.mubr.f32.gmra.mxu0 %v1263
        %v1456 = vpop.f32.mrf.mxu0
        %v1457 = vadd.f32 %v1211, %v1456
        %v1458 = vpop.f32.mrf.mxu0
        %1459 = vmatprep.mubr.f32.mxu0 0.0
        %1460 = vmatmul.mubr.f32.gmra.mxu0 %v1266
        %v1461 = vpop.f32.mrf.mxu0
        %v1462 = vadd.f32 %v1211, %v1461
        %v1463 = vpop.f32.mrf.mxu0
        %1464 = vmatprep.mubr.f32.mxu0 0.0
        %1465 = vmatmul.mubr.f32.gmra.mxu0 %v1269
        %v1466 = vpop.f32.mrf.mxu0
        %v1467 = vadd.f32 %v1211, %v1466
        %v1468 = vpop.f32.mrf.mxu0
        %1469 = vmatprep.mubr.f32.mxu0 0.0
        %1470 = vmatmul.mubr.f32.gmra.mxu0 %v1272
        %v1471 = vpop.f32.mrf.mxu0
        %v1472 = vadd.f32 %v1211, %v1471
        %v1473 = vpop.f32.mrf.mxu0
        %1474 = vmatprep.mubr.f32.mxu0 0.0
        %1475 = vmatmul.mubr.f32.gmra.mxu0 %v1275
        %v1476 = vpop.f32.mrf.mxu0
        %v1477 = vadd.f32 %v1211, %v1476
        %v1478 = vpop.f32.mrf.mxu0
        %1479 = vmatprep.mubr.f32.mxu0 0.0
        %1480 = vmatmul.mubr.f32.gmra.mxu0 %v1278
        %v1481 = vpop.f32.mrf.mxu0
        %v1482 = vadd.f32 %v1211, %v1481
        %v1483 = vpop.f32.mrf.mxu0
        %1484 = vmatprep.mubr.f32.mxu0 0.0
        %1485 = vmatmul.mubr.f32.gmra.mxu0 %v1281
        %v1486 = vpop.f32.mrf.mxu0
        %v1487 = vadd.f32 %v1211, %v1486
        %v1488 = vpop.f32.mrf.mxu0
        %1489 = vmatprep.mubr.f32.mxu0 0.0
        %1490 = vmatmul.mubr.f32.gmra.mxu0 %v1284
        %v1491 = vpop.f32.mrf.mxu0
        %v1492 = vadd.f32 %v1211, %v1491
        %v1493 = vpop.f32.mrf.mxu0
        %1494 = vmatprep.mubr.f32.mxu0 0.0
        %1495 = vmatmul.mubr.f32.gmra.mxu0 %v1287
        %v1496 = vpop.f32.mrf.mxu0
        %v1497 = vadd.f32 %v1211, %v1496
        %v1498 = vpop.f32.mrf.mxu0
        %1499 = vmatprep.mubr.f32.mxu0 0.0
        %1500 = vmatmul.mubr.f32.gmra.mxu0 %v1290
        %v1501 = vpop.f32.mrf.mxu0
        %v1502 = vadd.f32 %v1211, %v1501
        %v1503 = vpop.f32.mrf.mxu0
        %1504 = vmatprep.mubr.f32.mxu0 0.0
        %1505 = vmatmul.mubr.f32.gmra.mxu0 %v1293
        %v1506 = vpop.f32.mrf.mxu0
        %v1507 = vadd.f32 %v1211, %v1506
        %v1508 = vpop.f32.mrf.mxu0
        %1509 = vmatprep.mubr.f32.mxu0 0.0
        %1510 = vmatmul.mubr.f32.gmra.mxu0 %v1296
        %v1511 = vpop.f32.mrf.mxu0
        %v1512 = vadd.f32 %v1211, %v1511
        %v1513 = vpop.f32.mrf.mxu0
        %1514 = vmatprep.mubr.f32.mxu0 0.0
        %1515 = vmatmul.mubr.f32.gmra.mxu0 %v1299
        %v1516 = vpop.f32.mrf.mxu0
        %v1517 = vadd.f32 %v1211, %v1516
        %v1518 = vpop.f32.mrf.mxu0
        %1519 = vmatprep.mubr.f32.mxu0 0.0
        %1520 = vmatmul.mubr.f32.gmra.mxu0 %v1302
        %v1521 = vpop.f32.mrf.mxu0
        %v1522 = vadd.f32 %v1211, %v1521
        %v1523 = vpop.f32.mrf.mxu0
        %1524 = vmatprep.mubr.f32.mxu0 0.0
        %1525 = vmatmul.mubr.f32.gmra.mxu0 %v1305
        %v1526 = vpop.f32.mrf.mxu0
        %v1527 = vadd.f32 %v1211, %v1526
        %v1528 = vpop.f32.mrf.mxu0
        %1529 = vmatprep.mubr.f32.mxu0 0.0
        %1530 = vmatmul.mubr.f32.gmra.mxu0 %v1308
        %v1531 = vpop.f32.mrf.mxu0
        %v1532 = vadd.f32 %v1211, %v1531
        %v1533 = vpop.f32.mrf.mxu0
        %1534 = vdwg.mxu0
        %v1535 = vmax.f32 %v1377, 0.0
        %v1536 = vmax.f32 %v1382, 0.0
        %v1537 = vmax.f32 %v1387, 0.0
        %v1538 = vmax.f32 %v1392, 0.0
        %v1539 = vmax.f32 %v1397, 0.0
        %v1540 = vmax.f32 %v1402, 0.0
        %v1541 = vmax.f32 %v1407, 0.0
        %v1542 = vmax.f32 %v1412, 0.0
        %v1543 = vmax.f32 %v1417, 0.0
        %v1544 = vmax.f32 %v1422, 0.0
        %v1545 = vmax.f32 %v1427, 0.0
        %v1546 = vmax.f32 %v1432, 0.0
        %v1547 = vmax.f32 %v1437, 0.0
        %v1548 = vmax.f32 %v1442, 0.0
        %v1549 = vmax.f32 %v1447, 0.0
        %v1550 = vmax.f32 %v1452, 0.0
        %v1551 = vmax.f32 %v1457, 0.0
        %v1552 = vmax.f32 %v1462, 0.0
        %v1553 = vmax.f32 %v1467, 0.0
        %v1554 = vmax.f32 %v1472, 0.0
        %v1555 = vmax.f32 %v1477, 0.0
        %v1556 = vmax.f32 %v1482, 0.0
        %v1557 = vmax.f32 %v1487, 0.0
        %v1558 = vmax.f32 %v1492, 0.0
        %v1559 = vmax.f32 %v1497, 0.0
        %v1560 = vmax.f32 %v1502, 0.0
        %v1561 = vmax.f32 %v1507, 0.0
        %v1562 = vmax.f32 %v1512, 0.0
        %v1563 = vmax.f32 %v1517, 0.0
        %v1564 = vmax.f32 %v1522, 0.0
        %v1565 = vmax.f32 %v1527, 0.0
        %v1566 = vmax.f32 %v1532, 0.0
        %v1567 = vld [vmem:[%s9] sm:$0x1]
        %v1569 = vlaneseq
        %v1570 = vshrl.u32 %v1569, 7
        %v1571 = vsub.s32 0, %v1570
        %v1572 = vrot.slane %v1567, %v1571
        %v1574 = vmul.f32 %v526, %v1572
        %v1575 = vmul.f32 %v527, %v1572
        %v1576 = vmul.f32 %v528, %v1572
        %v1577 = vmul.f32 %v529, %v1572
        %v1578 = vmul.f32 %v530, %v1572
        %v1579 = vmul.f32 %v531, %v1572
        %v1580 = vmul.f32 %v532, %v1572
        %v1581 = vmul.f32 %v533, %v1572
        %v1582 = vmul.f32 %v534, %v1572
        %v1583 = vmul.f32 %v535, %v1572
        %v1584 = vmul.f32 %v536, %v1572
        %v1585 = vmul.f32 %v537, %v1572
        %v1586 = vmul.f32 %v538, %v1572
        %v1587 = vmul.f32 %v539, %v1572
        %v1588 = vmul.f32 %v540, %v1572
        %v1589 = vmul.f32 %v541, %v1572
        %v1590 = vmul.f32 %v542, %v1572
        %v1591 = vmul.f32 %v543, %v1572
        %v1592 = vmul.f32 %v544, %v1572
        %v1593 = vmul.f32 %v545, %v1572
        %v1594 = vmul.f32 %v546, %v1572
        %v1595 = vmul.f32 %v547, %v1572
        %v1596 = vmul.f32 %v548, %v1572
        %v1597 = vmul.f32 %v549, %v1572
        %v1598 = vmul.f32 %v550, %v1572
        %v1599 = vmul.f32 %v551, %v1572
        %v1600 = vmul.f32 %v552, %v1572
        %v1601 = vmul.f32 %v553, %v1572
        %v1602 = vmul.f32 %v554, %v1572
        %v1603 = vmul.f32 %v555, %v1572
        %v1604 = vmul.f32 %v556, %v1572
        %v1605 = vmul.f32 %v557, %v1572
        %v1606 = vld [vmem:[%s10] sm:$0x1]
        %v1608 = vlaneseq
        %v1609 = vshrl.u32 %v1608, 7
        %v1610 = vsub.s32 0, %v1609
        %v1611 = vrot.slane %v1606, %v1610
        %v1613 = vmul.f32 %v1535, %v1611
        %v1614 = vmul.f32 %v1536, %v1611
        %v1615 = vmul.f32 %v1537, %v1611
        %v1616 = vmul.f32 %v1538, %v1611
        %v1617 = vmul.f32 %v1539, %v1611
        %v1618 = vmul.f32 %v1540, %v1611
        %v1619 = vmul.f32 %v1541, %v1611
        %v1620 = vmul.f32 %v1542, %v1611
        %v1621 = vmul.f32 %v1543, %v1611
        %v1622 = vmul.f32 %v1544, %v1611
        %v1623 = vmul.f32 %v1545, %v1611
        %v1624 = vmul.f32 %v1546, %v1611
        %v1625 = vmul.f32 %v1547, %v1611
        %v1626 = vmul.f32 %v1548, %v1611
        %v1627 = vmul.f32 %v1549, %v1611
        %v1628 = vmul.f32 %v1550, %v1611
        %v1629 = vmul.f32 %v1551, %v1611
        %v1630 = vmul.f32 %v1552, %v1611
        %v1631 = vmul.f32 %v1553, %v1611
        %v1632 = vmul.f32 %v1554, %v1611
        %v1633 = vmul.f32 %v1555, %v1611
        %v1634 = vmul.f32 %v1556, %v1611
        %v1635 = vmul.f32 %v1557, %v1611
        %v1636 = vmul.f32 %v1558, %v1611
        %v1637 = vmul.f32 %v1559, %v1611
        %v1638 = vmul.f32 %v1560, %v1611
        %v1639 = vmul.f32 %v1561, %v1611
        %v1640 = vmul.f32 %v1562, %v1611
        %v1641 = vmul.f32 %v1563, %v1611
        %v1642 = vmul.f32 %v1564, %v1611
        %v1643 = vmul.f32 %v1565, %v1611
        %v1644 = vmul.f32 %v1566, %v1611
        %v1645 = vadd.f32 %v1574, %v1613
        %v1646 = vadd.f32 %v1575, %v1614
        %v1647 = vadd.f32 %v1576, %v1615
        %v1648 = vadd.f32 %v1577, %v1616
        %v1649 = vadd.f32 %v1578, %v1617
        %v1650 = vadd.f32 %v1579, %v1618
        %v1651 = vadd.f32 %v1580, %v1619
        %v1652 = vadd.f32 %v1581, %v1620
        %v1653 = vadd.f32 %v1582, %v1621
        %v1654 = vadd.f32 %v1583, %v1622
        %v1655 = vadd.f32 %v1584, %v1623
        %v1656 = vadd.f32 %v1585, %v1624
        %v1657 = vadd.f32 %v1586, %v1625
        %v1658 = vadd.f32 %v1587, %v1626
        %v1659 = vadd.f32 %v1588, %v1627
        %v1660 = vadd.f32 %v1589, %v1628
        %v1661 = vadd.f32 %v1590, %v1629
        %v1662 = vadd.f32 %v1591, %v1630
        %v1663 = vadd.f32 %v1592, %v1631
        %v1664 = vadd.f32 %v1593, %v1632
        %v1665 = vadd.f32 %v1594, %v1633
        %v1666 = vadd.f32 %v1595, %v1634
        %v1667 = vadd.f32 %v1596, %v1635
        %v1668 = vadd.f32 %v1597, %v1636
        %v1669 = vadd.f32 %v1598, %v1637
        %v1670 = vadd.f32 %v1599, %v1638
        %v1671 = vadd.f32 %v1600, %v1639
        %v1672 = vadd.f32 %v1601, %v1640
        %v1673 = vadd.f32 %v1602, %v1641
        %v1674 = vadd.f32 %v1603, %v1642
        %v1675 = vadd.f32 %v1604, %v1643
        %v1676 = vadd.f32 %v1605, %v1644
        %vm1677 = vcmask 261120
        %v1678 = vsel %vm1677, %v1645, 0.0
        %1679 = vadd.xlane.f32.xlu0 %v1678
        %v1680 = vpop.xlane.xlu0 %1679
        %v1681 = vsel %vm1677, %v1646, 0.0
        %1682 = vadd.xlane.f32.xlu0 %v1681
        %v1683 = vpop.xlane.xlu0 %1682
        %v1684 = vsel %vm1677, %v1647, 0.0
        %1685 = vadd.xlane.f32.xlu0 %v1684
        %v1686 = vpop.xlane.xlu0 %1685
        %v1687 = vsel %vm1677, %v1648, 0.0
        %1688 = vadd.xlane.f32.xlu0 %v1687
        %v1689 = vpop.xlane.xlu0 %1688
        %v1690 = vsel %vm1677, %v1649, 0.0
        %1691 = vadd.xlane.f32.xlu0 %v1690
        %v1692 = vpop.xlane.xlu0 %1691
        %v1693 = vsel %vm1677, %v1650, 0.0
        %1694 = vadd.xlane.f32.xlu0 %v1693
        %v1695 = vpop.xlane.xlu0 %1694
        %v1696 = vsel %vm1677, %v1651, 0.0
        %1697 = vadd.xlane.f32.xlu0 %v1696
        %v1698 = vpop.xlane.xlu0 %1697
        %v1699 = vsel %vm1677, %v1652, 0.0
        %1700 = vadd.xlane.f32.xlu0 %v1699
        %v1701 = vpop.xlane.xlu0 %1700
        %v1702 = vsel %vm1677, %v1653, 0.0
        %1703 = vadd.xlane.f32.xlu0 %v1702
        %v1704 = vpop.xlane.xlu0 %1703
        %v1705 = vsel %vm1677, %v1654, 0.0
        %1706 = vadd.xlane.f32.xlu0 %v1705
        %v1707 = vpop.xlane.xlu0 %1706
        %v1708 = vsel %vm1677, %v1655, 0.0
        %1709 = vadd.xlane.f32.xlu0 %v1708
        %v1710 = vpop.xlane.xlu0 %1709
        %v1711 = vsel %vm1677, %v1656, 0.0
        %1712 = vadd.xlane.f32.xlu0 %v1711
        %v1713 = vpop.xlane.xlu0 %1712
        %v1714 = vsel %vm1677, %v1657, 0.0
        %1715 = vadd.xlane.f32.xlu0 %v1714
        %v1716 = vpop.xlane.xlu0 %1715
        %v1717 = vsel %vm1677, %v1658, 0.0
        %1718 = vadd.xlane.f32.xlu0 %v1717
        %v1719 = vpop.xlane.xlu0 %1718
        %v1720 = vsel %vm1677, %v1659, 0.0
        %1721 = vadd.xlane.f32.xlu0 %v1720
        %v1722 = vpop.xlane.xlu0 %1721
        %v1723 = vsel %vm1677, %v1660, 0.0
        %1724 = vadd.xlane.f32.xlu0 %v1723
        %v1725 = vpop.xlane.xlu0 %1724
        %v1726 = vsel %vm1677, %v1661, 0.0
        %1727 = vadd.xlane.f32.xlu0 %v1726
        %v1728 = vpop.xlane.xlu0 %1727
        %v1729 = vsel %vm1677, %v1662, 0.0
        %1730 = vadd.xlane.f32.xlu0 %v1729
        %v1731 = vpop.xlane.xlu0 %1730
        %v1732 = vsel %vm1677, %v1663, 0.0
        %1733 = vadd.xlane.f32.xlu0 %v1732
        %v1734 = vpop.xlane.xlu0 %1733
        %v1735 = vsel %vm1677, %v1664, 0.0
        %1736 = vadd.xlane.f32.xlu0 %v1735
        %v1737 = vpop.xlane.xlu0 %1736
        %v1738 = vsel %vm1677, %v1665, 0.0
        %1739 = vadd.xlane.f32.xlu0 %v1738
        %v1740 = vpop.xlane.xlu0 %1739
        %v1741 = vsel %vm1677, %v1666, 0.0
        %1742 = vadd.xlane.f32.xlu0 %v1741
        %v1743 = vpop.xlane.xlu0 %1742
        %v1744 = vsel %vm1677, %v1667, 0.0
        %1745 = vadd.xlane.f32.xlu0 %v1744
        %v1746 = vpop.xlane.xlu0 %1745
        %v1747 = vsel %vm1677, %v1668, 0.0
        %1748 = vadd.xlane.f32.xlu0 %v1747
        %v1749 = vpop.xlane.xlu0 %1748
        %v1750 = vsel %vm1677, %v1669, 0.0
        %1751 = vadd.xlane.f32.xlu0 %v1750
        %v1752 = vpop.xlane.xlu0 %1751
        %v1753 = vsel %vm1677, %v1670, 0.0
        %1754 = vadd.xlane.f32.xlu0 %v1753
        %v1755 = vpop.xlane.xlu0 %1754
        %v1756 = vsel %vm1677, %v1671, 0.0
        %1757 = vadd.xlane.f32.xlu0 %v1756
        %v1758 = vpop.xlane.xlu0 %1757
        %v1759 = vsel %vm1677, %v1672, 0.0
        %1760 = vadd.xlane.f32.xlu0 %v1759
        %v1761 = vpop.xlane.xlu0 %1760
        %v1762 = vsel %vm1677, %v1673, 0.0
        %1763 = vadd.xlane.f32.xlu0 %v1762
        %v1764 = vpop.xlane.xlu0 %1763
        %v1765 = vsel %vm1677, %v1674, 0.0
        %1766 = vadd.xlane.f32.xlu0 %v1765
        %v1767 = vpop.xlane.xlu0 %1766
        %v1768 = vsel %vm1677, %v1675, 0.0
        %1769 = vadd.xlane.f32.xlu0 %v1768
        %v1770 = vpop.xlane.xlu0 %1769
        %v1771 = vsel %vm1677, %v1676, 0.0
        %1772 = vadd.xlane.f32.xlu0 %v1771
        %v1773 = vpop.xlane.xlu0 %1772
        %s1774 = sld [smem:[#allocation2]]
        %v1775 = vstv %s1774
        %v1776 = vadd.f32 %v1680, %v1775
        %v1777 = vadd.f32 %v1683, %v1775
        %v1778 = vadd.f32 %v1686, %v1775
        %v1779 = vadd.f32 %v1689, %v1775
        %v1780 = vadd.f32 %v1692, %v1775
        %v1781 = vadd.f32 %v1695, %v1775
        %v1782 = vadd.f32 %v1698, %v1775
        %v1783 = vadd.f32 %v1701, %v1775
        %v1784 = vadd.f32 %v1704, %v1775
        %v1785 = vadd.f32 %v1707, %v1775
        %v1786 = vadd.f32 %v1710, %v1775
        %v1787 = vadd.f32 %v1713, %v1775
        %v1788 = vadd.f32 %v1716, %v1775
        %v1789 = vadd.f32 %v1719, %v1775
        %v1790 = vadd.f32 %v1722, %v1775
        %v1791 = vadd.f32 %v1725, %v1775
        %v1792 = vadd.f32 %v1728, %v1775
        %v1793 = vadd.f32 %v1731, %v1775
        %v1794 = vadd.f32 %v1734, %v1775
        %v1795 = vadd.f32 %v1737, %v1775
        %v1796 = vadd.f32 %v1740, %v1775
        %v1797 = vadd.f32 %v1743, %v1775
        %v1798 = vadd.f32 %v1746, %v1775
        %v1799 = vadd.f32 %v1749, %v1775
        %v1800 = vadd.f32 %v1752, %v1775
        %v1801 = vadd.f32 %v1755, %v1775
        %v1802 = vadd.f32 %v1758, %v1775
        %v1803 = vadd.f32 %v1761, %v1775
        %v1804 = vadd.f32 %v1764, %v1775
        %v1805 = vadd.f32 %v1767, %v1775
        %v1806 = vadd.f32 %v1770, %v1775
        %v1807 = vadd.f32 %v1773, %v1775
        %v1840 = vlaneseq
        %v1841 = vshrl.u32 %v1840, 7
        %v1842 = vsub.s32 0, %v1841
        %v1843 = vrot.slane %v1776, %v1842
        %v1844 = vlaneseq
        %v1845 = vshrl.u32 %v1844, 7
        %v1846 = vsub.s32 1, %v1845
        %v1847 = vrot.slane %v1776, %v1846
        %v1848 = vlaneseq
        %v1849 = vshrl.u32 %v1848, 7
        %v1850 = vsub.s32 2, %v1849
        %v1851 = vrot.slane %v1776, %v1850
        %v1852 = vlaneseq
        %v1853 = vshrl.u32 %v1852, 7
        %v1854 = vsub.s32 3, %v1853
        %v1855 = vrot.slane %v1776, %v1854
        %v1856 = vlaneseq
        %v1857 = vshrl.u32 %v1856, 7
        %v1858 = vsub.s32 4, %v1857
        %v1859 = vrot.slane %v1776, %v1858
        %v1860 = vlaneseq
        %v1861 = vshrl.u32 %v1860, 7
        %v1862 = vsub.s32 5, %v1861
        %v1863 = vrot.slane %v1776, %v1862
        %v1864 = vlaneseq
        %v1865 = vshrl.u32 %v1864, 7
        %v1866 = vsub.s32 6, %v1865
        %v1867 = vrot.slane %v1776, %v1866
        %v1868 = vlaneseq
        %v1869 = vshrl.u32 %v1868, 7
        %v1870 = vsub.s32 7, %v1869
        %v1871 = vrot.slane %v1776, %v1870
        %v1872 = vlaneseq
        %v1873 = vshrl.u32 %v1872, 7
        %v1874 = vsub.s32 0, %v1873
        %v1875 = vrot.slane %v1777, %v1874
        %v1876 = vlaneseq
        %v1877 = vshrl.u32 %v1876, 7
        %v1878 = vsub.s32 1, %v1877
        %v1879 = vrot.slane %v1777, %v1878
        %v1880 = vlaneseq
        %v1881 = vshrl.u32 %v1880, 7
        %v1882 = vsub.s32 2, %v1881
        %v1883 = vrot.slane %v1777, %v1882
        %v1884 = vlaneseq
        %v1885 = vshrl.u32 %v1884, 7
        %v1886 = vsub.s32 3, %v1885
        %v1887 = vrot.slane %v1777, %v1886
        %v1888 = vlaneseq
        %v1889 = vshrl.u32 %v1888, 7
        %v1890 = vsub.s32 4, %v1889
        %v1891 = vrot.slane %v1777, %v1890
        %v1892 = vlaneseq
        %v1893 = vshrl.u32 %v1892, 7
        %v1894 = vsub.s32 5, %v1893
        %v1895 = vrot.slane %v1777, %v1894
        %v1896 = vlaneseq
        %v1897 = vshrl.u32 %v1896, 7
        %v1898 = vsub.s32 6, %v1897
        %v1899 = vrot.slane %v1777, %v1898
        %v1900 = vlaneseq
        %v1901 = vshrl.u32 %v1900, 7
        %v1902 = vsub.s32 7, %v1901
        %v1903 = vrot.slane %v1777, %v1902
        %v1904 = vlaneseq
        %v1905 = vshrl.u32 %v1904, 7
        %v1906 = vsub.s32 0, %v1905
        %v1907 = vrot.slane %v1778, %v1906
        %v1908 = vlaneseq
        %v1909 = vshrl.u32 %v1908, 7
        %v1910 = vsub.s32 1, %v1909
        %v1911 = vrot.slane %v1778, %v1910
        %v1912 = vlaneseq
        %v1913 = vshrl.u32 %v1912, 7
        %v1914 = vsub.s32 2, %v1913
        %v1915 = vrot.slane %v1778, %v1914
        %v1916 = vlaneseq
        %v1917 = vshrl.u32 %v1916, 7
        %v1918 = vsub.s32 3, %v1917
        %v1919 = vrot.slane %v1778, %v1918
        %v1920 = vlaneseq
        %v1921 = vshrl.u32 %v1920, 7
        %v1922 = vsub.s32 4, %v1921
        %v1923 = vrot.slane %v1778, %v1922
        %v1924 = vlaneseq
        %v1925 = vshrl.u32 %v1924, 7
        %v1926 = vsub.s32 5, %v1925
        %v1927 = vrot.slane %v1778, %v1926
        %v1928 = vlaneseq
        %v1929 = vshrl.u32 %v1928, 7
        %v1930 = vsub.s32 6, %v1929
        %v1931 = vrot.slane %v1778, %v1930
        %v1932 = vlaneseq
        %v1933 = vshrl.u32 %v1932, 7
        %v1934 = vsub.s32 7, %v1933
        %v1935 = vrot.slane %v1778, %v1934
        %v1936 = vlaneseq
        %v1937 = vshrl.u32 %v1936, 7
        %v1938 = vsub.s32 0, %v1937
        %v1939 = vrot.slane %v1779, %v1938
        %v1940 = vlaneseq
        %v1941 = vshrl.u32 %v1940, 7
        %v1942 = vsub.s32 1, %v1941
        %v1943 = vrot.slane %v1779, %v1942
        %v1944 = vlaneseq
        %v1945 = vshrl.u32 %v1944, 7
        %v1946 = vsub.s32 2, %v1945
        %v1947 = vrot.slane %v1779, %v1946
        %v1948 = vlaneseq
        %v1949 = vshrl.u32 %v1948, 7
        %v1950 = vsub.s32 3, %v1949
        %v1951 = vrot.slane %v1779, %v1950
        %v1952 = vlaneseq
        %v1953 = vshrl.u32 %v1952, 7
        %v1954 = vsub.s32 4, %v1953
        %v1955 = vrot.slane %v1779, %v1954
        %v1956 = vlaneseq
        %v1957 = vshrl.u32 %v1956, 7
        %v1958 = vsub.s32 5, %v1957
        %v1959 = vrot.slane %v1779, %v1958
        %v1960 = vlaneseq
        %v1961 = vshrl.u32 %v1960, 7
        %v1962 = vsub.s32 6, %v1961
        %v1963 = vrot.slane %v1779, %v1962
        %v1964 = vlaneseq
        %v1965 = vshrl.u32 %v1964, 7
        %v1966 = vsub.s32 7, %v1965
        %v1967 = vrot.slane %v1779, %v1966
        %v1968 = vlaneseq
        %v1969 = vshrl.u32 %v1968, 7
        %v1970 = vsub.s32 0, %v1969
        %v1971 = vrot.slane %v1780, %v1970
        %v1972 = vlaneseq
        %v1973 = vshrl.u32 %v1972, 7
        %v1974 = vsub.s32 1, %v1973
        %v1975 = vrot.slane %v1780, %v1974
        %v1976 = vlaneseq
        %v1977 = vshrl.u32 %v1976, 7
        %v1978 = vsub.s32 2, %v1977
        %v1979 = vrot.slane %v1780, %v1978
        %v1980 = vlaneseq
        %v1981 = vshrl.u32 %v1980, 7
        %v1982 = vsub.s32 3, %v1981
        %v1983 = vrot.slane %v1780, %v1982
        %v1984 = vlaneseq
        %v1985 = vshrl.u32 %v1984, 7
        %v1986 = vsub.s32 4, %v1985
        %v1987 = vrot.slane %v1780, %v1986
        %v1988 = vlaneseq
        %v1989 = vshrl.u32 %v1988, 7
        %v1990 = vsub.s32 5, %v1989
        %v1991 = vrot.slane %v1780, %v1990
        %v1992 = vlaneseq
        %v1993 = vshrl.u32 %v1992, 7
        %v1994 = vsub.s32 6, %v1993
        %v1995 = vrot.slane %v1780, %v1994
        %v1996 = vlaneseq
        %v1997 = vshrl.u32 %v1996, 7
        %v1998 = vsub.s32 7, %v1997
        %v1999 = vrot.slane %v1780, %v1998
        %v2000 = vlaneseq
        %v2001 = vshrl.u32 %v2000, 7
        %v2002 = vsub.s32 0, %v2001
        %v2003 = vrot.slane %v1781, %v2002
        %v2004 = vlaneseq
        %v2005 = vshrl.u32 %v2004, 7
        %v2006 = vsub.s32 1, %v2005
        %v2007 = vrot.slane %v1781, %v2006
        %v2008 = vlaneseq
        %v2009 = vshrl.u32 %v2008, 7
        %v2010 = vsub.s32 2, %v2009
        %v2011 = vrot.slane %v1781, %v2010
        %v2012 = vlaneseq
        %v2013 = vshrl.u32 %v2012, 7
        %v2014 = vsub.s32 3, %v2013
        %v2015 = vrot.slane %v1781, %v2014
        %v2016 = vlaneseq
        %v2017 = vshrl.u32 %v2016, 7
        %v2018 = vsub.s32 4, %v2017
        %v2019 = vrot.slane %v1781, %v2018
        %v2020 = vlaneseq
        %v2021 = vshrl.u32 %v2020, 7
        %v2022 = vsub.s32 5, %v2021
        %v2023 = vrot.slane %v1781, %v2022
        %v2024 = vlaneseq
        %v2025 = vshrl.u32 %v2024, 7
        %v2026 = vsub.s32 6, %v2025
        %v2027 = vrot.slane %v1781, %v2026
        %v2028 = vlaneseq
        %v2029 = vshrl.u32 %v2028, 7
        %v2030 = vsub.s32 7, %v2029
        %v2031 = vrot.slane %v1781, %v2030
        %v2032 = vlaneseq
        %v2033 = vshrl.u32 %v2032, 7
        %v2034 = vsub.s32 0, %v2033
        %v2035 = vrot.slane %v1782, %v2034
        %v2036 = vlaneseq
        %v2037 = vshrl.u32 %v2036, 7
        %v2038 = vsub.s32 1, %v2037
        %v2039 = vrot.slane %v1782, %v2038
        %v2040 = vlaneseq
        %v2041 = vshrl.u32 %v2040, 7
        %v2042 = vsub.s32 2, %v2041
        %v2043 = vrot.slane %v1782, %v2042
        %v2044 = vlaneseq
        %v2045 = vshrl.u32 %v2044, 7
        %v2046 = vsub.s32 3, %v2045
        %v2047 = vrot.slane %v1782, %v2046
        %v2048 = vlaneseq
        %v2049 = vshrl.u32 %v2048, 7
        %v2050 = vsub.s32 4, %v2049
        %v2051 = vrot.slane %v1782, %v2050
        %v2052 = vlaneseq
        %v2053 = vshrl.u32 %v2052, 7
        %v2054 = vsub.s32 5, %v2053
        %v2055 = vrot.slane %v1782, %v2054
        %v2056 = vlaneseq
        %v2057 = vshrl.u32 %v2056, 7
        %v2058 = vsub.s32 6, %v2057
        %v2059 = vrot.slane %v1782, %v2058
        %v2060 = vlaneseq
        %v2061 = vshrl.u32 %v2060, 7
        %v2062 = vsub.s32 7, %v2061
        %v2063 = vrot.slane %v1782, %v2062
        %v2064 = vlaneseq
        %v2065 = vshrl.u32 %v2064, 7
        %v2066 = vsub.s32 0, %v2065
        %v2067 = vrot.slane %v1783, %v2066
        %v2068 = vlaneseq
        %v2069 = vshrl.u32 %v2068, 7
        %v2070 = vsub.s32 1, %v2069
        %v2071 = vrot.slane %v1783, %v2070
        %v2072 = vlaneseq
        %v2073 = vshrl.u32 %v2072, 7
        %v2074 = vsub.s32 2, %v2073
        %v2075 = vrot.slane %v1783, %v2074
        %v2076 = vlaneseq
        %v2077 = vshrl.u32 %v2076, 7
        %v2078 = vsub.s32 3, %v2077
        %v2079 = vrot.slane %v1783, %v2078
        %v2080 = vlaneseq
        %v2081 = vshrl.u32 %v2080, 7
        %v2082 = vsub.s32 4, %v2081
        %v2083 = vrot.slane %v1783, %v2082
        %v2084 = vlaneseq
        %v2085 = vshrl.u32 %v2084, 7
        %v2086 = vsub.s32 5, %v2085
        %v2087 = vrot.slane %v1783, %v2086
        %v2088 = vlaneseq
        %v2089 = vshrl.u32 %v2088, 7
        %v2090 = vsub.s32 6, %v2089
        %v2091 = vrot.slane %v1783, %v2090
        %v2092 = vlaneseq
        %v2093 = vshrl.u32 %v2092, 7
        %v2094 = vsub.s32 7, %v2093
        %v2095 = vrot.slane %v1783, %v2094
        %v2096 = vlaneseq
        %v2097 = vshrl.u32 %v2096, 7
        %v2098 = vsub.s32 0, %v2097
        %v2099 = vrot.slane %v1784, %v2098
        %v2100 = vlaneseq
        %v2101 = vshrl.u32 %v2100, 7
        %v2102 = vsub.s32 1, %v2101
        %v2103 = vrot.slane %v1784, %v2102
        %v2104 = vlaneseq
        %v2105 = vshrl.u32 %v2104, 7
        %v2106 = vsub.s32 2, %v2105
        %v2107 = vrot.slane %v1784, %v2106
        %v2108 = vlaneseq
        %v2109 = vshrl.u32 %v2108, 7
        %v2110 = vsub.s32 3, %v2109
        %v2111 = vrot.slane %v1784, %v2110
        %v2112 = vlaneseq
        %v2113 = vshrl.u32 %v2112, 7
        %v2114 = vsub.s32 4, %v2113
        %v2115 = vrot.slane %v1784, %v2114
        %v2116 = vlaneseq
        %v2117 = vshrl.u32 %v2116, 7
        %v2118 = vsub.s32 5, %v2117
        %v2119 = vrot.slane %v1784, %v2118
        %v2120 = vlaneseq
        %v2121 = vshrl.u32 %v2120, 7
        %v2122 = vsub.s32 6, %v2121
        %v2123 = vrot.slane %v1784, %v2122
        %v2124 = vlaneseq
        %v2125 = vshrl.u32 %v2124, 7
        %v2126 = vsub.s32 7, %v2125
        %v2127 = vrot.slane %v1784, %v2126
        %v2128 = vlaneseq
        %v2129 = vshrl.u32 %v2128, 7
        %v2130 = vsub.s32 0, %v2129
        %v2131 = vrot.slane %v1785, %v2130
        %v2132 = vlaneseq
        %v2133 = vshrl.u32 %v2132, 7
        %v2134 = vsub.s32 1, %v2133
        %v2135 = vrot.slane %v1785, %v2134
        %v2136 = vlaneseq
        %v2137 = vshrl.u32 %v2136, 7
        %v2138 = vsub.s32 2, %v2137
        %v2139 = vrot.slane %v1785, %v2138
        %v2140 = vlaneseq
        %v2141 = vshrl.u32 %v2140, 7
        %v2142 = vsub.s32 3, %v2141
        %v2143 = vrot.slane %v1785, %v2142
        %v2144 = vlaneseq
        %v2145 = vshrl.u32 %v2144, 7
        %v2146 = vsub.s32 4, %v2145
        %v2147 = vrot.slane %v1785, %v2146
        %v2148 = vlaneseq
        %v2149 = vshrl.u32 %v2148, 7
        %v2150 = vsub.s32 5, %v2149
        %v2151 = vrot.slane %v1785, %v2150
        %v2152 = vlaneseq
        %v2153 = vshrl.u32 %v2152, 7
        %v2154 = vsub.s32 6, %v2153
        %v2155 = vrot.slane %v1785, %v2154
        %v2156 = vlaneseq
        %v2157 = vshrl.u32 %v2156, 7
        %v2158 = vsub.s32 7, %v2157
        %v2159 = vrot.slane %v1785, %v2158
        %v2160 = vlaneseq
        %v2161 = vshrl.u32 %v2160, 7
        %v2162 = vsub.s32 0, %v2161
        %v2163 = vrot.slane %v1786, %v2162
        %v2164 = vlaneseq
        %v2165 = vshrl.u32 %v2164, 7
        %v2166 = vsub.s32 1, %v2165
        %v2167 = vrot.slane %v1786, %v2166
        %v2168 = vlaneseq
        %v2169 = vshrl.u32 %v2168, 7
        %v2170 = vsub.s32 2, %v2169
        %v2171 = vrot.slane %v1786, %v2170
        %v2172 = vlaneseq
        %v2173 = vshrl.u32 %v2172, 7
        %v2174 = vsub.s32 3, %v2173
        %v2175 = vrot.slane %v1786, %v2174
        %v2176 = vlaneseq
        %v2177 = vshrl.u32 %v2176, 7
        %v2178 = vsub.s32 4, %v2177
        %v2179 = vrot.slane %v1786, %v2178
        %v2180 = vlaneseq
        %v2181 = vshrl.u32 %v2180, 7
        %v2182 = vsub.s32 5, %v2181
        %v2183 = vrot.slane %v1786, %v2182
        %v2184 = vlaneseq
        %v2185 = vshrl.u32 %v2184, 7
        %v2186 = vsub.s32 6, %v2185
        %v2187 = vrot.slane %v1786, %v2186
        %v2188 = vlaneseq
        %v2189 = vshrl.u32 %v2188, 7
        %v2190 = vsub.s32 7, %v2189
        %v2191 = vrot.slane %v1786, %v2190
        %v2192 = vlaneseq
        %v2193 = vshrl.u32 %v2192, 7
        %v2194 = vsub.s32 0, %v2193
        %v2195 = vrot.slane %v1787, %v2194
        %v2196 = vlaneseq
        %v2197 = vshrl.u32 %v2196, 7
        %v2198 = vsub.s32 1, %v2197
        %v2199 = vrot.slane %v1787, %v2198
        %v2200 = vlaneseq
        %v2201 = vshrl.u32 %v2200, 7
        %v2202 = vsub.s32 2, %v2201
        %v2203 = vrot.slane %v1787, %v2202
        %v2204 = vlaneseq
        %v2205 = vshrl.u32 %v2204, 7
        %v2206 = vsub.s32 3, %v2205
        %v2207 = vrot.slane %v1787, %v2206
        %v2208 = vlaneseq
        %v2209 = vshrl.u32 %v2208, 7
        %v2210 = vsub.s32 4, %v2209
        %v2211 = vrot.slane %v1787, %v2210
        %v2212 = vlaneseq
        %v2213 = vshrl.u32 %v2212, 7
        %v2214 = vsub.s32 5, %v2213
        %v2215 = vrot.slane %v1787, %v2214
        %v2216 = vlaneseq
        %v2217 = vshrl.u32 %v2216, 7
        %v2218 = vsub.s32 6, %v2217
        %v2219 = vrot.slane %v1787, %v2218
        %v2220 = vlaneseq
        %v2221 = vshrl.u32 %v2220, 7
        %v2222 = vsub.s32 7, %v2221
        %v2223 = vrot.slane %v1787, %v2222
        %v2224 = vlaneseq
        %v2225 = vshrl.u32 %v2224, 7
        %v2226 = vsub.s32 0, %v2225
        %v2227 = vrot.slane %v1788, %v2226
        %v2228 = vlaneseq
        %v2229 = vshrl.u32 %v2228, 7
        %v2230 = vsub.s32 1, %v2229
        %v2231 = vrot.slane %v1788, %v2230
        %v2232 = vlaneseq
        %v2233 = vshrl.u32 %v2232, 7
        %v2234 = vsub.s32 2, %v2233
        %v2235 = vrot.slane %v1788, %v2234
        %v2236 = vlaneseq
        %v2237 = vshrl.u32 %v2236, 7
        %v2238 = vsub.s32 3, %v2237
        %v2239 = vrot.slane %v1788, %v2238
        %v2240 = vlaneseq
        %v2241 = vshrl.u32 %v2240, 7
        %v2242 = vsub.s32 4, %v2241
        %v2243 = vrot.slane %v1788, %v2242
        %v2244 = vlaneseq
        %v2245 = vshrl.u32 %v2244, 7
        %v2246 = vsub.s32 5, %v2245
        %v2247 = vrot.slane %v1788, %v2246
        %v2248 = vlaneseq
        %v2249 = vshrl.u32 %v2248, 7
        %v2250 = vsub.s32 6, %v2249
        %v2251 = vrot.slane %v1788, %v2250
        %v2252 = vlaneseq
        %v2253 = vshrl.u32 %v2252, 7
        %v2254 = vsub.s32 7, %v2253
        %v2255 = vrot.slane %v1788, %v2254
        %v2256 = vlaneseq
        %v2257 = vshrl.u32 %v2256, 7
        %v2258 = vsub.s32 0, %v2257
        %v2259 = vrot.slane %v1789, %v2258
        %v2260 = vlaneseq
        %v2261 = vshrl.u32 %v2260, 7
        %v2262 = vsub.s32 1, %v2261
        %v2263 = vrot.slane %v1789, %v2262
        %v2264 = vlaneseq
        %v2265 = vshrl.u32 %v2264, 7
        %v2266 = vsub.s32 2, %v2265
        %v2267 = vrot.slane %v1789, %v2266
        %v2268 = vlaneseq
        %v2269 = vshrl.u32 %v2268, 7
        %v2270 = vsub.s32 3, %v2269
        %v2271 = vrot.slane %v1789, %v2270
        %v2272 = vlaneseq
        %v2273 = vshrl.u32 %v2272, 7
        %v2274 = vsub.s32 4, %v2273
        %v2275 = vrot.slane %v1789, %v2274
        %v2276 = vlaneseq
        %v2277 = vshrl.u32 %v2276, 7
        %v2278 = vsub.s32 5, %v2277
        %v2279 = vrot.slane %v1789, %v2278
        %v2280 = vlaneseq
        %v2281 = vshrl.u32 %v2280, 7
        %v2282 = vsub.s32 6, %v2281
        %v2283 = vrot.slane %v1789, %v2282
        %v2284 = vlaneseq
        %v2285 = vshrl.u32 %v2284, 7
        %v2286 = vsub.s32 7, %v2285
        %v2287 = vrot.slane %v1789, %v2286
        %v2288 = vlaneseq
        %v2289 = vshrl.u32 %v2288, 7
        %v2290 = vsub.s32 0, %v2289
        %v2291 = vrot.slane %v1790, %v2290
        %v2292 = vlaneseq
        %v2293 = vshrl.u32 %v2292, 7
        %v2294 = vsub.s32 1, %v2293
        %v2295 = vrot.slane %v1790, %v2294
        %v2296 = vlaneseq
        %v2297 = vshrl.u32 %v2296, 7
        %v2298 = vsub.s32 2, %v2297
        %v2299 = vrot.slane %v1790, %v2298
        %v2300 = vlaneseq
        %v2301 = vshrl.u32 %v2300, 7
        %v2302 = vsub.s32 3, %v2301
        %v2303 = vrot.slane %v1790, %v2302
        %v2304 = vlaneseq
        %v2305 = vshrl.u32 %v2304, 7
        %v2306 = vsub.s32 4, %v2305
        %v2307 = vrot.slane %v1790, %v2306
        %v2308 = vlaneseq
        %v2309 = vshrl.u32 %v2308, 7
        %v2310 = vsub.s32 5, %v2309
        %v2311 = vrot.slane %v1790, %v2310
        %v2312 = vlaneseq
        %v2313 = vshrl.u32 %v2312, 7
        %v2314 = vsub.s32 6, %v2313
        %v2315 = vrot.slane %v1790, %v2314
        %v2316 = vlaneseq
        %v2317 = vshrl.u32 %v2316, 7
        %v2318 = vsub.s32 7, %v2317
        %v2319 = vrot.slane %v1790, %v2318
        %v2320 = vlaneseq
        %v2321 = vshrl.u32 %v2320, 7
        %v2322 = vsub.s32 0, %v2321
        %v2323 = vrot.slane %v1791, %v2322
        %v2324 = vlaneseq
        %v2325 = vshrl.u32 %v2324, 7
        %v2326 = vsub.s32 1, %v2325
        %v2327 = vrot.slane %v1791, %v2326
        %v2328 = vlaneseq
        %v2329 = vshrl.u32 %v2328, 7
        %v2330 = vsub.s32 2, %v2329
        %v2331 = vrot.slane %v1791, %v2330
        %v2332 = vlaneseq
        %v2333 = vshrl.u32 %v2332, 7
        %v2334 = vsub.s32 3, %v2333
        %v2335 = vrot.slane %v1791, %v2334
        %v2336 = vlaneseq
        %v2337 = vshrl.u32 %v2336, 7
        %v2338 = vsub.s32 4, %v2337
        %v2339 = vrot.slane %v1791, %v2338
        %v2340 = vlaneseq
        %v2341 = vshrl.u32 %v2340, 7
        %v2342 = vsub.s32 5, %v2341
        %v2343 = vrot.slane %v1791, %v2342
        %v2344 = vlaneseq
        %v2345 = vshrl.u32 %v2344, 7
        %v2346 = vsub.s32 6, %v2345
        %v2347 = vrot.slane %v1791, %v2346
        %v2348 = vlaneseq
        %v2349 = vshrl.u32 %v2348, 7
        %v2350 = vsub.s32 7, %v2349
        %v2351 = vrot.slane %v1791, %v2350
        %v2352 = vlaneseq
        %v2353 = vshrl.u32 %v2352, 7
        %v2354 = vsub.s32 0, %v2353
        %v2355 = vrot.slane %v1792, %v2354
        %v2356 = vlaneseq
        %v2357 = vshrl.u32 %v2356, 7
        %v2358 = vsub.s32 1, %v2357
        %v2359 = vrot.slane %v1792, %v2358
        %v2360 = vlaneseq
        %v2361 = vshrl.u32 %v2360, 7
        %v2362 = vsub.s32 2, %v2361
        %v2363 = vrot.slane %v1792, %v2362
        %v2364 = vlaneseq
        %v2365 = vshrl.u32 %v2364, 7
        %v2366 = vsub.s32 3, %v2365
        %v2367 = vrot.slane %v1792, %v2366
        %v2368 = vlaneseq
        %v2369 = vshrl.u32 %v2368, 7
        %v2370 = vsub.s32 4, %v2369
        %v2371 = vrot.slane %v1792, %v2370
        %v2372 = vlaneseq
        %v2373 = vshrl.u32 %v2372, 7
        %v2374 = vsub.s32 5, %v2373
        %v2375 = vrot.slane %v1792, %v2374
        %v2376 = vlaneseq
        %v2377 = vshrl.u32 %v2376, 7
        %v2378 = vsub.s32 6, %v2377
        %v2379 = vrot.slane %v1792, %v2378
        %v2380 = vlaneseq
        %v2381 = vshrl.u32 %v2380, 7
        %v2382 = vsub.s32 7, %v2381
        %v2383 = vrot.slane %v1792, %v2382
        %v2384 = vlaneseq
        %v2385 = vshrl.u32 %v2384, 7
        %v2386 = vsub.s32 0, %v2385
        %v2387 = vrot.slane %v1793, %v2386
        %v2388 = vlaneseq
        %v2389 = vshrl.u32 %v2388, 7
        %v2390 = vsub.s32 1, %v2389
        %v2391 = vrot.slane %v1793, %v2390
        %v2392 = vlaneseq
        %v2393 = vshrl.u32 %v2392, 7
        %v2394 = vsub.s32 2, %v2393
        %v2395 = vrot.slane %v1793, %v2394
        %v2396 = vlaneseq
        %v2397 = vshrl.u32 %v2396, 7
        %v2398 = vsub.s32 3, %v2397
        %v2399 = vrot.slane %v1793, %v2398
        %v2400 = vlaneseq
        %v2401 = vshrl.u32 %v2400, 7
        %v2402 = vsub.s32 4, %v2401
        %v2403 = vrot.slane %v1793, %v2402
        %v2404 = vlaneseq
        %v2405 = vshrl.u32 %v2404, 7
        %v2406 = vsub.s32 5, %v2405
        %v2407 = vrot.slane %v1793, %v2406
        %v2408 = vlaneseq
        %v2409 = vshrl.u32 %v2408, 7
        %v2410 = vsub.s32 6, %v2409
        %v2411 = vrot.slane %v1793, %v2410
        %v2412 = vlaneseq
        %v2413 = vshrl.u32 %v2412, 7
        %v2414 = vsub.s32 7, %v2413
        %v2415 = vrot.slane %v1793, %v2414
        %v2416 = vlaneseq
        %v2417 = vshrl.u32 %v2416, 7
        %v2418 = vsub.s32 0, %v2417
        %v2419 = vrot.slane %v1794, %v2418
        %v2420 = vlaneseq
        %v2421 = vshrl.u32 %v2420, 7
        %v2422 = vsub.s32 1, %v2421
        %v2423 = vrot.slane %v1794, %v2422
        %v2424 = vlaneseq
        %v2425 = vshrl.u32 %v2424, 7
        %v2426 = vsub.s32 2, %v2425
        %v2427 = vrot.slane %v1794, %v2426
        %v2428 = vlaneseq
        %v2429 = vshrl.u32 %v2428, 7
        %v2430 = vsub.s32 3, %v2429
        %v2431 = vrot.slane %v1794, %v2430
        %v2432 = vlaneseq
        %v2433 = vshrl.u32 %v2432, 7
        %v2434 = vsub.s32 4, %v2433
        %v2435 = vrot.slane %v1794, %v2434
        %v2436 = vlaneseq
        %v2437 = vshrl.u32 %v2436, 7
        %v2438 = vsub.s32 5, %v2437
        %v2439 = vrot.slane %v1794, %v2438
        %v2440 = vlaneseq
        %v2441 = vshrl.u32 %v2440, 7
        %v2442 = vsub.s32 6, %v2441
        %v2443 = vrot.slane %v1794, %v2442
        %v2444 = vlaneseq
        %v2445 = vshrl.u32 %v2444, 7
        %v2446 = vsub.s32 7, %v2445
        %v2447 = vrot.slane %v1794, %v2446
        %v2448 = vlaneseq
        %v2449 = vshrl.u32 %v2448, 7
        %v2450 = vsub.s32 0, %v2449
        %v2451 = vrot.slane %v1795, %v2450
        %v2452 = vlaneseq
        %v2453 = vshrl.u32 %v2452, 7
        %v2454 = vsub.s32 1, %v2453
        %v2455 = vrot.slane %v1795, %v2454
        %v2456 = vlaneseq
        %v2457 = vshrl.u32 %v2456, 7
        %v2458 = vsub.s32 2, %v2457
        %v2459 = vrot.slane %v1795, %v2458
        %v2460 = vlaneseq
        %v2461 = vshrl.u32 %v2460, 7
        %v2462 = vsub.s32 3, %v2461
        %v2463 = vrot.slane %v1795, %v2462
        %v2464 = vlaneseq
        %v2465 = vshrl.u32 %v2464, 7
        %v2466 = vsub.s32 4, %v2465
        %v2467 = vrot.slane %v1795, %v2466
        %v2468 = vlaneseq
        %v2469 = vshrl.u32 %v2468, 7
        %v2470 = vsub.s32 5, %v2469
        %v2471 = vrot.slane %v1795, %v2470
        %v2472 = vlaneseq
        %v2473 = vshrl.u32 %v2472, 7
        %v2474 = vsub.s32 6, %v2473
        %v2475 = vrot.slane %v1795, %v2474
        %v2476 = vlaneseq
        %v2477 = vshrl.u32 %v2476, 7
        %v2478 = vsub.s32 7, %v2477
        %v2479 = vrot.slane %v1795, %v2478
        %v2480 = vlaneseq
        %v2481 = vshrl.u32 %v2480, 7
        %v2482 = vsub.s32 0, %v2481
        %v2483 = vrot.slane %v1796, %v2482
        %v2484 = vlaneseq
        %v2485 = vshrl.u32 %v2484, 7
        %v2486 = vsub.s32 1, %v2485
        %v2487 = vrot.slane %v1796, %v2486
        %v2488 = vlaneseq
        %v2489 = vshrl.u32 %v2488, 7
        %v2490 = vsub.s32 2, %v2489
        %v2491 = vrot.slane %v1796, %v2490
        %v2492 = vlaneseq
        %v2493 = vshrl.u32 %v2492, 7
        %v2494 = vsub.s32 3, %v2493
        %v2495 = vrot.slane %v1796, %v2494
        %v2496 = vlaneseq
        %v2497 = vshrl.u32 %v2496, 7
        %v2498 = vsub.s32 4, %v2497
        %v2499 = vrot.slane %v1796, %v2498
        %v2500 = vlaneseq
        %v2501 = vshrl.u32 %v2500, 7
        %v2502 = vsub.s32 5, %v2501
        %v2503 = vrot.slane %v1796, %v2502
        %v2504 = vlaneseq
        %v2505 = vshrl.u32 %v2504, 7
        %v2506 = vsub.s32 6, %v2505
        %v2507 = vrot.slane %v1796, %v2506
        %v2508 = vlaneseq
        %v2509 = vshrl.u32 %v2508, 7
        %v2510 = vsub.s32 7, %v2509
        %v2511 = vrot.slane %v1796, %v2510
        %v2512 = vlaneseq
        %v2513 = vshrl.u32 %v2512, 7
        %v2514 = vsub.s32 0, %v2513
        %v2515 = vrot.slane %v1797, %v2514
        %v2516 = vlaneseq
        %v2517 = vshrl.u32 %v2516, 7
        %v2518 = vsub.s32 1, %v2517
        %v2519 = vrot.slane %v1797, %v2518
        %v2520 = vlaneseq
        %v2521 = vshrl.u32 %v2520, 7
        %v2522 = vsub.s32 2, %v2521
        %v2523 = vrot.slane %v1797, %v2522
        %v2524 = vlaneseq
        %v2525 = vshrl.u32 %v2524, 7
        %v2526 = vsub.s32 3, %v2525
        %v2527 = vrot.slane %v1797, %v2526
        %v2528 = vlaneseq
        %v2529 = vshrl.u32 %v2528, 7
        %v2530 = vsub.s32 4, %v2529
        %v2531 = vrot.slane %v1797, %v2530
        %v2532 = vlaneseq
        %v2533 = vshrl.u32 %v2532, 7
        %v2534 = vsub.s32 5, %v2533
        %v2535 = vrot.slane %v1797, %v2534
        %v2536 = vlaneseq
        %v2537 = vshrl.u32 %v2536, 7
        %v2538 = vsub.s32 6, %v2537
        %v2539 = vrot.slane %v1797, %v2538
        %v2540 = vlaneseq
        %v2541 = vshrl.u32 %v2540, 7
        %v2542 = vsub.s32 7, %v2541
        %v2543 = vrot.slane %v1797, %v2542
        %v2544 = vlaneseq
        %v2545 = vshrl.u32 %v2544, 7
        %v2546 = vsub.s32 0, %v2545
        %v2547 = vrot.slane %v1798, %v2546
        %v2548 = vlaneseq
        %v2549 = vshrl.u32 %v2548, 7
        %v2550 = vsub.s32 1, %v2549
        %v2551 = vrot.slane %v1798, %v2550
        %v2552 = vlaneseq
        %v2553 = vshrl.u32 %v2552, 7
        %v2554 = vsub.s32 2, %v2553
        %v2555 = vrot.slane %v1798, %v2554
        %v2556 = vlaneseq
        %v2557 = vshrl.u32 %v2556, 7
        %v2558 = vsub.s32 3, %v2557
        %v2559 = vrot.slane %v1798, %v2558
        %v2560 = vlaneseq
        %v2561 = vshrl.u32 %v2560, 7
        %v2562 = vsub.s32 4, %v2561
        %v2563 = vrot.slane %v1798, %v2562
        %v2564 = vlaneseq
        %v2565 = vshrl.u32 %v2564, 7
        %v2566 = vsub.s32 5, %v2565
        %v2567 = vrot.slane %v1798, %v2566
        %v2568 = vlaneseq
        %v2569 = vshrl.u32 %v2568, 7
        %v2570 = vsub.s32 6, %v2569
        %v2571 = vrot.slane %v1798, %v2570
        %v2572 = vlaneseq
        %v2573 = vshrl.u32 %v2572, 7
        %v2574 = vsub.s32 7, %v2573
        %v2575 = vrot.slane %v1798, %v2574
        %v2576 = vlaneseq
        %v2577 = vshrl.u32 %v2576, 7
        %v2578 = vsub.s32 0, %v2577
        %v2579 = vrot.slane %v1799, %v2578
        %v2580 = vlaneseq
        %v2581 = vshrl.u32 %v2580, 7
        %v2582 = vsub.s32 1, %v2581
        %v2583 = vrot.slane %v1799, %v2582
        %v2584 = vlaneseq
        %v2585 = vshrl.u32 %v2584, 7
        %v2586 = vsub.s32 2, %v2585
        %v2587 = vrot.slane %v1799, %v2586
        %v2588 = vlaneseq
        %v2589 = vshrl.u32 %v2588, 7
        %v2590 = vsub.s32 3, %v2589
        %v2591 = vrot.slane %v1799, %v2590
        %v2592 = vlaneseq
        %v2593 = vshrl.u32 %v2592, 7
        %v2594 = vsub.s32 4, %v2593
        %v2595 = vrot.slane %v1799, %v2594
        %v2596 = vlaneseq
        %v2597 = vshrl.u32 %v2596, 7
        %v2598 = vsub.s32 5, %v2597
        %v2599 = vrot.slane %v1799, %v2598
        %v2600 = vlaneseq
        %v2601 = vshrl.u32 %v2600, 7
        %v2602 = vsub.s32 6, %v2601
        %v2603 = vrot.slane %v1799, %v2602
        %v2604 = vlaneseq
        %v2605 = vshrl.u32 %v2604, 7
        %v2606 = vsub.s32 7, %v2605
        %v2607 = vrot.slane %v1799, %v2606
        %v2608 = vlaneseq
        %v2609 = vshrl.u32 %v2608, 7
        %v2610 = vsub.s32 0, %v2609
        %v2611 = vrot.slane %v1800, %v2610
        %v2612 = vlaneseq
        %v2613 = vshrl.u32 %v2612, 7
        %v2614 = vsub.s32 1, %v2613
        %v2615 = vrot.slane %v1800, %v2614
        %v2616 = vlaneseq
        %v2617 = vshrl.u32 %v2616, 7
        %v2618 = vsub.s32 2, %v2617
        %v2619 = vrot.slane %v1800, %v2618
        %v2620 = vlaneseq
        %v2621 = vshrl.u32 %v2620, 7
        %v2622 = vsub.s32 3, %v2621
        %v2623 = vrot.slane %v1800, %v2622
        %v2624 = vlaneseq
        %v2625 = vshrl.u32 %v2624, 7
        %v2626 = vsub.s32 4, %v2625
        %v2627 = vrot.slane %v1800, %v2626
        %v2628 = vlaneseq
        %v2629 = vshrl.u32 %v2628, 7
        %v2630 = vsub.s32 5, %v2629
        %v2631 = vrot.slane %v1800, %v2630
        %v2632 = vlaneseq
        %v2633 = vshrl.u32 %v2632, 7
        %v2634 = vsub.s32 6, %v2633
        %v2635 = vrot.slane %v1800, %v2634
        %v2636 = vlaneseq
        %v2637 = vshrl.u32 %v2636, 7
        %v2638 = vsub.s32 7, %v2637
        %v2639 = vrot.slane %v1800, %v2638
        %v2640 = vlaneseq
        %v2641 = vshrl.u32 %v2640, 7
        %v2642 = vsub.s32 0, %v2641
        %v2643 = vrot.slane %v1801, %v2642
        %v2644 = vlaneseq
        %v2645 = vshrl.u32 %v2644, 7
        %v2646 = vsub.s32 1, %v2645
        %v2647 = vrot.slane %v1801, %v2646
        %v2648 = vlaneseq
        %v2649 = vshrl.u32 %v2648, 7
        %v2650 = vsub.s32 2, %v2649
        %v2651 = vrot.slane %v1801, %v2650
        %v2652 = vlaneseq
        %v2653 = vshrl.u32 %v2652, 7
        %v2654 = vsub.s32 3, %v2653
        %v2655 = vrot.slane %v1801, %v2654
        %v2656 = vlaneseq
        %v2657 = vshrl.u32 %v2656, 7
        %v2658 = vsub.s32 4, %v2657
        %v2659 = vrot.slane %v1801, %v2658
        %v2660 = vlaneseq
        %v2661 = vshrl.u32 %v2660, 7
        %v2662 = vsub.s32 5, %v2661
        %v2663 = vrot.slane %v1801, %v2662
        %v2664 = vlaneseq
        %v2665 = vshrl.u32 %v2664, 7
        %v2666 = vsub.s32 6, %v2665
        %v2667 = vrot.slane %v1801, %v2666
        %v2668 = vlaneseq
        %v2669 = vshrl.u32 %v2668, 7
        %v2670 = vsub.s32 7, %v2669
        %v2671 = vrot.slane %v1801, %v2670
        %v2672 = vlaneseq
        %v2673 = vshrl.u32 %v2672, 7
        %v2674 = vsub.s32 0, %v2673
        %v2675 = vrot.slane %v1802, %v2674
        %v2676 = vlaneseq
        %v2677 = vshrl.u32 %v2676, 7
        %v2678 = vsub.s32 1, %v2677
        %v2679 = vrot.slane %v1802, %v2678
        %v2680 = vlaneseq
        %v2681 = vshrl.u32 %v2680, 7
        %v2682 = vsub.s32 2, %v2681
        %v2683 = vrot.slane %v1802, %v2682
        %v2684 = vlaneseq
        %v2685 = vshrl.u32 %v2684, 7
        %v2686 = vsub.s32 3, %v2685
        %v2687 = vrot.slane %v1802, %v2686
        %v2688 = vlaneseq
        %v2689 = vshrl.u32 %v2688, 7
        %v2690 = vsub.s32 4, %v2689
        %v2691 = vrot.slane %v1802, %v2690
        %v2692 = vlaneseq
        %v2693 = vshrl.u32 %v2692, 7
        %v2694 = vsub.s32 5, %v2693
        %v2695 = vrot.slane %v1802, %v2694
        %v2696 = vlaneseq
        %v2697 = vshrl.u32 %v2696, 7
        %v2698 = vsub.s32 6, %v2697
        %v2699 = vrot.slane %v1802, %v2698
        %v2700 = vlaneseq
        %v2701 = vshrl.u32 %v2700, 7
        %v2702 = vsub.s32 7, %v2701
        %v2703 = vrot.slane %v1802, %v2702
        %v2704 = vlaneseq
        %v2705 = vshrl.u32 %v2704, 7
        %v2706 = vsub.s32 0, %v2705
        %v2707 = vrot.slane %v1803, %v2706
        %v2708 = vlaneseq
        %v2709 = vshrl.u32 %v2708, 7
        %v2710 = vsub.s32 1, %v2709
        %v2711 = vrot.slane %v1803, %v2710
        %v2712 = vlaneseq
        %v2713 = vshrl.u32 %v2712, 7
        %v2714 = vsub.s32 2, %v2713
        %v2715 = vrot.slane %v1803, %v2714
        %v2716 = vlaneseq
        %v2717 = vshrl.u32 %v2716, 7
        %v2718 = vsub.s32 3, %v2717
        %v2719 = vrot.slane %v1803, %v2718
        %v2720 = vlaneseq
        %v2721 = vshrl.u32 %v2720, 7
        %v2722 = vsub.s32 4, %v2721
        %v2723 = vrot.slane %v1803, %v2722
        %v2724 = vlaneseq
        %v2725 = vshrl.u32 %v2724, 7
        %v2726 = vsub.s32 5, %v2725
        %v2727 = vrot.slane %v1803, %v2726
        %v2728 = vlaneseq
        %v2729 = vshrl.u32 %v2728, 7
        %v2730 = vsub.s32 6, %v2729
        %v2731 = vrot.slane %v1803, %v2730
        %v2732 = vlaneseq
        %v2733 = vshrl.u32 %v2732, 7
        %v2734 = vsub.s32 7, %v2733
        %v2735 = vrot.slane %v1803, %v2734
        %v2736 = vlaneseq
        %v2737 = vshrl.u32 %v2736, 7
        %v2738 = vsub.s32 0, %v2737
        %v2739 = vrot.slane %v1804, %v2738
        %v2740 = vlaneseq
        %v2741 = vshrl.u32 %v2740, 7
        %v2742 = vsub.s32 1, %v2741
        %v2743 = vrot.slane %v1804, %v2742
        %v2744 = vlaneseq
        %v2745 = vshrl.u32 %v2744, 7
        %v2746 = vsub.s32 2, %v2745
        %v2747 = vrot.slane %v1804, %v2746
        %v2748 = vlaneseq
        %v2749 = vshrl.u32 %v2748, 7
        %v2750 = vsub.s32 3, %v2749
        %v2751 = vrot.slane %v1804, %v2750
        %v2752 = vlaneseq
        %v2753 = vshrl.u32 %v2752, 7
        %v2754 = vsub.s32 4, %v2753
        %v2755 = vrot.slane %v1804, %v2754
        %v2756 = vlaneseq
        %v2757 = vshrl.u32 %v2756, 7
        %v2758 = vsub.s32 5, %v2757
        %v2759 = vrot.slane %v1804, %v2758
        %v2760 = vlaneseq
        %v2761 = vshrl.u32 %v2760, 7
        %v2762 = vsub.s32 6, %v2761
        %v2763 = vrot.slane %v1804, %v2762
        %v2764 = vlaneseq
        %v2765 = vshrl.u32 %v2764, 7
        %v2766 = vsub.s32 7, %v2765
        %v2767 = vrot.slane %v1804, %v2766
        %v2768 = vlaneseq
        %v2769 = vshrl.u32 %v2768, 7
        %v2770 = vsub.s32 0, %v2769
        %v2771 = vrot.slane %v1805, %v2770
        %v2772 = vlaneseq
        %v2773 = vshrl.u32 %v2772, 7
        %v2774 = vsub.s32 1, %v2773
        %v2775 = vrot.slane %v1805, %v2774
        %v2776 = vlaneseq
        %v2777 = vshrl.u32 %v2776, 7
        %v2778 = vsub.s32 2, %v2777
        %v2779 = vrot.slane %v1805, %v2778
        %v2780 = vlaneseq
        %v2781 = vshrl.u32 %v2780, 7
        %v2782 = vsub.s32 3, %v2781
        %v2783 = vrot.slane %v1805, %v2782
        %v2784 = vlaneseq
        %v2785 = vshrl.u32 %v2784, 7
        %v2786 = vsub.s32 4, %v2785
        %v2787 = vrot.slane %v1805, %v2786
        %v2788 = vlaneseq
        %v2789 = vshrl.u32 %v2788, 7
        %v2790 = vsub.s32 5, %v2789
        %v2791 = vrot.slane %v1805, %v2790
        %v2792 = vlaneseq
        %v2793 = vshrl.u32 %v2792, 7
        %v2794 = vsub.s32 6, %v2793
        %v2795 = vrot.slane %v1805, %v2794
        %v2796 = vlaneseq
        %v2797 = vshrl.u32 %v2796, 7
        %v2798 = vsub.s32 7, %v2797
        %v2799 = vrot.slane %v1805, %v2798
        %v2800 = vlaneseq
        %v2801 = vshrl.u32 %v2800, 7
        %v2802 = vsub.s32 0, %v2801
        %v2803 = vrot.slane %v1806, %v2802
        %v2804 = vlaneseq
        %v2805 = vshrl.u32 %v2804, 7
        %v2806 = vsub.s32 1, %v2805
        %v2807 = vrot.slane %v1806, %v2806
        %v2808 = vlaneseq
        %v2809 = vshrl.u32 %v2808, 7
        %v2810 = vsub.s32 2, %v2809
        %v2811 = vrot.slane %v1806, %v2810
        %v2812 = vlaneseq
        %v2813 = vshrl.u32 %v2812, 7
        %v2814 = vsub.s32 3, %v2813
        %v2815 = vrot.slane %v1806, %v2814
        %v2816 = vlaneseq
        %v2817 = vshrl.u32 %v2816, 7
        %v2818 = vsub.s32 4, %v2817
        %v2819 = vrot.slane %v1806, %v2818
        %v2820 = vlaneseq
        %v2821 = vshrl.u32 %v2820, 7
        %v2822 = vsub.s32 5, %v2821
        %v2823 = vrot.slane %v1806, %v2822
        %v2824 = vlaneseq
        %v2825 = vshrl.u32 %v2824, 7
        %v2826 = vsub.s32 6, %v2825
        %v2827 = vrot.slane %v1806, %v2826
        %v2828 = vlaneseq
        %v2829 = vshrl.u32 %v2828, 7
        %v2830 = vsub.s32 7, %v2829
        %v2831 = vrot.slane %v1806, %v2830
        %v2832 = vlaneseq
        %v2833 = vshrl.u32 %v2832, 7
        %v2834 = vsub.s32 0, %v2833
        %v2835 = vrot.slane %v1807, %v2834
        %v2836 = vlaneseq
        %v2837 = vshrl.u32 %v2836, 7
        %v2838 = vsub.s32 1, %v2837
        %v2839 = vrot.slane %v1807, %v2838
        %v2840 = vlaneseq
        %v2841 = vshrl.u32 %v2840, 7
        %v2842 = vsub.s32 2, %v2841
        %v2843 = vrot.slane %v1807, %v2842
        %v2844 = vlaneseq
        %v2845 = vshrl.u32 %v2844, 7
        %v2846 = vsub.s32 3, %v2845
        %v2847 = vrot.slane %v1807, %v2846
        %v2848 = vlaneseq
        %v2849 = vshrl.u32 %v2848, 7
        %v2850 = vsub.s32 4, %v2849
        %v2851 = vrot.slane %v1807, %v2850
        %v2852 = vlaneseq
        %v2853 = vshrl.u32 %v2852, 7
        %v2854 = vsub.s32 5, %v2853
        %v2855 = vrot.slane %v1807, %v2854
        %v2856 = vlaneseq
        %v2857 = vshrl.u32 %v2856, 7
        %v2858 = vsub.s32 6, %v2857
        %v2859 = vrot.slane %v1807, %v2858
        %v2860 = vlaneseq
        %v2861 = vshrl.u32 %v2860, 7
        %v2862 = vsub.s32 7, %v2861
        %v2863 = vrot.slane %v1807, %v2862
        %v2864 = vcombine.low %v1843, %v1847
        %v2865 = vcombine.low %v1851, %v1855
        %v2866 = vcombine.low %v1859, %v1863
        %v2867 = vcombine.low %v1867, %v1871
        %v2869 = vunpack.c.l.s4 1966171168
        %v2870 = vunpack.c.0.s8 %v2869
        %v2871 = vlaneseq
        %v2872 = vshrl.u32 %v2871, 7
        %v2873 = vsub.s32 %v2870, %v2872
        %v2874 = vrot.slane %v2864, %v2873
        %v2876 = vunpack.c.l.s4 1966171168
        %v2877 = vunpack.c.0.s8 %v2876
        %v2878 = vlaneseq
        %v2879 = vshrl.u32 %v2878, 7
        %v2880 = vsub.s32 %v2877, %v2879
        %v2881 = vrot.slane %v2865, %v2880
        %v2883 = vunpack.c.l.s4 1966171168
        %v2884 = vunpack.c.0.s8 %v2883
        %v2885 = vlaneseq
        %v2886 = vshrl.u32 %v2885, 7
        %v2887 = vsub.s32 %v2884, %v2886
        %v2888 = vrot.slane %v2866, %v2887
        %v2890 = vunpack.c.l.s4 1966171168
        %v2891 = vunpack.c.0.s8 %v2890
        %v2892 = vlaneseq
        %v2893 = vshrl.u32 %v2892, 7
        %v2894 = vsub.s32 %v2891, %v2893
        %v2895 = vrot.slane %v2867, %v2894
        %v2896 = vcombine.low %v2874, %v2881
        %v2897 = vcombine.low %v2888, %v2895
        %v2899 = vunpack.c.l.s4 1966171168
        %v2900 = vunpack.c.0.s8 %v2899
        %v2901 = vlaneseq
        %v2902 = vshrl.u32 %v2901, 7
        %v2903 = vsub.s32 %v2900, %v2902
        %v2904 = vrot.slane %v2896, %v2903
        %v2906 = vunpack.c.l.s4 1966171168
        %v2907 = vunpack.c.0.s8 %v2906
        %v2908 = vlaneseq
        %v2909 = vshrl.u32 %v2908, 7
        %v2910 = vsub.s32 %v2907, %v2909
        %v2911 = vrot.slane %v2897, %v2910
        %v2912 = vcombine.low %v2904, %v2911
        %v2913 = vcombine.low %v1875, %v1879
        %v2914 = vcombine.low %v1883, %v1887
        %v2915 = vcombine.low %v1891, %v1895
        %v2916 = vcombine.low %v1899, %v1903
        %v2918 = vunpack.c.l.s4 1966171168
        %v2919 = vunpack.c.0.s8 %v2918
        %v2920 = vlaneseq
        %v2921 = vshrl.u32 %v2920, 7
        %v2922 = vsub.s32 %v2919, %v2921
        %v2923 = vrot.slane %v2913, %v2922
        %v2925 = vunpack.c.l.s4 1966171168
        %v2926 = vunpack.c.0.s8 %v2925
        %v2927 = vlaneseq
        %v2928 = vshrl.u32 %v2927, 7
        %v2929 = vsub.s32 %v2926, %v2928
        %v2930 = vrot.slane %v2914, %v2929
        %v2932 = vunpack.c.l.s4 1966171168
        %v2933 = vunpack.c.0.s8 %v2932
        %v2934 = vlaneseq
        %v2935 = vshrl.u32 %v2934, 7
        %v2936 = vsub.s32 %v2933, %v2935
        %v2937 = vrot.slane %v2915, %v2936
        %v2939 = vunpack.c.l.s4 1966171168
        %v2940 = vunpack.c.0.s8 %v2939
        %v2941 = vlaneseq
        %v2942 = vshrl.u32 %v2941, 7
        %v2943 = vsub.s32 %v2940, %v2942
        %v2944 = vrot.slane %v2916, %v2943
        %v2945 = vcombine.low %v2923, %v2930
        %v2946 = vcombine.low %v2937, %v2944
        %v2948 = vunpack.c.l.s4 1966171168
        %v2949 = vunpack.c.0.s8 %v2948
        %v2950 = vlaneseq
        %v2951 = vshrl.u32 %v2950, 7
        %v2952 = vsub.s32 %v2949, %v2951
        %v2953 = vrot.slane %v2945, %v2952
        %v2955 = vunpack.c.l.s4 1966171168
        %v2956 = vunpack.c.0.s8 %v2955
        %v2957 = vlaneseq
        %v2958 = vshrl.u32 %v2957, 7
        %v2959 = vsub.s32 %v2956, %v2958
        %v2960 = vrot.slane %v2946, %v2959
        %v2961 = vcombine.low %v2953, %v2960
        %v2962 = vcombine.low %v1907, %v1911
        %v2963 = vcombine.low %v1915, %v1919
        %v2964 = vcombine.low %v1923, %v1927
        %v2965 = vcombine.low %v1931, %v1935
        %v2967 = vunpack.c.l.s4 1966171168
        %v2968 = vunpack.c.0.s8 %v2967
        %v2969 = vlaneseq
        %v2970 = vshrl.u32 %v2969, 7
        %v2971 = vsub.s32 %v2968, %v2970
        %v2972 = vrot.slane %v2962, %v2971
        %v2974 = vunpack.c.l.s4 1966171168
        %v2975 = vunpack.c.0.s8 %v2974
        %v2976 = vlaneseq
        %v2977 = vshrl.u32 %v2976, 7
        %v2978 = vsub.s32 %v2975, %v2977
        %v2979 = vrot.slane %v2963, %v2978
        %v2981 = vunpack.c.l.s4 1966171168
        %v2982 = vunpack.c.0.s8 %v2981
        %v2983 = vlaneseq
        %v2984 = vshrl.u32 %v2983, 7
        %v2985 = vsub.s32 %v2982, %v2984
        %v2986 = vrot.slane %v2964, %v2985
        %v2988 = vunpack.c.l.s4 1966171168
        %v2989 = vunpack.c.0.s8 %v2988
        %v2990 = vlaneseq
        %v2991 = vshrl.u32 %v2990, 7
        %v2992 = vsub.s32 %v2989, %v2991
        %v2993 = vrot.slane %v2965, %v2992
        %v2994 = vcombine.low %v2972, %v2979
        %v2995 = vcombine.low %v2986, %v2993
        %v2997 = vunpack.c.l.s4 1966171168
        %v2998 = vunpack.c.0.s8 %v2997
        %v2999 = vlaneseq
        %v3000 = vshrl.u32 %v2999, 7
        %v3001 = vsub.s32 %v2998, %v3000
        %v3002 = vrot.slane %v2994, %v3001
        %v3004 = vunpack.c.l.s4 1966171168
        %v3005 = vunpack.c.0.s8 %v3004
        %v3006 = vlaneseq
        %v3007 = vshrl.u32 %v3006, 7
        %v3008 = vsub.s32 %v3005, %v3007
        %v3009 = vrot.slane %v2995, %v3008
        %v3010 = vcombine.low %v3002, %v3009
        %v3011 = vcombine.low %v1939, %v1943
        %v3012 = vcombine.low %v1947, %v1951
        %v3013 = vcombine.low %v1955, %v1959
        %v3014 = vcombine.low %v1963, %v1967
        %v3016 = vunpack.c.l.s4 1966171168
        %v3017 = vunpack.c.0.s8 %v3016
        %v3018 = vlaneseq
        %v3019 = vshrl.u32 %v3018, 7
        %v3020 = vsub.s32 %v3017, %v3019
        %v3021 = vrot.slane %v3011, %v3020
        %v3023 = vunpack.c.l.s4 1966171168
        %v3024 = vunpack.c.0.s8 %v3023
        %v3025 = vlaneseq
        %v3026 = vshrl.u32 %v3025, 7
        %v3027 = vsub.s32 %v3024, %v3026
        %v3028 = vrot.slane %v3012, %v3027
        %v3030 = vunpack.c.l.s4 1966171168
        %v3031 = vunpack.c.0.s8 %v3030
        %v3032 = vlaneseq
        %v3033 = vshrl.u32 %v3032, 7
        %v3034 = vsub.s32 %v3031, %v3033
        %v3035 = vrot.slane %v3013, %v3034
        %v3037 = vunpack.c.l.s4 1966171168
        %v3038 = vunpack.c.0.s8 %v3037
        %v3039 = vlaneseq
        %v3040 = vshrl.u32 %v3039, 7
        %v3041 = vsub.s32 %v3038, %v3040
        %v3042 = vrot.slane %v3014, %v3041
        %v3043 = vcombine.low %v3021, %v3028
        %v3044 = vcombine.low %v3035, %v3042
        %v3046 = vunpack.c.l.s4 1966171168
        %v3047 = vunpack.c.0.s8 %v3046
        %v3048 = vlaneseq
        %v3049 = vshrl.u32 %v3048, 7
        %v3050 = vsub.s32 %v3047, %v3049
        %v3051 = vrot.slane %v3043, %v3050
        %v3053 = vunpack.c.l.s4 1966171168
        %v3054 = vunpack.c.0.s8 %v3053
        %v3055 = vlaneseq
        %v3056 = vshrl.u32 %v3055, 7
        %v3057 = vsub.s32 %v3054, %v3056
        %v3058 = vrot.slane %v3044, %v3057
        %v3059 = vcombine.low %v3051, %v3058
        %v3060 = vcombine.low %v1971, %v1975
        %v3061 = vcombine.low %v1979, %v1983
        %v3062 = vcombine.low %v1987, %v1991
        %v3063 = vcombine.low %v1995, %v1999
        %v3065 = vunpack.c.l.s4 1966171168
        %v3066 = vunpack.c.0.s8 %v3065
        %v3067 = vlaneseq
        %v3068 = vshrl.u32 %v3067, 7
        %v3069 = vsub.s32 %v3066, %v3068
        %v3070 = vrot.slane %v3060, %v3069
        %v3072 = vunpack.c.l.s4 1966171168
        %v3073 = vunpack.c.0.s8 %v3072
        %v3074 = vlaneseq
        %v3075 = vshrl.u32 %v3074, 7
        %v3076 = vsub.s32 %v3073, %v3075
        %v3077 = vrot.slane %v3061, %v3076
        %v3079 = vunpack.c.l.s4 1966171168
        %v3080 = vunpack.c.0.s8 %v3079
        %v3081 = vlaneseq
        %v3082 = vshrl.u32 %v3081, 7
        %v3083 = vsub.s32 %v3080, %v3082
        %v3084 = vrot.slane %v3062, %v3083
        %v3086 = vunpack.c.l.s4 1966171168
        %v3087 = vunpack.c.0.s8 %v3086
        %v3088 = vlaneseq
        %v3089 = vshrl.u32 %v3088, 7
        %v3090 = vsub.s32 %v3087, %v3089
        %v3091 = vrot.slane %v3063, %v3090
        %v3092 = vcombine.low %v3070, %v3077
        %v3093 = vcombine.low %v3084, %v3091
        %v3095 = vunpack.c.l.s4 1966171168
        %v3096 = vunpack.c.0.s8 %v3095
        %v3097 = vlaneseq
        %v3098 = vshrl.u32 %v3097, 7
        %v3099 = vsub.s32 %v3096, %v3098
        %v3100 = vrot.slane %v3092, %v3099
        %v3102 = vunpack.c.l.s4 1966171168
        %v3103 = vunpack.c.0.s8 %v3102
        %v3104 = vlaneseq
        %v3105 = vshrl.u32 %v3104, 7
        %v3106 = vsub.s32 %v3103, %v3105
        %v3107 = vrot.slane %v3093, %v3106
        %v3108 = vcombine.low %v3100, %v3107
        %v3109 = vcombine.low %v2003, %v2007
        %v3110 = vcombine.low %v2011, %v2015
        %v3111 = vcombine.low %v2019, %v2023
        %v3112 = vcombine.low %v2027, %v2031
        %v3114 = vunpack.c.l.s4 1966171168
        %v3115 = vunpack.c.0.s8 %v3114
        %v3116 = vlaneseq
        %v3117 = vshrl.u32 %v3116, 7
        %v3118 = vsub.s32 %v3115, %v3117
        %v3119 = vrot.slane %v3109, %v3118
        %v3121 = vunpack.c.l.s4 1966171168
        %v3122 = vunpack.c.0.s8 %v3121
        %v3123 = vlaneseq
        %v3124 = vshrl.u32 %v3123, 7
        %v3125 = vsub.s32 %v3122, %v3124
        %v3126 = vrot.slane %v3110, %v3125
        %v3128 = vunpack.c.l.s4 1966171168
        %v3129 = vunpack.c.0.s8 %v3128
        %v3130 = vlaneseq
        %v3131 = vshrl.u32 %v3130, 7
        %v3132 = vsub.s32 %v3129, %v3131
        %v3133 = vrot.slane %v3111, %v3132
        %v3135 = vunpack.c.l.s4 1966171168
        %v3136 = vunpack.c.0.s8 %v3135
        %v3137 = vlaneseq
        %v3138 = vshrl.u32 %v3137, 7
        %v3139 = vsub.s32 %v3136, %v3138
        %v3140 = vrot.slane %v3112, %v3139
        %v3141 = vcombine.low %v3119, %v3126
        %v3142 = vcombine.low %v3133, %v3140
        %v3144 = vunpack.c.l.s4 1966171168
        %v3145 = vunpack.c.0.s8 %v3144
        %v3146 = vlaneseq
        %v3147 = vshrl.u32 %v3146, 7
        %v3148 = vsub.s32 %v3145, %v3147
        %v3149 = vrot.slane %v3141, %v3148
        %v3151 = vunpack.c.l.s4 1966171168
        %v3152 = vunpack.c.0.s8 %v3151
        %v3153 = vlaneseq
        %v3154 = vshrl.u32 %v3153, 7
        %v3155 = vsub.s32 %v3152, %v3154
        %v3156 = vrot.slane %v3142, %v3155
        %v3157 = vcombine.low %v3149, %v3156
        %v3158 = vcombine.low %v2035, %v2039
        %v3159 = vcombine.low %v2043, %v2047
        %v3160 = vcombine.low %v2051, %v2055
        %v3161 = vcombine.low %v2059, %v2063
        %v3163 = vunpack.c.l.s4 1966171168
        %v3164 = vunpack.c.0.s8 %v3163
        %v3165 = vlaneseq
        %v3166 = vshrl.u32 %v3165, 7
        %v3167 = vsub.s32 %v3164, %v3166
        %v3168 = vrot.slane %v3158, %v3167
        %v3170 = vunpack.c.l.s4 1966171168
        %v3171 = vunpack.c.0.s8 %v3170
        %v3172 = vlaneseq
        %v3173 = vshrl.u32 %v3172, 7
        %v3174 = vsub.s32 %v3171, %v3173
        %v3175 = vrot.slane %v3159, %v3174
        %v3177 = vunpack.c.l.s4 1966171168
        %v3178 = vunpack.c.0.s8 %v3177
        %v3179 = vlaneseq
        %v3180 = vshrl.u32 %v3179, 7
        %v3181 = vsub.s32 %v3178, %v3180
        %v3182 = vrot.slane %v3160, %v3181
        %v3184 = vunpack.c.l.s4 1966171168
        %v3185 = vunpack.c.0.s8 %v3184
        %v3186 = vlaneseq
        %v3187 = vshrl.u32 %v3186, 7
        %v3188 = vsub.s32 %v3185, %v3187
        %v3189 = vrot.slane %v3161, %v3188
        %v3190 = vcombine.low %v3168, %v3175
        %v3191 = vcombine.low %v3182, %v3189
        %v3193 = vunpack.c.l.s4 1966171168
        %v3194 = vunpack.c.0.s8 %v3193
        %v3195 = vlaneseq
        %v3196 = vshrl.u32 %v3195, 7
        %v3197 = vsub.s32 %v3194, %v3196
        %v3198 = vrot.slane %v3190, %v3197
        %v3200 = vunpack.c.l.s4 1966171168
        %v3201 = vunpack.c.0.s8 %v3200
        %v3202 = vlaneseq
        %v3203 = vshrl.u32 %v3202, 7
        %v3204 = vsub.s32 %v3201, %v3203
        %v3205 = vrot.slane %v3191, %v3204
        %v3206 = vcombine.low %v3198, %v3205
        %v3207 = vcombine.low %v2067, %v2071
        %v3208 = vcombine.low %v2075, %v2079
        %v3209 = vcombine.low %v2083, %v2087
        %v3210 = vcombine.low %v2091, %v2095
        %v3212 = vunpack.c.l.s4 1966171168
        %v3213 = vunpack.c.0.s8 %v3212
        %v3214 = vlaneseq
        %v3215 = vshrl.u32 %v3214, 7
        %v3216 = vsub.s32 %v3213, %v3215
        %v3217 = vrot.slane %v3207, %v3216
        %v3219 = vunpack.c.l.s4 1966171168
        %v3220 = vunpack.c.0.s8 %v3219
        %v3221 = vlaneseq
        %v3222 = vshrl.u32 %v3221, 7
        %v3223 = vsub.s32 %v3220, %v3222
        %v3224 = vrot.slane %v3208, %v3223
        %v3226 = vunpack.c.l.s4 1966171168
        %v3227 = vunpack.c.0.s8 %v3226
        %v3228 = vlaneseq
        %v3229 = vshrl.u32 %v3228, 7
        %v3230 = vsub.s32 %v3227, %v3229
        %v3231 = vrot.slane %v3209, %v3230
        %v3233 = vunpack.c.l.s4 1966171168
        %v3234 = vunpack.c.0.s8 %v3233
        %v3235 = vlaneseq
        %v3236 = vshrl.u32 %v3235, 7
        %v3237 = vsub.s32 %v3234, %v3236
        %v3238 = vrot.slane %v3210, %v3237
        %v3239 = vcombine.low %v3217, %v3224
        %v3240 = vcombine.low %v3231, %v3238
        %v3242 = vunpack.c.l.s4 1966171168
        %v3243 = vunpack.c.0.s8 %v3242
        %v3244 = vlaneseq
        %v3245 = vshrl.u32 %v3244, 7
        %v3246 = vsub.s32 %v3243, %v3245
        %v3247 = vrot.slane %v3239, %v3246
        %v3249 = vunpack.c.l.s4 1966171168
        %v3250 = vunpack.c.0.s8 %v3249
        %v3251 = vlaneseq
        %v3252 = vshrl.u32 %v3251, 7
        %v3253 = vsub.s32 %v3250, %v3252
        %v3254 = vrot.slane %v3240, %v3253
        %v3255 = vcombine.low %v3247, %v3254
        %v3256 = vcombine.low %v2099, %v2103
        %v3257 = vcombine.low %v2107, %v2111
        %v3258 = vcombine.low %v2115, %v2119
        %v3259 = vcombine.low %v2123, %v2127
        %v3261 = vunpack.c.l.s4 1966171168
        %v3262 = vunpack.c.0.s8 %v3261
        %v3263 = vlaneseq
        %v3264 = vshrl.u32 %v3263, 7
        %v3265 = vsub.s32 %v3262, %v3264
        %v3266 = vrot.slane %v3256, %v3265
        %v3268 = vunpack.c.l.s4 1966171168
        %v3269 = vunpack.c.0.s8 %v3268
        %v3270 = vlaneseq
        %v3271 = vshrl.u32 %v3270, 7
        %v3272 = vsub.s32 %v3269, %v3271
        %v3273 = vrot.slane %v3257, %v3272
        %v3275 = vunpack.c.l.s4 1966171168
        %v3276 = vunpack.c.0.s8 %v3275
        %v3277 = vlaneseq
        %v3278 = vshrl.u32 %v3277, 7
        %v3279 = vsub.s32 %v3276, %v3278
        %v3280 = vrot.slane %v3258, %v3279
        %v3282 = vunpack.c.l.s4 1966171168
        %v3283 = vunpack.c.0.s8 %v3282
        %v3284 = vlaneseq
        %v3285 = vshrl.u32 %v3284, 7
        %v3286 = vsub.s32 %v3283, %v3285
        %v3287 = vrot.slane %v3259, %v3286
        %v3288 = vcombine.low %v3266, %v3273
        %v3289 = vcombine.low %v3280, %v3287
        %v3291 = vunpack.c.l.s4 1966171168
        %v3292 = vunpack.c.0.s8 %v3291
        %v3293 = vlaneseq
        %v3294 = vshrl.u32 %v3293, 7
        %v3295 = vsub.s32 %v3292, %v3294
        %v3296 = vrot.slane %v3288, %v3295
        %v3298 = vunpack.c.l.s4 1966171168
        %v3299 = vunpack.c.0.s8 %v3298
        %v3300 = vlaneseq
        %v3301 = vshrl.u32 %v3300, 7
        %v3302 = vsub.s32 %v3299, %v3301
        %v3303 = vrot.slane %v3289, %v3302
        %v3304 = vcombine.low %v3296, %v3303
        %v3305 = vcombine.low %v2131, %v2135
        %v3306 = vcombine.low %v2139, %v2143
        %v3307 = vcombine.low %v2147, %v2151
        %v3308 = vcombine.low %v2155, %v2159
        %v3310 = vunpack.c.l.s4 1966171168
        %v3311 = vunpack.c.0.s8 %v3310
        %v3312 = vlaneseq
        %v3313 = vshrl.u32 %v3312, 7
        %v3314 = vsub.s32 %v3311, %v3313
        %v3315 = vrot.slane %v3305, %v3314
        %v3317 = vunpack.c.l.s4 1966171168
        %v3318 = vunpack.c.0.s8 %v3317
        %v3319 = vlaneseq
        %v3320 = vshrl.u32 %v3319, 7
        %v3321 = vsub.s32 %v3318, %v3320
        %v3322 = vrot.slane %v3306, %v3321
        %v3324 = vunpack.c.l.s4 1966171168
        %v3325 = vunpack.c.0.s8 %v3324
        %v3326 = vlaneseq
        %v3327 = vshrl.u32 %v3326, 7
        %v3328 = vsub.s32 %v3325, %v3327
        %v3329 = vrot.slane %v3307, %v3328
        %v3331 = vunpack.c.l.s4 1966171168
        %v3332 = vunpack.c.0.s8 %v3331
        %v3333 = vlaneseq
        %v3334 = vshrl.u32 %v3333, 7
        %v3335 = vsub.s32 %v3332, %v3334
        %v3336 = vrot.slane %v3308, %v3335
        %v3337 = vcombine.low %v3315, %v3322
        %v3338 = vcombine.low %v3329, %v3336
        %v3340 = vunpack.c.l.s4 1966171168
        %v3341 = vunpack.c.0.s8 %v3340
        %v3342 = vlaneseq
        %v3343 = vshrl.u32 %v3342, 7
        %v3344 = vsub.s32 %v3341, %v3343
        %v3345 = vrot.slane %v3337, %v3344
        %v3347 = vunpack.c.l.s4 1966171168
        %v3348 = vunpack.c.0.s8 %v3347
        %v3349 = vlaneseq
        %v3350 = vshrl.u32 %v3349, 7
        %v3351 = vsub.s32 %v3348, %v3350
        %v3352 = vrot.slane %v3338, %v3351
        %v3353 = vcombine.low %v3345, %v3352
        %v3354 = vcombine.low %v2163, %v2167
        %v3355 = vcombine.low %v2171, %v2175
        %v3356 = vcombine.low %v2179, %v2183
        %v3357 = vcombine.low %v2187, %v2191
        %v3359 = vunpack.c.l.s4 1966171168
        %v3360 = vunpack.c.0.s8 %v3359
        %v3361 = vlaneseq
        %v3362 = vshrl.u32 %v3361, 7
        %v3363 = vsub.s32 %v3360, %v3362
        %v3364 = vrot.slane %v3354, %v3363
        %v3366 = vunpack.c.l.s4 1966171168
        %v3367 = vunpack.c.0.s8 %v3366
        %v3368 = vlaneseq
        %v3369 = vshrl.u32 %v3368, 7
        %v3370 = vsub.s32 %v3367, %v3369
        %v3371 = vrot.slane %v3355, %v3370
        %v3373 = vunpack.c.l.s4 1966171168
        %v3374 = vunpack.c.0.s8 %v3373
        %v3375 = vlaneseq
        %v3376 = vshrl.u32 %v3375, 7
        %v3377 = vsub.s32 %v3374, %v3376
        %v3378 = vrot.slane %v3356, %v3377
        %v3380 = vunpack.c.l.s4 1966171168
        %v3381 = vunpack.c.0.s8 %v3380
        %v3382 = vlaneseq
        %v3383 = vshrl.u32 %v3382, 7
        %v3384 = vsub.s32 %v3381, %v3383
        %v3385 = vrot.slane %v3357, %v3384
        %v3386 = vcombine.low %v3364, %v3371
        %v3387 = vcombine.low %v3378, %v3385
        %v3389 = vunpack.c.l.s4 1966171168
        %v3390 = vunpack.c.0.s8 %v3389
        %v3391 = vlaneseq
        %v3392 = vshrl.u32 %v3391, 7
        %v3393 = vsub.s32 %v3390, %v3392
        %v3394 = vrot.slane %v3386, %v3393
        %v3396 = vunpack.c.l.s4 1966171168
        %v3397 = vunpack.c.0.s8 %v3396
        %v3398 = vlaneseq
        %v3399 = vshrl.u32 %v3398, 7
        %v3400 = vsub.s32 %v3397, %v3399
        %v3401 = vrot.slane %v3387, %v3400
        %v3402 = vcombine.low %v3394, %v3401
        %v3403 = vcombine.low %v2195, %v2199
        %v3404 = vcombine.low %v2203, %v2207
        %v3405 = vcombine.low %v2211, %v2215
        %v3406 = vcombine.low %v2219, %v2223
        %v3408 = vunpack.c.l.s4 1966171168
        %v3409 = vunpack.c.0.s8 %v3408
        %v3410 = vlaneseq
        %v3411 = vshrl.u32 %v3410, 7
        %v3412 = vsub.s32 %v3409, %v3411
        %v3413 = vrot.slane %v3403, %v3412
        %v3415 = vunpack.c.l.s4 1966171168
        %v3416 = vunpack.c.0.s8 %v3415
        %v3417 = vlaneseq
        %v3418 = vshrl.u32 %v3417, 7
        %v3419 = vsub.s32 %v3416, %v3418
        %v3420 = vrot.slane %v3404, %v3419
        %v3422 = vunpack.c.l.s4 1966171168
        %v3423 = vunpack.c.0.s8 %v3422
        %v3424 = vlaneseq
        %v3425 = vshrl.u32 %v3424, 7
        %v3426 = vsub.s32 %v3423, %v3425
        %v3427 = vrot.slane %v3405, %v3426
        %v3429 = vunpack.c.l.s4 1966171168
        %v3430 = vunpack.c.0.s8 %v3429
        %v3431 = vlaneseq
        %v3432 = vshrl.u32 %v3431, 7
        %v3433 = vsub.s32 %v3430, %v3432
        %v3434 = vrot.slane %v3406, %v3433
        %v3435 = vcombine.low %v3413, %v3420
        %v3436 = vcombine.low %v3427, %v3434
        %v3438 = vunpack.c.l.s4 1966171168
        %v3439 = vunpack.c.0.s8 %v3438
        %v3440 = vlaneseq
        %v3441 = vshrl.u32 %v3440, 7
        %v3442 = vsub.s32 %v3439, %v3441
        %v3443 = vrot.slane %v3435, %v3442
        %v3445 = vunpack.c.l.s4 1966171168
        %v3446 = vunpack.c.0.s8 %v3445
        %v3447 = vlaneseq
        %v3448 = vshrl.u32 %v3447, 7
        %v3449 = vsub.s32 %v3446, %v3448
        %v3450 = vrot.slane %v3436, %v3449
        %v3451 = vcombine.low %v3443, %v3450
        %v3452 = vcombine.low %v2227, %v2231
        %v3453 = vcombine.low %v2235, %v2239
        %v3454 = vcombine.low %v2243, %v2247
        %v3455 = vcombine.low %v2251, %v2255
        %v3457 = vunpack.c.l.s4 1966171168
        %v3458 = vunpack.c.0.s8 %v3457
        %v3459 = vlaneseq
        %v3460 = vshrl.u32 %v3459, 7
        %v3461 = vsub.s32 %v3458, %v3460
        %v3462 = vrot.slane %v3452, %v3461
        %v3464 = vunpack.c.l.s4 1966171168
        %v3465 = vunpack.c.0.s8 %v3464
        %v3466 = vlaneseq
        %v3467 = vshrl.u32 %v3466, 7
        %v3468 = vsub.s32 %v3465, %v3467
        %v3469 = vrot.slane %v3453, %v3468
        %v3471 = vunpack.c.l.s4 1966171168
        %v3472 = vunpack.c.0.s8 %v3471
        %v3473 = vlaneseq
        %v3474 = vshrl.u32 %v3473, 7
        %v3475 = vsub.s32 %v3472, %v3474
        %v3476 = vrot.slane %v3454, %v3475
        %v3478 = vunpack.c.l.s4 1966171168
        %v3479 = vunpack.c.0.s8 %v3478
        %v3480 = vlaneseq
        %v3481 = vshrl.u32 %v3480, 7
        %v3482 = vsub.s32 %v3479, %v3481
        %v3483 = vrot.slane %v3455, %v3482
        %v3484 = vcombine.low %v3462, %v3469
        %v3485 = vcombine.low %v3476, %v3483
        %v3487 = vunpack.c.l.s4 1966171168
        %v3488 = vunpack.c.0.s8 %v3487
        %v3489 = vlaneseq
        %v3490 = vshrl.u32 %v3489, 7
        %v3491 = vsub.s32 %v3488, %v3490
        %v3492 = vrot.slane %v3484, %v3491
        %v3494 = vunpack.c.l.s4 1966171168
        %v3495 = vunpack.c.0.s8 %v3494
        %v3496 = vlaneseq
        %v3497 = vshrl.u32 %v3496, 7
        %v3498 = vsub.s32 %v3495, %v3497
        %v3499 = vrot.slane %v3485, %v3498
        %v3500 = vcombine.low %v3492, %v3499
        %v3501 = vcombine.low %v2259, %v2263
        %v3502 = vcombine.low %v2267, %v2271
        %v3503 = vcombine.low %v2275, %v2279
        %v3504 = vcombine.low %v2283, %v2287
        %v3506 = vunpack.c.l.s4 1966171168
        %v3507 = vunpack.c.0.s8 %v3506
        %v3508 = vlaneseq
        %v3509 = vshrl.u32 %v3508, 7
        %v3510 = vsub.s32 %v3507, %v3509
        %v3511 = vrot.slane %v3501, %v3510
        %v3513 = vunpack.c.l.s4 1966171168
        %v3514 = vunpack.c.0.s8 %v3513
        %v3515 = vlaneseq
        %v3516 = vshrl.u32 %v3515, 7
        %v3517 = vsub.s32 %v3514, %v3516
        %v3518 = vrot.slane %v3502, %v3517
        %v3520 = vunpack.c.l.s4 1966171168
        %v3521 = vunpack.c.0.s8 %v3520
        %v3522 = vlaneseq
        %v3523 = vshrl.u32 %v3522, 7
        %v3524 = vsub.s32 %v3521, %v3523
        %v3525 = vrot.slane %v3503, %v3524
        %v3527 = vunpack.c.l.s4 1966171168
        %v3528 = vunpack.c.0.s8 %v3527
        %v3529 = vlaneseq
        %v3530 = vshrl.u32 %v3529, 7
        %v3531 = vsub.s32 %v3528, %v3530
        %v3532 = vrot.slane %v3504, %v3531
        %v3533 = vcombine.low %v3511, %v3518
        %v3534 = vcombine.low %v3525, %v3532
        %v3536 = vunpack.c.l.s4 1966171168
        %v3537 = vunpack.c.0.s8 %v3536
        %v3538 = vlaneseq
        %v3539 = vshrl.u32 %v3538, 7
        %v3540 = vsub.s32 %v3537, %v3539
        %v3541 = vrot.slane %v3533, %v3540
        %v3543 = vunpack.c.l.s4 1966171168
        %v3544 = vunpack.c.0.s8 %v3543
        %v3545 = vlaneseq
        %v3546 = vshrl.u32 %v3545, 7
        %v3547 = vsub.s32 %v3544, %v3546
        %v3548 = vrot.slane %v3534, %v3547
        %v3549 = vcombine.low %v3541, %v3548
        %v3550 = vcombine.low %v2291, %v2295
        %v3551 = vcombine.low %v2299, %v2303
        %v3552 = vcombine.low %v2307, %v2311
        %v3553 = vcombine.low %v2315, %v2319
        %v3555 = vunpack.c.l.s4 1966171168
        %v3556 = vunpack.c.0.s8 %v3555
        %v3557 = vlaneseq
        %v3558 = vshrl.u32 %v3557, 7
        %v3559 = vsub.s32 %v3556, %v3558
        %v3560 = vrot.slane %v3550, %v3559
        %v3562 = vunpack.c.l.s4 1966171168
        %v3563 = vunpack.c.0.s8 %v3562
        %v3564 = vlaneseq
        %v3565 = vshrl.u32 %v3564, 7
        %v3566 = vsub.s32 %v3563, %v3565
        %v3567 = vrot.slane %v3551, %v3566
        %v3569 = vunpack.c.l.s4 1966171168
        %v3570 = vunpack.c.0.s8 %v3569
        %v3571 = vlaneseq
        %v3572 = vshrl.u32 %v3571, 7
        %v3573 = vsub.s32 %v3570, %v3572
        %v3574 = vrot.slane %v3552, %v3573
        %v3576 = vunpack.c.l.s4 1966171168
        %v3577 = vunpack.c.0.s8 %v3576
        %v3578 = vlaneseq
        %v3579 = vshrl.u32 %v3578, 7
        %v3580 = vsub.s32 %v3577, %v3579
        %v3581 = vrot.slane %v3553, %v3580
        %v3582 = vcombine.low %v3560, %v3567
        %v3583 = vcombine.low %v3574, %v3581
        %v3585 = vunpack.c.l.s4 1966171168
        %v3586 = vunpack.c.0.s8 %v3585
        %v3587 = vlaneseq
        %v3588 = vshrl.u32 %v3587, 7
        %v3589 = vsub.s32 %v3586, %v3588
        %v3590 = vrot.slane %v3582, %v3589
        %v3592 = vunpack.c.l.s4 1966171168
        %v3593 = vunpack.c.0.s8 %v3592
        %v3594 = vlaneseq
        %v3595 = vshrl.u32 %v3594, 7
        %v3596 = vsub.s32 %v3593, %v3595
        %v3597 = vrot.slane %v3583, %v3596
        %v3598 = vcombine.low %v3590, %v3597
        %v3599 = vcombine.low %v2323, %v2327
        %v3600 = vcombine.low %v2331, %v2335
        %v3601 = vcombine.low %v2339, %v2343
        %v3602 = vcombine.low %v2347, %v2351
        %v3604 = vunpack.c.l.s4 1966171168
        %v3605 = vunpack.c.0.s8 %v3604
        %v3606 = vlaneseq
        %v3607 = vshrl.u32 %v3606, 7
        %v3608 = vsub.s32 %v3605, %v3607
        %v3609 = vrot.slane %v3599, %v3608
        %v3611 = vunpack.c.l.s4 1966171168
        %v3612 = vunpack.c.0.s8 %v3611
        %v3613 = vlaneseq
        %v3614 = vshrl.u32 %v3613, 7
        %v3615 = vsub.s32 %v3612, %v3614
        %v3616 = vrot.slane %v3600, %v3615
        %v3618 = vunpack.c.l.s4 1966171168
        %v3619 = vunpack.c.0.s8 %v3618
        %v3620 = vlaneseq
        %v3621 = vshrl.u32 %v3620, 7
        %v3622 = vsub.s32 %v3619, %v3621
        %v3623 = vrot.slane %v3601, %v3622
        %v3625 = vunpack.c.l.s4 1966171168
        %v3626 = vunpack.c.0.s8 %v3625
        %v3627 = vlaneseq
        %v3628 = vshrl.u32 %v3627, 7
        %v3629 = vsub.s32 %v3626, %v3628
        %v3630 = vrot.slane %v3602, %v3629
        %v3631 = vcombine.low %v3609, %v3616
        %v3632 = vcombine.low %v3623, %v3630
        %v3634 = vunpack.c.l.s4 1966171168
        %v3635 = vunpack.c.0.s8 %v3634
        %v3636 = vlaneseq
        %v3637 = vshrl.u32 %v3636, 7
        %v3638 = vsub.s32 %v3635, %v3637
        %v3639 = vrot.slane %v3631, %v3638
        %v3641 = vunpack.c.l.s4 1966171168
        %v3642 = vunpack.c.0.s8 %v3641
        %v3643 = vlaneseq
        %v3644 = vshrl.u32 %v3643, 7
        %v3645 = vsub.s32 %v3642, %v3644
        %v3646 = vrot.slane %v3632, %v3645
        %v3647 = vcombine.low %v3639, %v3646
        %v3648 = vcombine.low %v2355, %v2359
        %v3649 = vcombine.low %v2363, %v2367
        %v3650 = vcombine.low %v2371, %v2375
        %v3651 = vcombine.low %v2379, %v2383
        %v3653 = vunpack.c.l.s4 1966171168
        %v3654 = vunpack.c.0.s8 %v3653
        %v3655 = vlaneseq
        %v3656 = vshrl.u32 %v3655, 7
        %v3657 = vsub.s32 %v3654, %v3656
        %v3658 = vrot.slane %v3648, %v3657
        %v3660 = vunpack.c.l.s4 1966171168
        %v3661 = vunpack.c.0.s8 %v3660
        %v3662 = vlaneseq
        %v3663 = vshrl.u32 %v3662, 7
        %v3664 = vsub.s32 %v3661, %v3663
        %v3665 = vrot.slane %v3649, %v3664
        %v3667 = vunpack.c.l.s4 1966171168
        %v3668 = vunpack.c.0.s8 %v3667
        %v3669 = vlaneseq
        %v3670 = vshrl.u32 %v3669, 7
        %v3671 = vsub.s32 %v3668, %v3670
        %v3672 = vrot.slane %v3650, %v3671
        %v3674 = vunpack.c.l.s4 1966171168
        %v3675 = vunpack.c.0.s8 %v3674
        %v3676 = vlaneseq
        %v3677 = vshrl.u32 %v3676, 7
        %v3678 = vsub.s32 %v3675, %v3677
        %v3679 = vrot.slane %v3651, %v3678
        %v3680 = vcombine.low %v3658, %v3665
        %v3681 = vcombine.low %v3672, %v3679
        %v3683 = vunpack.c.l.s4 1966171168
        %v3684 = vunpack.c.0.s8 %v3683
        %v3685 = vlaneseq
        %v3686 = vshrl.u32 %v3685, 7
        %v3687 = vsub.s32 %v3684, %v3686
        %v3688 = vrot.slane %v3680, %v3687
        %v3690 = vunpack.c.l.s4 1966171168
        %v3691 = vunpack.c.0.s8 %v3690
        %v3692 = vlaneseq
        %v3693 = vshrl.u32 %v3692, 7
        %v3694 = vsub.s32 %v3691, %v3693
        %v3695 = vrot.slane %v3681, %v3694
        %v3696 = vcombine.low %v3688, %v3695
        %v3697 = vcombine.low %v2387, %v2391
        %v3698 = vcombine.low %v2395, %v2399
        %v3699 = vcombine.low %v2403, %v2407
        %v3700 = vcombine.low %v2411, %v2415
        %v3702 = vunpack.c.l.s4 1966171168
        %v3703 = vunpack.c.0.s8 %v3702
        %v3704 = vlaneseq
        %v3705 = vshrl.u32 %v3704, 7
        %v3706 = vsub.s32 %v3703, %v3705
        %v3707 = vrot.slane %v3697, %v3706
        %v3709 = vunpack.c.l.s4 1966171168
        %v3710 = vunpack.c.0.s8 %v3709
        %v3711 = vlaneseq
        %v3712 = vshrl.u32 %v3711, 7
        %v3713 = vsub.s32 %v3710, %v3712
        %v3714 = vrot.slane %v3698, %v3713
        %v3716 = vunpack.c.l.s4 1966171168
        %v3717 = vunpack.c.0.s8 %v3716
        %v3718 = vlaneseq
        %v3719 = vshrl.u32 %v3718, 7
        %v3720 = vsub.s32 %v3717, %v3719
        %v3721 = vrot.slane %v3699, %v3720
        %v3723 = vunpack.c.l.s4 1966171168
        %v3724 = vunpack.c.0.s8 %v3723
        %v3725 = vlaneseq
        %v3726 = vshrl.u32 %v3725, 7
        %v3727 = vsub.s32 %v3724, %v3726
        %v3728 = vrot.slane %v3700, %v3727
        %v3729 = vcombine.low %v3707, %v3714
        %v3730 = vcombine.low %v3721, %v3728
        %v3732 = vunpack.c.l.s4 1966171168
        %v3733 = vunpack.c.0.s8 %v3732
        %v3734 = vlaneseq
        %v3735 = vshrl.u32 %v3734, 7
        %v3736 = vsub.s32 %v3733, %v3735
        %v3737 = vrot.slane %v3729, %v3736
        %v3739 = vunpack.c.l.s4 1966171168
        %v3740 = vunpack.c.0.s8 %v3739
        %v3741 = vlaneseq
        %v3742 = vshrl.u32 %v3741, 7
        %v3743 = vsub.s32 %v3740, %v3742
        %v3744 = vrot.slane %v3730, %v3743
        %v3745 = vcombine.low %v3737, %v3744
        %v3746 = vcombine.low %v2419, %v2423
        %v3747 = vcombine.low %v2427, %v2431
        %v3748 = vcombine.low %v2435, %v2439
        %v3749 = vcombine.low %v2443, %v2447
        %v3751 = vunpack.c.l.s4 1966171168
        %v3752 = vunpack.c.0.s8 %v3751
        %v3753 = vlaneseq
        %v3754 = vshrl.u32 %v3753, 7
        %v3755 = vsub.s32 %v3752, %v3754
        %v3756 = vrot.slane %v3746, %v3755
        %v3758 = vunpack.c.l.s4 1966171168
        %v3759 = vunpack.c.0.s8 %v3758
        %v3760 = vlaneseq
        %v3761 = vshrl.u32 %v3760, 7
        %v3762 = vsub.s32 %v3759, %v3761
        %v3763 = vrot.slane %v3747, %v3762
        %v3765 = vunpack.c.l.s4 1966171168
        %v3766 = vunpack.c.0.s8 %v3765
        %v3767 = vlaneseq
        %v3768 = vshrl.u32 %v3767, 7
        %v3769 = vsub.s32 %v3766, %v3768
        %v3770 = vrot.slane %v3748, %v3769
        %v3772 = vunpack.c.l.s4 1966171168
        %v3773 = vunpack.c.0.s8 %v3772
        %v3774 = vlaneseq
        %v3775 = vshrl.u32 %v3774, 7
        %v3776 = vsub.s32 %v3773, %v3775
        %v3777 = vrot.slane %v3749, %v3776
        %v3778 = vcombine.low %v3756, %v3763
        %v3779 = vcombine.low %v3770, %v3777
        %v3781 = vunpack.c.l.s4 1966171168
        %v3782 = vunpack.c.0.s8 %v3781
        %v3783 = vlaneseq
        %v3784 = vshrl.u32 %v3783, 7
        %v3785 = vsub.s32 %v3782, %v3784
        %v3786 = vrot.slane %v3778, %v3785
        %v3788 = vunpack.c.l.s4 1966171168
        %v3789 = vunpack.c.0.s8 %v3788
        %v3790 = vlaneseq
        %v3791 = vshrl.u32 %v3790, 7
        %v3792 = vsub.s32 %v3789, %v3791
        %v3793 = vrot.slane %v3779, %v3792
        %v3794 = vcombine.low %v3786, %v3793
        %v3795 = vcombine.low %v2451, %v2455
        %v3796 = vcombine.low %v2459, %v2463
        %v3797 = vcombine.low %v2467, %v2471
        %v3798 = vcombine.low %v2475, %v2479
        %v3800 = vunpack.c.l.s4 1966171168
        %v3801 = vunpack.c.0.s8 %v3800
        %v3802 = vlaneseq
        %v3803 = vshrl.u32 %v3802, 7
        %v3804 = vsub.s32 %v3801, %v3803
        %v3805 = vrot.slane %v3795, %v3804
        %v3807 = vunpack.c.l.s4 1966171168
        %v3808 = vunpack.c.0.s8 %v3807
        %v3809 = vlaneseq
        %v3810 = vshrl.u32 %v3809, 7
        %v3811 = vsub.s32 %v3808, %v3810
        %v3812 = vrot.slane %v3796, %v3811
        %v3814 = vunpack.c.l.s4 1966171168
        %v3815 = vunpack.c.0.s8 %v3814
        %v3816 = vlaneseq
        %v3817 = vshrl.u32 %v3816, 7
        %v3818 = vsub.s32 %v3815, %v3817
        %v3819 = vrot.slane %v3797, %v3818
        %v3821 = vunpack.c.l.s4 1966171168
        %v3822 = vunpack.c.0.s8 %v3821
        %v3823 = vlaneseq
        %v3824 = vshrl.u32 %v3823, 7
        %v3825 = vsub.s32 %v3822, %v3824
        %v3826 = vrot.slane %v3798, %v3825
        %v3827 = vcombine.low %v3805, %v3812
        %v3828 = vcombine.low %v3819, %v3826
        %v3830 = vunpack.c.l.s4 1966171168
        %v3831 = vunpack.c.0.s8 %v3830
        %v3832 = vlaneseq
        %v3833 = vshrl.u32 %v3832, 7
        %v3834 = vsub.s32 %v3831, %v3833
        %v3835 = vrot.slane %v3827, %v3834
        %v3837 = vunpack.c.l.s4 1966171168
        %v3838 = vunpack.c.0.s8 %v3837
        %v3839 = vlaneseq
        %v3840 = vshrl.u32 %v3839, 7
        %v3841 = vsub.s32 %v3838, %v3840
        %v3842 = vrot.slane %v3828, %v3841
        %v3843 = vcombine.low %v3835, %v3842
        %v3844 = vcombine.low %v2483, %v2487
        %v3845 = vcombine.low %v2491, %v2495
        %v3846 = vcombine.low %v2499, %v2503
        %v3847 = vcombine.low %v2507, %v2511
        %v3849 = vunpack.c.l.s4 1966171168
        %v3850 = vunpack.c.0.s8 %v3849
        %v3851 = vlaneseq
        %v3852 = vshrl.u32 %v3851, 7
        %v3853 = vsub.s32 %v3850, %v3852
        %v3854 = vrot.slane %v3844, %v3853
        %v3856 = vunpack.c.l.s4 1966171168
        %v3857 = vunpack.c.0.s8 %v3856
        %v3858 = vlaneseq
        %v3859 = vshrl.u32 %v3858, 7
        %v3860 = vsub.s32 %v3857, %v3859
        %v3861 = vrot.slane %v3845, %v3860
        %v3863 = vunpack.c.l.s4 1966171168
        %v3864 = vunpack.c.0.s8 %v3863
        %v3865 = vlaneseq
        %v3866 = vshrl.u32 %v3865, 7
        %v3867 = vsub.s32 %v3864, %v3866
        %v3868 = vrot.slane %v3846, %v3867
        %v3870 = vunpack.c.l.s4 1966171168
        %v3871 = vunpack.c.0.s8 %v3870
        %v3872 = vlaneseq
        %v3873 = vshrl.u32 %v3872, 7
        %v3874 = vsub.s32 %v3871, %v3873
        %v3875 = vrot.slane %v3847, %v3874
        %v3876 = vcombine.low %v3854, %v3861
        %v3877 = vcombine.low %v3868, %v3875
        %v3879 = vunpack.c.l.s4 1966171168
        %v3880 = vunpack.c.0.s8 %v3879
        %v3881 = vlaneseq
        %v3882 = vshrl.u32 %v3881, 7
        %v3883 = vsub.s32 %v3880, %v3882
        %v3884 = vrot.slane %v3876, %v3883
        %v3886 = vunpack.c.l.s4 1966171168
        %v3887 = vunpack.c.0.s8 %v3886
        %v3888 = vlaneseq
        %v3889 = vshrl.u32 %v3888, 7
        %v3890 = vsub.s32 %v3887, %v3889
        %v3891 = vrot.slane %v3877, %v3890
        %v3892 = vcombine.low %v3884, %v3891
        %v3893 = vcombine.low %v2515, %v2519
        %v3894 = vcombine.low %v2523, %v2527
        %v3895 = vcombine.low %v2531, %v2535
        %v3896 = vcombine.low %v2539, %v2543
        %v3898 = vunpack.c.l.s4 1966171168
        %v3899 = vunpack.c.0.s8 %v3898
        %v3900 = vlaneseq
        %v3901 = vshrl.u32 %v3900, 7
        %v3902 = vsub.s32 %v3899, %v3901
        %v3903 = vrot.slane %v3893, %v3902
        %v3905 = vunpack.c.l.s4 1966171168
        %v3906 = vunpack.c.0.s8 %v3905
        %v3907 = vlaneseq
        %v3908 = vshrl.u32 %v3907, 7
        %v3909 = vsub.s32 %v3906, %v3908
        %v3910 = vrot.slane %v3894, %v3909
        %v3912 = vunpack.c.l.s4 1966171168
        %v3913 = vunpack.c.0.s8 %v3912
        %v3914 = vlaneseq
        %v3915 = vshrl.u32 %v3914, 7
        %v3916 = vsub.s32 %v3913, %v3915
        %v3917 = vrot.slane %v3895, %v3916
        %v3919 = vunpack.c.l.s4 1966171168
        %v3920 = vunpack.c.0.s8 %v3919
        %v3921 = vlaneseq
        %v3922 = vshrl.u32 %v3921, 7
        %v3923 = vsub.s32 %v3920, %v3922
        %v3924 = vrot.slane %v3896, %v3923
        %v3925 = vcombine.low %v3903, %v3910
        %v3926 = vcombine.low %v3917, %v3924
        %v3928 = vunpack.c.l.s4 1966171168
        %v3929 = vunpack.c.0.s8 %v3928
        %v3930 = vlaneseq
        %v3931 = vshrl.u32 %v3930, 7
        %v3932 = vsub.s32 %v3929, %v3931
        %v3933 = vrot.slane %v3925, %v3932
        %v3935 = vunpack.c.l.s4 1966171168
        %v3936 = vunpack.c.0.s8 %v3935
        %v3937 = vlaneseq
        %v3938 = vshrl.u32 %v3937, 7
        %v3939 = vsub.s32 %v3936, %v3938
        %v3940 = vrot.slane %v3926, %v3939
        %v3941 = vcombine.low %v3933, %v3940
        %v3942 = vcombine.low %v2547, %v2551
        %v3943 = vcombine.low %v2555, %v2559
        %v3944 = vcombine.low %v2563, %v2567
        %v3945 = vcombine.low %v2571, %v2575
        %v3947 = vunpack.c.l.s4 1966171168
        %v3948 = vunpack.c.0.s8 %v3947
        %v3949 = vlaneseq
        %v3950 = vshrl.u32 %v3949, 7
        %v3951 = vsub.s32 %v3948, %v3950
        %v3952 = vrot.slane %v3942, %v3951
        %v3954 = vunpack.c.l.s4 1966171168
        %v3955 = vunpack.c.0.s8 %v3954
        %v3956 = vlaneseq
        %v3957 = vshrl.u32 %v3956, 7
        %v3958 = vsub.s32 %v3955, %v3957
        %v3959 = vrot.slane %v3943, %v3958
        %v3961 = vunpack.c.l.s4 1966171168
        %v3962 = vunpack.c.0.s8 %v3961
        %v3963 = vlaneseq
        %v3964 = vshrl.u32 %v3963, 7
        %v3965 = vsub.s32 %v3962, %v3964
        %v3966 = vrot.slane %v3944, %v3965
        %v3968 = vunpack.c.l.s4 1966171168
        %v3969 = vunpack.c.0.s8 %v3968
        %v3970 = vlaneseq
        %v3971 = vshrl.u32 %v3970, 7
        %v3972 = vsub.s32 %v3969, %v3971
        %v3973 = vrot.slane %v3945, %v3972
        %v3974 = vcombine.low %v3952, %v3959
        %v3975 = vcombine.low %v3966, %v3973
        %v3977 = vunpack.c.l.s4 1966171168
        %v3978 = vunpack.c.0.s8 %v3977
        %v3979 = vlaneseq
        %v3980 = vshrl.u32 %v3979, 7
        %v3981 = vsub.s32 %v3978, %v3980
        %v3982 = vrot.slane %v3974, %v3981
        %v3984 = vunpack.c.l.s4 1966171168
        %v3985 = vunpack.c.0.s8 %v3984
        %v3986 = vlaneseq
        %v3987 = vshrl.u32 %v3986, 7
        %v3988 = vsub.s32 %v3985, %v3987
        %v3989 = vrot.slane %v3975, %v3988
        %v3990 = vcombine.low %v3982, %v3989
        %v3991 = vcombine.low %v2579, %v2583
        %v3992 = vcombine.low %v2587, %v2591
        %v3993 = vcombine.low %v2595, %v2599
        %v3994 = vcombine.low %v2603, %v2607
        %v3996 = vunpack.c.l.s4 1966171168
        %v3997 = vunpack.c.0.s8 %v3996
        %v3998 = vlaneseq
        %v3999 = vshrl.u32 %v3998, 7
        %v4000 = vsub.s32 %v3997, %v3999
        %v4001 = vrot.slane %v3991, %v4000
        %v4003 = vunpack.c.l.s4 1966171168
        %v4004 = vunpack.c.0.s8 %v4003
        %v4005 = vlaneseq
        %v4006 = vshrl.u32 %v4005, 7
        %v4007 = vsub.s32 %v4004, %v4006
        %v4008 = vrot.slane %v3992, %v4007
        %v4010 = vunpack.c.l.s4 1966171168
        %v4011 = vunpack.c.0.s8 %v4010
        %v4012 = vlaneseq
        %v4013 = vshrl.u32 %v4012, 7
        %v4014 = vsub.s32 %v4011, %v4013
        %v4015 = vrot.slane %v3993, %v4014
        %v4017 = vunpack.c.l.s4 1966171168
        %v4018 = vunpack.c.0.s8 %v4017
        %v4019 = vlaneseq
        %v4020 = vshrl.u32 %v4019, 7
        %v4021 = vsub.s32 %v4018, %v4020
        %v4022 = vrot.slane %v3994, %v4021
        %v4023 = vcombine.low %v4001, %v4008
        %v4024 = vcombine.low %v4015, %v4022
        %v4026 = vunpack.c.l.s4 1966171168
        %v4027 = vunpack.c.0.s8 %v4026
        %v4028 = vlaneseq
        %v4029 = vshrl.u32 %v4028, 7
        %v4030 = vsub.s32 %v4027, %v4029
        %v4031 = vrot.slane %v4023, %v4030
        %v4033 = vunpack.c.l.s4 1966171168
        %v4034 = vunpack.c.0.s8 %v4033
        %v4035 = vlaneseq
        %v4036 = vshrl.u32 %v4035, 7
        %v4037 = vsub.s32 %v4034, %v4036
        %v4038 = vrot.slane %v4024, %v4037
        %v4039 = vcombine.low %v4031, %v4038
        %v4040 = vcombine.low %v2611, %v2615
        %v4041 = vcombine.low %v2619, %v2623
        %v4042 = vcombine.low %v2627, %v2631
        %v4043 = vcombine.low %v2635, %v2639
        %v4045 = vunpack.c.l.s4 1966171168
        %v4046 = vunpack.c.0.s8 %v4045
        %v4047 = vlaneseq
        %v4048 = vshrl.u32 %v4047, 7
        %v4049 = vsub.s32 %v4046, %v4048
        %v4050 = vrot.slane %v4040, %v4049
        %v4052 = vunpack.c.l.s4 1966171168
        %v4053 = vunpack.c.0.s8 %v4052
        %v4054 = vlaneseq
        %v4055 = vshrl.u32 %v4054, 7
        %v4056 = vsub.s32 %v4053, %v4055
        %v4057 = vrot.slane %v4041, %v4056
        %v4059 = vunpack.c.l.s4 1966171168
        %v4060 = vunpack.c.0.s8 %v4059
        %v4061 = vlaneseq
        %v4062 = vshrl.u32 %v4061, 7
        %v4063 = vsub.s32 %v4060, %v4062
        %v4064 = vrot.slane %v4042, %v4063
        %v4066 = vunpack.c.l.s4 1966171168
        %v4067 = vunpack.c.0.s8 %v4066
        %v4068 = vlaneseq
        %v4069 = vshrl.u32 %v4068, 7
        %v4070 = vsub.s32 %v4067, %v4069
        %v4071 = vrot.slane %v4043, %v4070
        %v4072 = vcombine.low %v4050, %v4057
        %v4073 = vcombine.low %v4064, %v4071
        %v4075 = vunpack.c.l.s4 1966171168
        %v4076 = vunpack.c.0.s8 %v4075
        %v4077 = vlaneseq
        %v4078 = vshrl.u32 %v4077, 7
        %v4079 = vsub.s32 %v4076, %v4078
        %v4080 = vrot.slane %v4072, %v4079
        %v4082 = vunpack.c.l.s4 1966171168
        %v4083 = vunpack.c.0.s8 %v4082
        %v4084 = vlaneseq
        %v4085 = vshrl.u32 %v4084, 7
        %v4086 = vsub.s32 %v4083, %v4085
        %v4087 = vrot.slane %v4073, %v4086
        %v4088 = vcombine.low %v4080, %v4087
        %v4089 = vcombine.low %v2643, %v2647
        %v4090 = vcombine.low %v2651, %v2655
        %v4091 = vcombine.low %v2659, %v2663
        %v4092 = vcombine.low %v2667, %v2671
        %v4094 = vunpack.c.l.s4 1966171168
        %v4095 = vunpack.c.0.s8 %v4094
        %v4096 = vlaneseq
        %v4097 = vshrl.u32 %v4096, 7
        %v4098 = vsub.s32 %v4095, %v4097
        %v4099 = vrot.slane %v4089, %v4098
        %v4101 = vunpack.c.l.s4 1966171168
        %v4102 = vunpack.c.0.s8 %v4101
        %v4103 = vlaneseq
        %v4104 = vshrl.u32 %v4103, 7
        %v4105 = vsub.s32 %v4102, %v4104
        %v4106 = vrot.slane %v4090, %v4105
        %v4108 = vunpack.c.l.s4 1966171168
        %v4109 = vunpack.c.0.s8 %v4108
        %v4110 = vlaneseq
        %v4111 = vshrl.u32 %v4110, 7
        %v4112 = vsub.s32 %v4109, %v4111
        %v4113 = vrot.slane %v4091, %v4112
        %v4115 = vunpack.c.l.s4 1966171168
        %v4116 = vunpack.c.0.s8 %v4115
        %v4117 = vlaneseq
        %v4118 = vshrl.u32 %v4117, 7
        %v4119 = vsub.s32 %v4116, %v4118
        %v4120 = vrot.slane %v4092, %v4119
        %v4121 = vcombine.low %v4099, %v4106
        %v4122 = vcombine.low %v4113, %v4120
        %v4124 = vunpack.c.l.s4 1966171168
        %v4125 = vunpack.c.0.s8 %v4124
        %v4126 = vlaneseq
        %v4127 = vshrl.u32 %v4126, 7
        %v4128 = vsub.s32 %v4125, %v4127
        %v4129 = vrot.slane %v4121, %v4128
        %v4131 = vunpack.c.l.s4 1966171168
        %v4132 = vunpack.c.0.s8 %v4131
        %v4133 = vlaneseq
        %v4134 = vshrl.u32 %v4133, 7
        %v4135 = vsub.s32 %v4132, %v4134
        %v4136 = vrot.slane %v4122, %v4135
        %v4137 = vcombine.low %v4129, %v4136
        %v4138 = vcombine.low %v2675, %v2679
        %v4139 = vcombine.low %v2683, %v2687
        %v4140 = vcombine.low %v2691, %v2695
        %v4141 = vcombine.low %v2699, %v2703
        %v4143 = vunpack.c.l.s4 1966171168
        %v4144 = vunpack.c.0.s8 %v4143
        %v4145 = vlaneseq
        %v4146 = vshrl.u32 %v4145, 7
        %v4147 = vsub.s32 %v4144, %v4146
        %v4148 = vrot.slane %v4138, %v4147
        %v4150 = vunpack.c.l.s4 1966171168
        %v4151 = vunpack.c.0.s8 %v4150
        %v4152 = vlaneseq
        %v4153 = vshrl.u32 %v4152, 7
        %v4154 = vsub.s32 %v4151, %v4153
        %v4155 = vrot.slane %v4139, %v4154
        %v4157 = vunpack.c.l.s4 1966171168
        %v4158 = vunpack.c.0.s8 %v4157
        %v4159 = vlaneseq
        %v4160 = vshrl.u32 %v4159, 7
        %v4161 = vsub.s32 %v4158, %v4160
        %v4162 = vrot.slane %v4140, %v4161
        %v4164 = vunpack.c.l.s4 1966171168
        %v4165 = vunpack.c.0.s8 %v4164
        %v4166 = vlaneseq
        %v4167 = vshrl.u32 %v4166, 7
        %v4168 = vsub.s32 %v4165, %v4167
        %v4169 = vrot.slane %v4141, %v4168
        %v4170 = vcombine.low %v4148, %v4155
        %v4171 = vcombine.low %v4162, %v4169
        %v4173 = vunpack.c.l.s4 1966171168
        %v4174 = vunpack.c.0.s8 %v4173
        %v4175 = vlaneseq
        %v4176 = vshrl.u32 %v4175, 7
        %v4177 = vsub.s32 %v4174, %v4176
        %v4178 = vrot.slane %v4170, %v4177
        %v4180 = vunpack.c.l.s4 1966171168
        %v4181 = vunpack.c.0.s8 %v4180
        %v4182 = vlaneseq
        %v4183 = vshrl.u32 %v4182, 7
        %v4184 = vsub.s32 %v4181, %v4183
        %v4185 = vrot.slane %v4171, %v4184
        %v4186 = vcombine.low %v4178, %v4185
        %v4187 = vcombine.low %v2707, %v2711
        %v4188 = vcombine.low %v2715, %v2719
        %v4189 = vcombine.low %v2723, %v2727
        %v4190 = vcombine.low %v2731, %v2735
        %v4192 = vunpack.c.l.s4 1966171168
        %v4193 = vunpack.c.0.s8 %v4192
        %v4194 = vlaneseq
        %v4195 = vshrl.u32 %v4194, 7
        %v4196 = vsub.s32 %v4193, %v4195
        %v4197 = vrot.slane %v4187, %v4196
        %v4199 = vunpack.c.l.s4 1966171168
        %v4200 = vunpack.c.0.s8 %v4199
        %v4201 = vlaneseq
        %v4202 = vshrl.u32 %v4201, 7
        %v4203 = vsub.s32 %v4200, %v4202
        %v4204 = vrot.slane %v4188, %v4203
        %v4206 = vunpack.c.l.s4 1966171168
        %v4207 = vunpack.c.0.s8 %v4206
        %v4208 = vlaneseq
        %v4209 = vshrl.u32 %v4208, 7
        %v4210 = vsub.s32 %v4207, %v4209
        %v4211 = vrot.slane %v4189, %v4210
        %v4213 = vunpack.c.l.s4 1966171168
        %v4214 = vunpack.c.0.s8 %v4213
        %v4215 = vlaneseq
        %v4216 = vshrl.u32 %v4215, 7
        %v4217 = vsub.s32 %v4214, %v4216
        %v4218 = vrot.slane %v4190, %v4217
        %v4219 = vcombine.low %v4197, %v4204
        %v4220 = vcombine.low %v4211, %v4218
        %v4222 = vunpack.c.l.s4 1966171168
        %v4223 = vunpack.c.0.s8 %v4222
        %v4224 = vlaneseq
        %v4225 = vshrl.u32 %v4224, 7
        %v4226 = vsub.s32 %v4223, %v4225
        %v4227 = vrot.slane %v4219, %v4226
        %v4229 = vunpack.c.l.s4 1966171168
        %v4230 = vunpack.c.0.s8 %v4229
        %v4231 = vlaneseq
        %v4232 = vshrl.u32 %v4231, 7
        %v4233 = vsub.s32 %v4230, %v4232
        %v4234 = vrot.slane %v4220, %v4233
        %v4235 = vcombine.low %v4227, %v4234
        %v4236 = vcombine.low %v2739, %v2743
        %v4237 = vcombine.low %v2747, %v2751
        %v4238 = vcombine.low %v2755, %v2759
        %v4239 = vcombine.low %v2763, %v2767
        %v4241 = vunpack.c.l.s4 1966171168
        %v4242 = vunpack.c.0.s8 %v4241
        %v4243 = vlaneseq
        %v4244 = vshrl.u32 %v4243, 7
        %v4245 = vsub.s32 %v4242, %v4244
        %v4246 = vrot.slane %v4236, %v4245
        %v4248 = vunpack.c.l.s4 1966171168
        %v4249 = vunpack.c.0.s8 %v4248
        %v4250 = vlaneseq
        %v4251 = vshrl.u32 %v4250, 7
        %v4252 = vsub.s32 %v4249, %v4251
        %v4253 = vrot.slane %v4237, %v4252
        %v4255 = vunpack.c.l.s4 1966171168
        %v4256 = vunpack.c.0.s8 %v4255
        %v4257 = vlaneseq
        %v4258 = vshrl.u32 %v4257, 7
        %v4259 = vsub.s32 %v4256, %v4258
        %v4260 = vrot.slane %v4238, %v4259
        %v4262 = vunpack.c.l.s4 1966171168
        %v4263 = vunpack.c.0.s8 %v4262
        %v4264 = vlaneseq
        %v4265 = vshrl.u32 %v4264, 7
        %v4266 = vsub.s32 %v4263, %v4265
        %v4267 = vrot.slane %v4239, %v4266
        %v4268 = vcombine.low %v4246, %v4253
        %v4269 = vcombine.low %v4260, %v4267
        %v4271 = vunpack.c.l.s4 1966171168
        %v4272 = vunpack.c.0.s8 %v4271
        %v4273 = vlaneseq
        %v4274 = vshrl.u32 %v4273, 7
        %v4275 = vsub.s32 %v4272, %v4274
        %v4276 = vrot.slane %v4268, %v4275
        %v4278 = vunpack.c.l.s4 1966171168
        %v4279 = vunpack.c.0.s8 %v4278
        %v4280 = vlaneseq
        %v4281 = vshrl.u32 %v4280, 7
        %v4282 = vsub.s32 %v4279, %v4281
        %v4283 = vrot.slane %v4269, %v4282
        %v4284 = vcombine.low %v4276, %v4283
        %v4285 = vcombine.low %v2771, %v2775
        %v4286 = vcombine.low %v2779, %v2783
        %v4287 = vcombine.low %v2787, %v2791
        %v4288 = vcombine.low %v2795, %v2799
        %v4290 = vunpack.c.l.s4 1966171168
        %v4291 = vunpack.c.0.s8 %v4290
        %v4292 = vlaneseq
        %v4293 = vshrl.u32 %v4292, 7
        %v4294 = vsub.s32 %v4291, %v4293
        %v4295 = vrot.slane %v4285, %v4294
        %v4297 = vunpack.c.l.s4 1966171168
        %v4298 = vunpack.c.0.s8 %v4297
        %v4299 = vlaneseq
        %v4300 = vshrl.u32 %v4299, 7
        %v4301 = vsub.s32 %v4298, %v4300
        %v4302 = vrot.slane %v4286, %v4301
        %v4304 = vunpack.c.l.s4 1966171168
        %v4305 = vunpack.c.0.s8 %v4304
        %v4306 = vlaneseq
        %v4307 = vshrl.u32 %v4306, 7
        %v4308 = vsub.s32 %v4305, %v4307
        %v4309 = vrot.slane %v4287, %v4308
        %v4311 = vunpack.c.l.s4 1966171168
        %v4312 = vunpack.c.0.s8 %v4311
        %v4313 = vlaneseq
        %v4314 = vshrl.u32 %v4313, 7
        %v4315 = vsub.s32 %v4312, %v4314
        %v4316 = vrot.slane %v4288, %v4315
        %v4317 = vcombine.low %v4295, %v4302
        %v4318 = vcombine.low %v4309, %v4316
        %v4320 = vunpack.c.l.s4 1966171168
        %v4321 = vunpack.c.0.s8 %v4320
        %v4322 = vlaneseq
        %v4323 = vshrl.u32 %v4322, 7
        %v4324 = vsub.s32 %v4321, %v4323
        %v4325 = vrot.slane %v4317, %v4324
        %v4327 = vunpack.c.l.s4 1966171168
        %v4328 = vunpack.c.0.s8 %v4327
        %v4329 = vlaneseq
        %v4330 = vshrl.u32 %v4329, 7
        %v4331 = vsub.s32 %v4328, %v4330
        %v4332 = vrot.slane %v4318, %v4331
        %v4333 = vcombine.low %v4325, %v4332
        %v4334 = vcombine.low %v2803, %v2807
        %v4335 = vcombine.low %v2811, %v2815
        %v4336 = vcombine.low %v2819, %v2823
        %v4337 = vcombine.low %v2827, %v2831
        %v4339 = vunpack.c.l.s4 1966171168
        %v4340 = vunpack.c.0.s8 %v4339
        %v4341 = vlaneseq
        %v4342 = vshrl.u32 %v4341, 7
        %v4343 = vsub.s32 %v4340, %v4342
        %v4344 = vrot.slane %v4334, %v4343
        %v4346 = vunpack.c.l.s4 1966171168
        %v4347 = vunpack.c.0.s8 %v4346
        %v4348 = vlaneseq
        %v4349 = vshrl.u32 %v4348, 7
        %v4350 = vsub.s32 %v4347, %v4349
        %v4351 = vrot.slane %v4335, %v4350
        %v4353 = vunpack.c.l.s4 1966171168
        %v4354 = vunpack.c.0.s8 %v4353
        %v4355 = vlaneseq
        %v4356 = vshrl.u32 %v4355, 7
        %v4357 = vsub.s32 %v4354, %v4356
        %v4358 = vrot.slane %v4336, %v4357
        %v4360 = vunpack.c.l.s4 1966171168
        %v4361 = vunpack.c.0.s8 %v4360
        %v4362 = vlaneseq
        %v4363 = vshrl.u32 %v4362, 7
        %v4364 = vsub.s32 %v4361, %v4363
        %v4365 = vrot.slane %v4337, %v4364
        %v4366 = vcombine.low %v4344, %v4351
        %v4367 = vcombine.low %v4358, %v4365
        %v4369 = vunpack.c.l.s4 1966171168
        %v4370 = vunpack.c.0.s8 %v4369
        %v4371 = vlaneseq
        %v4372 = vshrl.u32 %v4371, 7
        %v4373 = vsub.s32 %v4370, %v4372
        %v4374 = vrot.slane %v4366, %v4373
        %v4376 = vunpack.c.l.s4 1966171168
        %v4377 = vunpack.c.0.s8 %v4376
        %v4378 = vlaneseq
        %v4379 = vshrl.u32 %v4378, 7
        %v4380 = vsub.s32 %v4377, %v4379
        %v4381 = vrot.slane %v4367, %v4380
        %v4382 = vcombine.low %v4374, %v4381
        %v4383 = vcombine.low %v2835, %v2839
        %v4384 = vcombine.low %v2843, %v2847
        %v4385 = vcombine.low %v2851, %v2855
        %v4386 = vcombine.low %v2859, %v2863
        %v4388 = vunpack.c.l.s4 1966171168
        %v4389 = vunpack.c.0.s8 %v4388
        %v4390 = vlaneseq
        %v4391 = vshrl.u32 %v4390, 7
        %v4392 = vsub.s32 %v4389, %v4391
        %v4393 = vrot.slane %v4383, %v4392
        %v4395 = vunpack.c.l.s4 1966171168
        %v4396 = vunpack.c.0.s8 %v4395
        %v4397 = vlaneseq
        %v4398 = vshrl.u32 %v4397, 7
        %v4399 = vsub.s32 %v4396, %v4398
        %v4400 = vrot.slane %v4384, %v4399
        %v4402 = vunpack.c.l.s4 1966171168
        %v4403 = vunpack.c.0.s8 %v4402
        %v4404 = vlaneseq
        %v4405 = vshrl.u32 %v4404, 7
        %v4406 = vsub.s32 %v4403, %v4405
        %v4407 = vrot.slane %v4385, %v4406
        %v4409 = vunpack.c.l.s4 1966171168
        %v4410 = vunpack.c.0.s8 %v4409
        %v4411 = vlaneseq
        %v4412 = vshrl.u32 %v4411, 7
        %v4413 = vsub.s32 %v4410, %v4412
        %v4414 = vrot.slane %v4386, %v4413
        %v4415 = vcombine.low %v4393, %v4400
        %v4416 = vcombine.low %v4407, %v4414
        %v4418 = vunpack.c.l.s4 1966171168
        %v4419 = vunpack.c.0.s8 %v4418
        %v4420 = vlaneseq
        %v4421 = vshrl.u32 %v4420, 7
        %v4422 = vsub.s32 %v4419, %v4421
        %v4423 = vrot.slane %v4415, %v4422
        %v4425 = vunpack.c.l.s4 1966171168
        %v4426 = vunpack.c.0.s8 %v4425
        %v4427 = vlaneseq
        %v4428 = vshrl.u32 %v4427, 7
        %v4429 = vsub.s32 %v4426, %v4428
        %v4430 = vrot.slane %v4416, %v4429
        %v4431 = vcombine.low %v4423, %v4430
        %4432 = vset.pattern.permute.xlu0 0
        %4433 = vperm.xlu0 %4432, %v2912
        %v4434 = vpop.permute.xlu0 %4433
        %4435 = vset.pattern.permute.xlu0 0
        %4436 = vperm.xlu0 %4435, %v2961
        %v4437 = vpop.permute.xlu0 %4436
        %4438 = vset.pattern.permute.xlu0 0
        %4439 = vperm.xlu0 %4438, %v3010
        %v4440 = vpop.permute.xlu0 %4439
        %4441 = vset.pattern.permute.xlu0 0
        %4442 = vperm.xlu0 %4441, %v3059
        %v4443 = vpop.permute.xlu0 %4442
        %4444 = vset.pattern.permute.xlu0 0
        %4445 = vperm.xlu0 %4444, %v3108
        %v4446 = vpop.permute.xlu0 %4445
        %4447 = vset.pattern.permute.xlu0 0
        %4448 = vperm.xlu0 %4447, %v3157
        %v4449 = vpop.permute.xlu0 %4448
        %4450 = vset.pattern.permute.xlu0 0
        %4451 = vperm.xlu0 %4450, %v3206
        %v4452 = vpop.permute.xlu0 %4451
        %4453 = vset.pattern.permute.xlu0 0
        %4454 = vperm.xlu0 %4453, %v3255
        %v4455 = vpop.permute.xlu0 %4454
        %4456 = vset.pattern.permute.xlu0 0
        %4457 = vperm.xlu0 %4456, %v3304
        %v4458 = vpop.permute.xlu0 %4457
        %4459 = vset.pattern.permute.xlu0 0
        %4460 = vperm.xlu0 %4459, %v3353
        %v4461 = vpop.permute.xlu0 %4460
        %4462 = vset.pattern.permute.xlu0 0
        %4463 = vperm.xlu0 %4462, %v3402
        %v4464 = vpop.permute.xlu0 %4463
        %4465 = vset.pattern.permute.xlu0 0
        %4466 = vperm.xlu0 %4465, %v3451
        %v4467 = vpop.permute.xlu0 %4466
        %4468 = vset.pattern.permute.xlu0 0
        %4469 = vperm.xlu0 %4468, %v3500
        %v4470 = vpop.permute.xlu0 %4469
        %4471 = vset.pattern.permute.xlu0 0
        %4472 = vperm.xlu0 %4471, %v3549
        %v4473 = vpop.permute.xlu0 %4472
        %4474 = vset.pattern.permute.xlu0 0
        %4475 = vperm.xlu0 %4474, %v3598
        %v4476 = vpop.permute.xlu0 %4475
        %4477 = vset.pattern.permute.xlu0 0
        %4478 = vperm.xlu0 %4477, %v3647
        %v4479 = vpop.permute.xlu0 %4478
        %4480 = vset.pattern.permute.xlu0 0
        %4481 = vperm.xlu0 %4480, %v3696
        %v4482 = vpop.permute.xlu0 %4481
        %4483 = vset.pattern.permute.xlu0 0
        %4484 = vperm.xlu0 %4483, %v3745
        %v4485 = vpop.permute.xlu0 %4484
        %4486 = vset.pattern.permute.xlu0 0
        %4487 = vperm.xlu0 %4486, %v3794
        %v4488 = vpop.permute.xlu0 %4487
        %4489 = vset.pattern.permute.xlu0 0
        %4490 = vperm.xlu0 %4489, %v3843
        %v4491 = vpop.permute.xlu0 %4490
        %4492 = vset.pattern.permute.xlu0 0
        %4493 = vperm.xlu0 %4492, %v3892
        %v4494 = vpop.permute.xlu0 %4493
        %4495 = vset.pattern.permute.xlu0 0
        %4496 = vperm.xlu0 %4495, %v3941
        %v4497 = vpop.permute.xlu0 %4496
        %4498 = vset.pattern.permute.xlu0 0
        %4499 = vperm.xlu0 %4498, %v3990
        %v4500 = vpop.permute.xlu0 %4499
        %4501 = vset.pattern.permute.xlu0 0
        %4502 = vperm.xlu0 %4501, %v4039
        %v4503 = vpop.permute.xlu0 %4502
        %4504 = vset.pattern.permute.xlu0 0
        %4505 = vperm.xlu0 %4504, %v4088
        %v4506 = vpop.permute.xlu0 %4505
        %4507 = vset.pattern.permute.xlu0 0
        %4508 = vperm.xlu0 %4507, %v4137
        %v4509 = vpop.permute.xlu0 %4508
        %4510 = vset.pattern.permute.xlu0 0
        %4511 = vperm.xlu0 %4510, %v4186
        %v4512 = vpop.permute.xlu0 %4511
        %4513 = vset.pattern.permute.xlu0 0
        %4514 = vperm.xlu0 %4513, %v4235
        %v4515 = vpop.permute.xlu0 %4514
        %4516 = vset.pattern.permute.xlu0 0
        %4517 = vperm.xlu0 %4516, %v4284
        %v4518 = vpop.permute.xlu0 %4517
        %4519 = vset.pattern.permute.xlu0 0
        %4520 = vperm.xlu0 %4519, %v4333
        %v4521 = vpop.permute.xlu0 %4520
        %4522 = vset.pattern.permute.xlu0 0
        %4523 = vperm.xlu0 %4522, %v4382
        %v4524 = vpop.permute.xlu0 %4523
        %4525 = vset.pattern.permute.xlu0 0
        %4526 = vperm.xlu0 %4525, %v4431
        %v4527 = vpop.permute.xlu0 %4526
        %v4528 = vlaneseq
        %v4529 = vand.u32 %v4528, 127
        %v4530 = vlaneseq
        %v4531 = vshrl.u32 %v4530, 7
        %v4532 = vsub.s32 %v4529, %v4531
        %v4533 = vrot.slane %v4434, %v4532
        %v4534 = vadd.s32 %v4529, 4294967288
        %v4535 = vlaneseq
        %v4536 = vshrl.u32 %v4535, 7
        %v4537 = vsub.s32 %v4534, %v4536
        %v4538 = vrot.slane %v4437, %v4537
        %vm4539 = vcmask 130112
        %v4540 = vsel %vm4539, %v4538, %v4533
        %v4541 = vadd.s32 %v4529, 4294967280
        %v4542 = vlaneseq
        %v4543 = vshrl.u32 %v4542, 7
        %v4544 = vsub.s32 %v4541, %v4543
        %v4545 = vrot.slane %v4440, %v4544
        %vm4546 = vcmask 195712
        %v4547 = vsel %vm4546, %v4545, %v4540
        %v4548 = vadd.s32 %v4529, 4294967272
        %v4549 = vlaneseq
        %v4550 = vshrl.u32 %v4549, 7
        %v4551 = vsub.s32 %v4548, %v4550
        %v4552 = vrot.slane %v4443, %v4551
        %vm4553 = vcmask 261312
        %v4554 = vsel %vm4553, %v4552, %v4547
        %v4555 = vadd.s32 %v4529, 4294967264
        %v4556 = vlaneseq
        %v4557 = vshrl.u32 %v4556, 7
        %v4558 = vsub.s32 %v4555, %v4557
        %v4559 = vrot.slane %v4446, %v4558
        %vm4560 = vcmask 326912
        %v4561 = vsel %vm4560, %v4559, %v4554
        %v4562 = vadd.s32 %v4529, 4294967256
        %v4563 = vlaneseq
        %v4564 = vshrl.u32 %v4563, 7
        %v4565 = vsub.s32 %v4562, %v4564
        %v4566 = vrot.slane %v4449, %v4565
        %vm4567 = vcmask 392512
        %v4568 = vsel %vm4567, %v4566, %v4561
        %v4569 = vadd.s32 %v4529, 4294967248
        %v4570 = vlaneseq
        %v4571 = vshrl.u32 %v4570, 7
        %v4572 = vsub.s32 %v4569, %v4571
        %v4573 = vrot.slane %v4452, %v4572
        %vm4574 = vcmask 458112
        %v4575 = vsel %vm4574, %v4573, %v4568
        %v4576 = vadd.s32 %v4529, 4294967240
        %v4577 = vlaneseq
        %v4578 = vshrl.u32 %v4577, 7
        %v4579 = vsub.s32 %v4576, %v4578
        %v4580 = vrot.slane %v4455, %v4579
        %vm4581 = vcmask 523712
        %v4582 = vsel %vm4581, %v4580, %v4575
        %v4583 = vadd.s32 %v4529, 4294967232
        %v4584 = vlaneseq
        %v4585 = vshrl.u32 %v4584, 7
        %v4586 = vsub.s32 %v4583, %v4585
        %v4587 = vrot.slane %v4458, %v4586
        %vm4588 = vcmask 589312
        %v4589 = vsel %vm4588, %v4587, %v4582
        %v4590 = vadd.s32 %v4529, 4294967224
        %v4591 = vlaneseq
        %v4592 = vshrl.u32 %v4591, 7
        %v4593 = vsub.s32 %v4590, %v4592
        %v4594 = vrot.slane %v4461, %v4593
        %vm4595 = vcmask 654912
        %v4596 = vsel %vm4595, %v4594, %v4589
        %v4597 = vadd.s32 %v4529, 4294967216
        %v4598 = vlaneseq
        %v4599 = vshrl.u32 %v4598, 7
        %v4600 = vsub.s32 %v4597, %v4599
        %v4601 = vrot.slane %v4464, %v4600
        %vm4602 = vcmask 720512
        %v4603 = vsel %vm4602, %v4601, %v4596
        %v4604 = vadd.s32 %v4529, 4294967208
        %v4605 = vlaneseq
        %v4606 = vshrl.u32 %v4605, 7
        %v4607 = vsub.s32 %v4604, %v4606
        %v4608 = vrot.slane %v4467, %v4607
        %vm4609 = vcmask 786112
        %v4610 = vsel %vm4609, %v4608, %v4603
        %v4611 = vadd.s32 %v4529, 4294967200
        %v4612 = vlaneseq
        %v4613 = vshrl.u32 %v4612, 7
        %v4614 = vsub.s32 %v4611, %v4613
        %v4615 = vrot.slane %v4470, %v4614
        %vm4616 = vcmask 851712
        %v4617 = vsel %vm4616, %v4615, %v4610
        %v4618 = vadd.s32 %v4529, 4294967192
        %v4619 = vlaneseq
        %v4620 = vshrl.u32 %v4619, 7
        %v4621 = vsub.s32 %v4618, %v4620
        %v4622 = vrot.slane %v4473, %v4621
        %vm4623 = vcmask 917312
        %v4624 = vsel %vm4623, %v4622, %v4617
        %v4625 = vadd.s32 %v4529, 4294967184
        %v4626 = vlaneseq
        %v4627 = vshrl.u32 %v4626, 7
        %v4628 = vsub.s32 %v4625, %v4627
        %v4629 = vrot.slane %v4476, %v4628
        %vm4630 = vcmask 982912
        %v4631 = vsel %vm4630, %v4629, %v4624
        %v4632 = vadd.s32 %v4529, 4294967176
        %v4633 = vlaneseq
        %v4634 = vshrl.u32 %v4633, 7
        %v4635 = vsub.s32 %v4632, %v4634
        %v4636 = vrot.slane %v4479, %v4635
        %vm4637 = vcmask 1048512
        %v4638 = vsel %vm4637, %v4636, %v4631
        %v4639 = vlaneseq
        %v4640 = vshrl.u32 %v4639, 7
        %v4641 = vsub.s32 %v4529, %v4640
        %v4642 = vrot.slane %v4482, %v4641
        %v4643 = vlaneseq
        %v4644 = vshrl.u32 %v4643, 7
        %v4645 = vsub.s32 %v4534, %v4644
        %v4646 = vrot.slane %v4485, %v4645
        %v4647 = vsel %vm4539, %v4646, %v4642
        %v4648 = vlaneseq
        %v4649 = vshrl.u32 %v4648, 7
        %v4650 = vsub.s32 %v4541, %v4649
        %v4651 = vrot.slane %v4488, %v4650
        %v4652 = vsel %vm4546, %v4651, %v4647
        %v4653 = vlaneseq
        %v4654 = vshrl.u32 %v4653, 7
        %v4655 = vsub.s32 %v4548, %v4654
        %v4656 = vrot.slane %v4491, %v4655
        %v4657 = vsel %vm4553, %v4656, %v4652
        %v4658 = vlaneseq
        %v4659 = vshrl.u32 %v4658, 7
        %v4660 = vsub.s32 %v4555, %v4659
        %v4661 = vrot.slane %v4494, %v4660
        %v4662 = vsel %vm4560, %v4661, %v4657
        %v4663 = vlaneseq
        %v4664 = vshrl.u32 %v4663, 7
        %v4665 = vsub.s32 %v4562, %v4664
        %v4666 = vrot.slane %v4497, %v4665
        %v4667 = vsel %vm4567, %v4666, %v4662
        %v4668 = vlaneseq
        %v4669 = vshrl.u32 %v4668, 7
        %v4670 = vsub.s32 %v4569, %v4669
        %v4671 = vrot.slane %v4500, %v4670
        %v4672 = vsel %vm4574, %v4671, %v4667
        %v4673 = vlaneseq
        %v4674 = vshrl.u32 %v4673, 7
        %v4675 = vsub.s32 %v4576, %v4674
        %v4676 = vrot.slane %v4503, %v4675
        %v4677 = vsel %vm4581, %v4676, %v4672
        %v4678 = vlaneseq
        %v4679 = vshrl.u32 %v4678, 7
        %v4680 = vsub.s32 %v4583, %v4679
        %v4681 = vrot.slane %v4506, %v4680
        %v4682 = vsel %vm4588, %v4681, %v4677
        %v4683 = vlaneseq
        %v4684 = vshrl.u32 %v4683, 7
        %v4685 = vsub.s32 %v4590, %v4684
        %v4686 = vrot.slane %v4509, %v4685
        %v4687 = vsel %vm4595, %v4686, %v4682
        %v4688 = vlaneseq
        %v4689 = vshrl.u32 %v4688, 7
        %v4690 = vsub.s32 %v4597, %v4689
        %v4691 = vrot.slane %v4512, %v4690
        %v4692 = vsel %vm4602, %v4691, %v4687
        %v4693 = vlaneseq
        %v4694 = vshrl.u32 %v4693, 7
        %v4695 = vsub.s32 %v4604, %v4694
        %v4696 = vrot.slane %v4515, %v4695
        %v4697 = vsel %vm4609, %v4696, %v4692
        %v4698 = vlaneseq
        %v4699 = vshrl.u32 %v4698, 7
        %v4700 = vsub.s32 %v4611, %v4699
        %v4701 = vrot.slane %v4518, %v4700
        %v4702 = vsel %vm4616, %v4701, %v4697
        %v4703 = vlaneseq
        %v4704 = vshrl.u32 %v4703, 7
        %v4705 = vsub.s32 %v4618, %v4704
        %v4706 = vrot.slane %v4521, %v4705
        %v4707 = vsel %vm4623, %v4706, %v4702
        %v4708 = vlaneseq
        %v4709 = vshrl.u32 %v4708, 7
        %v4710 = vsub.s32 %v4625, %v4709
        %v4711 = vrot.slane %v4524, %v4710
        %v4712 = vsel %vm4630, %v4711, %v4707
        %v4713 = vlaneseq
        %v4714 = vshrl.u32 %v4713, 7
        %v4715 = vsub.s32 %v4632, %v4714
        %v4716 = vrot.slane %v4527, %v4715
        %v4717 = vsel %vm4637, %v4716, %v4712
        %v4718 = vcombine.low %v4638, %v4717
        %v4720 = vunpack.c.l.s4 1966171168
        %v4721 = vunpack.c.0.s8 %v4720
        %v4722 = vlaneseq
        %v4723 = vshrl.u32 %v4722, 7
        %v4724 = vsub.s32 %v4721, %v4723
        %v4725 = vrot.slane %v4718, %v4724
        %v4727 = vunpack.c.l.s4 1966171168
        %v4728 = vunpack.c.0.s8 %v4727
        %v4729 = vlaneseq
        %v4730 = vshrl.u32 %v4729, 7
        %v4731 = vsub.s32 %v4728, %v4730
        %v4732 = vrot.slane %v4725, %v4731
        %v4734 = vlaneseq
        %vm4735 = vcmp.ge.s32.totalorder %v4734, 0
        %vm4736 = vcmp.lt.s32.totalorder %v4734, 256
        %vm4737 = vmand %vm4735, %vm4736
        %4738 = vst.msk [vmem:[%s442] sm:$0x3] %vm4737, %v4732
        %s4739 = sand.u32 %s302, 1
        %s4740 = scalar_lea.sflag [#allocation4], %s4739
        %s4741 = sand.u32 %s302, 1
        %s4742 = smul.addr %s4741, 2
        %s4743 = scalar_lea.vmem [#allocation3], %s4742
        // Predicated region
        $region69: #{tpu_custom_call.1} parent=67 // pred_check
          %p4744 = pneg %p312
        $region70: #{tpu_custom_call.1} parent=67 // pred_check_branch
          %4746 = sbr.rel (%p4744) target = $region72
        $region71: #{tpu_custom_call.1} parent=67 // pred_region
          %s4748 = ssub.s32 32, 32
          %4749 = vsyncadd %s4740, %s4748
          %s4750 = smul.addr %s27, 2
          %s4751 = smul.addr %s4750, 16
          %s4752 = scalar_lea.hbm %s12, %s4751
          %s4754 = sshll.u32 %s4743, 4
          %s4755 = int_to_ptr.vmem [resolvable:$true] %s4754
          %4757 = dma.vmem_to_hbm [thread:$0]  %s4755, 32, %s4752, %s4740
        $region72: #{tpu_custom_call.1} parent=67 // pred_fallthru
          _
      $region68: #{tpu_custom_call.1} parent=5 // pred_fallthru
        _
      %p4758 = scmp.le.s32.totalorder 2, %s22
      // Predicated region
      $region73: #{tpu_custom_call.1} parent=5 // pred_check
        %p4759 = pneg %p4758
      $region74: #{tpu_custom_call.1} parent=5 // pred_check_branch
        %4761 = sbr.rel (%p4759) target = $region76
      $region75: #{tpu_custom_call.1} parent=5 // pred_region
        %s4762 = ssub.s32 %s22, 2
        // Predicated region
        $region77: #{tpu_custom_call.1} parent=75 // pred_check
          %p4763 = pneg %p318
        $region78: #{tpu_custom_call.1} parent=75 // pred_check_branch
          %4765 = sbr.rel (%p4763) target = $region80
        $region79: #{tpu_custom_call.1} parent=75 // pred_region
          %s4766 = sand.u32 %s303, 1
          %s4767 = scalar_lea.sflag [#allocation4], %s4766
          %s4768 = sand.u32 %s303, 1
          %s4769 = smul.addr %s4768, 2
          %s4770 = scalar_lea.vmem [#allocation3], %s4769
          %4771 = dma.done %s4767, 32
        $region80: #{tpu_custom_call.1} parent=75 // pred_fallthru
          _
      $region76: #{tpu_custom_call.1} parent=5 // pred_fallthru
        _
    $region6: #{tpu_custom_call.1} parent=1 // loop_footer
      %s26 = sadd.s32 1, %s22
    $region7: #{tpu_custom_call.1} parent=1 // loop_footer_branch
      %21 = sbr.rel target = $region3
    $region8: #{tpu_custom_call.1} parent=1 // loop_exit
      _
    %4772 = vsyncpa [#allocation4], 1
    %s4773 = scalar_lea.sflag [#allocation4], 1
    %4774 = vsyncpa %s4773, 1

</llo_original>
